<compile_context>
chip_gen: v5e
topology: v5e:2x2
jax: 0.10.0
libtpu: 0.0.40
codegen_flags: <defaults>
</compile_context>

<pallas_src>
import functools

import jax
import jax.numpy as jnp
from jax.experimental import pallas as pl
from jax.experimental.pallas import tpu as pltpu


def _round_up(n, m):
    return ((n + m - 1) // m) * m


def _pick_batch_tile(B, tb):
    """Pick a sublane-aligned batch tile; avoid padding whenever possible."""
    tb = min(tb, B)
    tb = max(8, tb - tb % 8)                 # multiple of 8 (sublane constraint)
    if B % 8 == 0:
        t = tb
        while t >= 8:
            if B % t == 0:
                return t, B                  # exact tiling: no pad, no slice copy
            t -= 8
    return tb, _round_up(B, tb)              # fallback: pad the batch


def _bin_multitask_kernel(x_ref, wb_ref, bb_ref, w_ref,
                          embed_ref, packed_ref,
                          *, thr1, thr2, min_val, max_val):
    # ---- backbone: embed = x @ Wb + bb      (TB, Din) @ (Din, F) -> (TB, F)
    x = x_ref[...]
    embed = jnp.dot(x, wb_ref[...], preferred_element_type=jnp.float32)
    embed = embed + bb_ref[...]              # (1, F) broadcast over rows
    embed_ref[...] = embed.astype(embed_ref.dtype)
    # TODO(synk): cast x/Wb to bf16 for the MXU and/or emit a bf16 embed when
    # the accuracy budget allows; kept f32 here to hold the 1e-4 reference check.

    # ---- scoring head: out = embed @ W      (TB, F) @ (F, 1) -> (TB, 1)
    # Kept as an N=1 matmul per review guidance (reduction order matches module).
    out = jnp.dot(embed, w_ref[...], preferred_element_type=jnp.float32)
    score = jnp.clip(out, min_val, max_val)  # (TB, 1)

    # ---- ordinal logits + softmax, fully element-wise on (TB, 1) columns
    # (no concat, no cross-lane reductions -> stays on the VPU/EUP).
    dist1 = thr1 - score
    dist2 = thr2 - score
    l0 = -dist2
    l1 = jnp.minimum(-dist1, dist2)
    l2 = dist1
    m = jnp.maximum(jnp.maximum(l0, l1), l2)
    e0 = jnp.exp(l0 - m)
    e1 = jnp.exp(l1 - m)
    e2 = jnp.exp(l2 - m)
    inv = pl.reciprocal(e0 + e1 + e2, approx=False)  # exact: 1e-5 prob-sum check

    # ---- packed (TB, 4) output: lane 0 = score, lanes 1..3 = probs.
    # Direct column stores (a few masked vst) instead of a 128-lane zero slab.
    packed_ref[:, 0:1] = score.astype(packed_ref.dtype)
    packed_ref[:, 1:2] = (e0 * inv).astype(packed_ref.dtype)
    packed_ref[:, 2:3] = (e1 * inv).astype(packed_ref.dtype)
    packed_ref[:, 3:4] = (e2 * inv).astype(packed_ref.dtype)


def bin_multitask_forward(x, wb, bb, w, *, threshold1, threshold2,
                          ordinal=True, tb=512, core_parallel=False):
    """Fused BinMultitask forward.

    x:  (B, Din) f32, wb: (Din, F) f32, bb: (F,) f32, w: (F, 1) f32
    returns (embed (B, F), score (B, 1), probs (B, 3))
    core_parallel: set True on v7x to shard the batch grid axis across both
    TensorCores (plain PARALLEL does not change codegen on single-TC chips).
    """
    B, Din = x.shape
    F = wb.shape[1]
    thr1 = float(threshold1)
    thr2 = float(threshold2)
    max_val = 2.0 * thr2
    min_val = -thr2 if ordinal else 0.0

    TB, Bp = _pick_batch_tile(B, tb)
    if Bp != B:
        # Padded rows (zero x) are benign: score clamped, softmax finite; they
        # are sliced away below.
        x = jnp.pad(x, ((0, Bp - B), (0, 0)))
    bb2 = bb.reshape(1, F)                   # clean (sublane=1, lane=F) layout

    kernel = functools.partial(
        _bin_multitask_kernel,
        thr1=thr1, thr2=thr2, min_val=min_val, max_val=max_val)

    grid = (Bp // TB,)

    # Resident weights: single-buffer once the backbone weight is big enough
    # to matter (double-buffered Din x F Wb alone can blow v7x's 64 MiB VMEM).
    weight_kwargs = {}
    if Din * F * 4 > (4 << 20):
        weight_kwargs = dict(pipeline_mode=pl.Buffered(1))
    # TODO(synk): for very large F, add a second grid axis tiling F with a score
    # accumulator in scratch so Wb never has to be fully VMEM-resident.

    # Explicit VMEM budget: double-buffered per-step blocks + weights + headroom.
    step_bytes = 2 * TB * (Din + F + 4) * 4
    weight_bytes = (Din * F + 2 * F) * 4 * (1 if weight_kwargs else 2)
    vmem_limit = min(64 << 20, step_bytes + weight_bytes + (16 << 20))

    batch_sem = pltpu.CORE_PARALLEL if core_parallel else pltpu.PARALLEL

    cost = pl.CostEstimate(
        flops=2 * Bp * Din * F + 2 * Bp * F,
        transcendentals=3 * Bp,
        bytes_accessed=4 * (Bp * Din + Din * F + 2 * F + Bp * F + Bp * 4),
    )

    embed_p, packed = pl.pallas_call(
        kernel,
        out_shape=(
            jax.ShapeDtypeStruct((Bp, F), jnp.float32),   # embed
            jax.ShapeDtypeStruct((Bp, 4), jnp.float32),   # [score, p0, p1, p2]
        ),
        grid=grid,
        in_specs=[
            pl.BlockSpec((TB, Din), lambda i: (i, 0)),                   # x tile
            pl.BlockSpec((Din, F), lambda i: (0, 0), **weight_kwargs),   # Wb
            pl.BlockSpec((1, F), lambda i: (0, 0), **weight_kwargs),     # bb
            pl.BlockSpec((F, 1), lambda i: (0, 0), **weight_kwargs),     # W
        ],
        out_specs=(
            pl.BlockSpec((TB, F), lambda i: (i, 0)),
            pl.BlockSpec((TB, 4), lambda i: (i, 0)),
        ),
        compiler_params=pltpu.CompilerParams(
            dimension_semantics=(batch_sem,),
            vmem_limit_bytes=int(vmem_limit)),
        cost_estimate=cost,
    )(x, wb, bb2, w)

    if Bp != B:
        embed_p = embed_p[:B]
        packed = packed[:B]
    score = packed[:, 0:1]
    probs = packed[:, 1:4]
    return embed_p, score, probs


def _reference(x, wb, bb, w, *, threshold1, threshold2, ordinal=True):
    embed = x @ wb + bb
    out = embed @ w
    max_val = 2.0 * threshold2
    min_val = -threshold2 if ordinal else 0.0
    score = jnp.clip(out, min_val, max_val)
    dist1 = threshold1 - score
    dist2 = threshold2 - score
    logit = jnp.concatenate([-dist2, jnp.minimum(-dist1, dist2), dist1], axis=1)
    return embed, score, jax.nn.softmax(logit, axis=1)


def _check(B, x, wb, bb, w, thr1, thr2):
    embed, score, probs = bin_multitask_forward(
        x, wb, bb, w, threshold1=thr1, threshold2=thr2, ordinal=True, tb=512)
    jax.block_until_ready((embed, score, probs))

    ref_embed, ref_score, ref_probs = _reference(
        x, wb, bb, w, threshold1=thr1, threshold2=thr2, ordinal=True)

    F = wb.shape[1]
    assert embed.shape == (B, F) and score.shape == (B, 1) and probs.shape == (B, 3)
    assert jnp.allclose(embed, ref_embed, atol=1e-4, rtol=1e-4)
    assert jnp.allclose(score, ref_score, atol=1e-4, rtol=1e-4)
    assert jnp.allclose(probs, ref_probs, atol=1e-4, rtol=1e-4)
    assert bool(jnp.all(jnp.abs(jnp.sum(probs, axis=1) - 1.0) < 1e-5))


if __name__ == "__main__":
    key = jax.random.PRNGKey(0)
    k_x, k_wb, k_bb, k_w = jax.random.split(key, 4)

    # MXU/grid-exercising shapes: batch=1024 (2 grid steps of 512), Din=F=128
    # (one full lane tile), consistent with a linear backbone.
    B, Din, F = 1024, 128, 128
    thr1, thr2 = 1.0, 2.0

    x = jax.random.normal(k_x, (B, Din), dtype=jnp.float32)
    wb = jax.random.normal(k_wb, (Din, F), dtype=jnp.float32) * 0.1
    bb = jax.random.normal(k_bb, (F,), dtype=jnp.float32) * 0.1
    w = jax.random.normal(k_w, (F, 1), dtype=jnp.float32)    # nn.init.normal_

    # Main case (tile divides the batch, no padding path).
    _check(B, x, wb, bb, w, thr1, thr2)
    # Ragged batch case (exercises the rounded tile + padding fallback).
    _check(50, x[:50], wb, bb, w, thr1, thr2)

    print("KERNEL_OK")
</pallas_src>

<mosaic_0001>
module attributes {stable_mosaic.version = 11 : i64} {
  func.func @_bin_multitask_kernel(%arg0: i32, %arg1: memref<512x128xf32, #tpu.memory_space<vmem>>, %arg2: memref<128x128xf32, #tpu.memory_space<vmem>>, %arg3: memref<1x128xf32, #tpu.memory_space<vmem>>, %arg4: memref<128x1xf32, #tpu.memory_space<vmem>>, %arg5: memref<512x128xf32, #tpu.memory_space<vmem>>, %arg6: memref<512x4xf32, #tpu.memory_space<vmem>>) attributes {dimension_semantics = [#tpu.dimension_semantics<parallel>], iteration_bounds = array<i64: 2>, scalar_prefetch = 0 : i64, scratch_operands = 0 : i64, tpu.core_type = #tpu.core_type<tc>, window_params = [{transform_indices = @transform_0, window_bounds = array<i64: 512, 128>}, {pipeline_mode = #tpu.pipeline_mode<synchronous>, transform_indices = @transform_1, window_bounds = array<i64: 128, 128>}, {pipeline_mode = #tpu.pipeline_mode<synchronous>, transform_indices = @transform_2, window_bounds = array<i64: 1, 128>}, {pipeline_mode = #tpu.pipeline_mode<synchronous>, transform_indices = @transform_3, window_bounds = array<i64: 128, 1>}, {transform_indices = @transform_4, window_bounds = array<i64: 512, 128>}, {transform_indices = @transform_5, window_bounds = array<i64: 512, 4>}]} {
    %c0 = arith.constant 0 : index
    %c0_0 = arith.constant 0 : index
    %0 = vector.load %arg1[%c0, %c0_0] : memref<512x128xf32, #tpu.memory_space<vmem>>, vector<512x128xf32>
    %c0_1 = arith.constant 0 : index
    %c0_2 = arith.constant 0 : index
    %1 = vector.load %arg2[%c0_1, %c0_2] : memref<128x128xf32, #tpu.memory_space<vmem>>, vector<128x128xf32>
    %cst = arith.constant dense<0.000000e+00> : vector<512x128xf32>
    %2 = tpu.matmul %0, %1, %cst {dimension_numbers = #tpu.dot_dimension_numbers<[1], [0], [0], [1], [0, 0, 1, 1], [], []>} : vector<512x128xf32>, vector<128x128xf32>, vector<512x128xf32> -> vector<512x128xf32>
    %c0_3 = arith.constant 0 : index
    %c0_4 = arith.constant 0 : index
    %3 = vector.load %arg3[%c0_3, %c0_4] : memref<1x128xf32, #tpu.memory_space<vmem>>, vector<1x128xf32>
    %4 = vector.broadcast %3 : vector<1x128xf32> to vector<512x128xf32>
    %5 = arith.addf %2, %4 : vector<512x128xf32>
    %c0_5 = arith.constant 0 : index
    %c0_6 = arith.constant 0 : index
    %6 = vector.load %arg5[%c0_5, %c0_6] : memref<512x128xf32, #tpu.memory_space<vmem>>, vector<512x128xf32>
    tpu.vector_store %arg5[%c0_5, %c0_6], %5 {strides = array<i32>} : memref<512x128xf32, #tpu.memory_space<vmem>>, vector<512x128xf32>,
    %c0_7 = arith.constant 0 : index
    %c0_8 = arith.constant 0 : index
    %7 = vector.load %arg4[%c0_7, %c0_8] : memref<128x1xf32, #tpu.memory_space<vmem>>, vector<128x1xf32>
    %cst_9 = arith.constant dense<0.000000e+00> : vector<512x1xf32>
    %8 = tpu.matmul %5, %7, %cst_9 {dimension_numbers = #tpu.dot_dimension_numbers<[1], [0], [0], [1], [0, 0, 1, 1], [], []>} : vector<512x128xf32>, vector<128x1xf32>, vector<512x1xf32> -> vector<512x1xf32>
    %cst_10 = arith.constant -2.000000e+00 : f32
    %cst_11 = arith.constant 4.000000e+00 : f32
    %9 = vector.broadcast %cst_10 : f32 to vector<512x1xf32>
    %10 = arith.maximumf %9, %8 : vector<512x1xf32>
    %11 = vector.broadcast %cst_11 : f32 to vector<512x1xf32>
    %12 = arith.minimumf %11, %10 : vector<512x1xf32>
    %cst_12 = arith.constant 1.000000e+00 : f32
    %13 = vector.broadcast %cst_12 : f32 to vector<512x1xf32>
    %14 = arith.subf %13, %12 : vector<512x1xf32>
    %cst_13 = arith.constant 2.000000e+00 : f32
    %15 = vector.broadcast %cst_13 : f32 to vector<512x1xf32>
    %16 = arith.subf %15, %12 : vector<512x1xf32>
    %cst_14 = arith.constant 0.000000e+00 : f32
    %17 = vector.broadcast %cst_14 : f32 to vector<512x1xf32>
    %18 = arith.subf %17, %16 : vector<512x1xf32>
    %cst_15 = arith.constant 0.000000e+00 : f32
    %19 = vector.broadcast %cst_15 : f32 to vector<512x1xf32>
    %20 = arith.subf %19, %14 : vector<512x1xf32>
    %21 = arith.minimumf %20, %16 : vector<512x1xf32>
    %22 = arith.maximumf %18, %21 : vector<512x1xf32>
    %23 = arith.maximumf %22, %14 : vector<512x1xf32>
    %24 = arith.subf %18, %23 : vector<512x1xf32>
    %25 = math.exp %24 : vector<512x1xf32>
    %26 = arith.subf %21, %23 : vector<512x1xf32>
    %27 = math.exp %26 : vector<512x1xf32>
    %28 = arith.subf %14, %23 : vector<512x1xf32>
    %29 = math.exp %28 : vector<512x1xf32>
    %30 = arith.addf %25, %27 : vector<512x1xf32>
    %31 = arith.addf %30, %29 : vector<512x1xf32>
    %32 = tpu.reciprocal %31 : vector<512x1xf32> -> vector<512x1xf32>
    %c0_16 = arith.constant 0 : index
    %c0_17 = arith.constant 0 : index
    %33 = vector.load %arg6[%c0_16, %c0_17] : memref<512x4xf32, #tpu.memory_space<vmem>>, vector<512x1xf32>
    tpu.vector_store %arg6[%c0_16, %c0_17], %12 {strides = array<i32>} : memref<512x4xf32, #tpu.memory_space<vmem>>, vector<512x1xf32>,
    %34 = arith.mulf %25, %32 : vector<512x1xf32>
    %c0_18 = arith.constant 0 : index
    %c1 = arith.constant 1 : index
    %35 = vector.load %arg6[%c0_18, %c1] : memref<512x4xf32, #tpu.memory_space<vmem>>, vector<512x1xf32>
    tpu.vector_store %arg6[%c0_18, %c1], %34 {strides = array<i32>} : memref<512x4xf32, #tpu.memory_space<vmem>>, vector<512x1xf32>,
    %36 = arith.mulf %27, %32 : vector<512x1xf32>
    %c0_19 = arith.constant 0 : index
    %c2 = arith.constant 2 : index
    %37 = vector.load %arg6[%c0_19, %c2] : memref<512x4xf32, #tpu.memory_space<vmem>>, vector<512x1xf32>
    tpu.vector_store %arg6[%c0_19, %c2], %36 {strides = array<i32>} : memref<512x4xf32, #tpu.memory_space<vmem>>, vector<512x1xf32>,
    %38 = arith.mulf %29, %32 : vector<512x1xf32>
    %c0_20 = arith.constant 0 : index
    %c3 = arith.constant 3 : index
    %39 = vector.load %arg6[%c0_20, %c3] : memref<512x4xf32, #tpu.memory_space<vmem>>, vector<512x1xf32>
    tpu.vector_store %arg6[%c0_20, %c3], %38 {strides = array<i32>} : memref<512x4xf32, #tpu.memory_space<vmem>>, vector<512x1xf32>,
    return
  }
  func.func @transform_0(%arg0: i32) -> (i32, i32) {
    %c0_i32 = arith.constant 0 : i32
    %c0_i32_0 = arith.constant 0 : i32
    return %arg0, %c0_i32 : i32, i32
  }
  func.func @transform_1(%arg0: i32) -> (i32, i32) {
    %c0_i32 = arith.constant 0 : i32
    %c0_i32_0 = arith.constant 0 : i32
    %c0_i32_1 = arith.constant 0 : i32
    return %c0_i32, %c0_i32_0 : i32, i32
  }
  func.func @transform_2(%arg0: i32) -> (i32, i32) {
    %c0_i32 = arith.constant 0 : i32
    %c0_i32_0 = arith.constant 0 : i32
    %c0_i32_1 = arith.constant 0 : i32
    return %c0_i32, %c0_i32_0 : i32, i32
  }
  func.func @transform_3(%arg0: i32) -> (i32, i32) {
    %c0_i32 = arith.constant 0 : i32
    %c0_i32_0 = arith.constant 0 : i32
    %c0_i32_1 = arith.constant 0 : i32
    return %c0_i32, %c0_i32_0 : i32, i32
  }
  func.func @transform_4(%arg0: i32) -> (i32, i32) {
    %c0_i32 = arith.constant 0 : i32
    %c0_i32_0 = arith.constant 0 : i32
    return %arg0, %c0_i32 : i32, i32
  }
  func.func @transform_5(%arg0: i32) -> (i32, i32) {
    %c0_i32 = arith.constant 0 : i32
    %c0_i32_0 = arith.constant 0 : i32
    return %arg0, %c0_i32 : i32, i32
  }
}

</mosaic_0001>

<llo_original>
// kernel: tpu_custom_call.1
$region0: #{tpu_custom_call.1}
  #allocation0 [shape = 'u32[]', space=smem, size = 0x4, offset = 0x4, fixed_abs, tag = 'smem constant byte address 0x4 - core index']
  #allocation1 [shape = 'u32[72,128]{1,0:T(1,128)}', space=vmem, size = 0x9000, scoped, tag = 'internal scratch']
  %s0 = inlined_call_operand.hbm [shape: f32[1024,128], index: 0, kind: input, shape index: {}]
  %s1 = inlined_call_operand.vmem [shape: f32[128,128], index: 1, kind: input, shape index: {}]
  %s2 = inlined_call_operand.vmem [shape: f32[1,128], index: 2, kind: input, shape index: {}]
  %s3 = inlined_call_operand.vmem [shape: f32[128,1], index: 3, kind: input, shape index: {}]
  %s4 = inlined_call_operand.hbm [shape: f32[1024,128], index: 4, kind: output, shape index: {0}]
  %s5 = inlined_call_operand.vmem [shape: f32[1024,4], index: 5, kind: output, shape index: {1}]
  %6 = xla_tuple %s4, %s5
  %s7 = sld [smem:[#allocation0]]
  $region61: #{tpu_custom_call.1} parent=0
    _
  %s9 = ssub.s32 1, %s7
  %s10 = scalar_select 0, %s9, %s7
  $region1: #{tpu_custom_call.1} parent=0
    #allocation2 [shape = 'u8[524288]{0}', space=vmem, size = 0x80000, scoped, tag = 'input window, operand 0']
    #allocation3 [shape = 's32[2]{0}', space=sflag, size = 0x8, scoped, tag = 'scoped memory for tpu_custom_call.1']
    #allocation4 [shape = 's32[2]{0}', space=sflag, size = 0x8, scoped, tag = 'scoped memory for tpu_custom_call.1']
    #allocation5 [shape = 'u8[524288]{0}', space=vmem, size = 0x80000, scoped, tag = 'output window, operand 0']
    %11 = vsyncpa [#allocation3], 0
    %s12 = scalar_lea.sflag [#allocation3], 1
    %13 = vsyncpa %s12, 0
    %14 = vsyncpa [#allocation4], 0
    %s15 = scalar_lea.sflag [#allocation4], 1
    %16 = vsyncpa %s15, 0
    loop: start=0, step=1, limit=4
    $region2: #{tpu_custom_call.1} parent=1 // loop_pre_header
      _
    $region3: #{tpu_custom_call.1} parent=1 // loop_header
      %s18 = sphi 0, %s22
      %p19 = scmp.ge.s32.totalorder %s18, 4
      %s28 = sphi 0, %s30
      %s31 = sphi 0, %s28
      %s32 = sphi 0, %s31
      %s48 = sphi 0, %s32
      %s52 = sphi 0, %s52
      %s54 = sphi 0, %s52
      %s55 = sphi 0, %s54
      %s69 = sphi 0, %s55
      %s73 = sphi 0, %s73
      %s75 = sphi 0, %s73
      %s76 = sphi 0, %s75
      %s90 = sphi 0, %s76
      %s94 = sphi 0, %s94
      %s96 = sphi 0, %s94
      %s97 = sphi 0, %s96
      %s111 = sphi 0, %s97
      %s117 = sphi 0, %s119
      %s120 = sphi 0, %s117
      %s121 = sphi 0, %s120
      %s137 = sphi 0, %s121
      %s143 = sphi 0, %s145
      %s146 = sphi 0, %s143
      %s147 = sphi 0, %s146
      %s163 = sphi 0, %s147
    $region4: #{tpu_custom_call.1} parent=1 // loop_header_branch
      %21 = sbr.rel (%p19) target = $region8
    $region5: #{tpu_custom_call.1} parent=1 // loop_body
      %s23 = ssub.s32 %s18, 1
      %s24 = ssub.s32 %s18, 2
      %s25 = sadd.s32 %s18, 1
      %s26 = ssub.s32 %s18, %s25
      %p27 = scmp.eq.s32.totalorder %s26, 0
      %s29 = sadd.s32 %s28, 1
      %s30 = scalar_select %p27, %s28, %s29
      %p33 = pneg %p27
      %p34 = scmp.eq.s32.totalorder %s18, 1
      %p35 = por %p33, %p34
      %p36 = scmp.ne.s32.totalorder %s28, %s31
      %p37 = scmp.eq.s32.totalorder %s18, 0
      %p38 = por %p36, %p37
      %p39 = scmp.ne.s32.totalorder %s28, %s31
      %p40 = scmp.eq.s32.totalorder %s23, 1
      %p41 = por %p39, %p40
      %p42 = scmp.ne.s32.totalorder %s31, %s32
      %p43 = scmp.eq.s32.totalorder %s23, 0
      %p44 = por %p42, %p43
      %p45 = scmp.ne.s32.totalorder %s31, %s32
      %p46 = scmp.eq.s32.totalorder %s24, 1
      %p47 = por %p45, %p46
      %p49 = scmp.ne.s32.totalorder %s32, %s48
      %p50 = scmp.eq.s32.totalorder %s24, 0
      %p51 = por %p49, %p50
      %s53 = sadd.s32 %s52, 1
      %p56 = scmp.eq.s32.totalorder %s18, 1
      %p57 = scmp.ne.s32.totalorder %s52, %s54
      %p58 = scmp.eq.s32.totalorder %s18, 0
      %p59 = por %p57, %p58
      %p60 = scmp.ne.s32.totalorder %s52, %s54
      %p61 = scmp.eq.s32.totalorder %s23, 1
      %p62 = por %p60, %p61
      %p63 = scmp.ne.s32.totalorder %s54, %s55
      %p64 = scmp.eq.s32.totalorder %s23, 0
      %p65 = por %p63, %p64
      %p66 = scmp.ne.s32.totalorder %s54, %s55
      %p67 = scmp.eq.s32.totalorder %s24, 1
      %p68 = por %p66, %p67
      %p70 = scmp.ne.s32.totalorder %s55, %s69
      %p71 = scmp.eq.s32.totalorder %s24, 0
      %p72 = por %p70, %p71
      %s74 = sadd.s32 %s73, 1
      %p77 = scmp.eq.s32.totalorder %s18, 1
      %p78 = scmp.ne.s32.totalorder %s73, %s75
      %p79 = scmp.eq.s32.totalorder %s18, 0
      %p80 = por %p78, %p79
      %p81 = scmp.ne.s32.totalorder %s73, %s75
      %p82 = scmp.eq.s32.totalorder %s23, 1
      %p83 = por %p81, %p82
      %p84 = scmp.ne.s32.totalorder %s75, %s76
      %p85 = scmp.eq.s32.totalorder %s23, 0
      %p86 = por %p84, %p85
      %p87 = scmp.ne.s32.totalorder %s75, %s76
      %p88 = scmp.eq.s32.totalorder %s24, 1
      %p89 = por %p87, %p88
      %p91 = scmp.ne.s32.totalorder %s76, %s90
      %p92 = scmp.eq.s32.totalorder %s24, 0
      %p93 = por %p91, %p92
      %s95 = sadd.s32 %s94, 1
      %p98 = scmp.eq.s32.totalorder %s18, 1
      %p99 = scmp.ne.s32.totalorder %s94, %s96
      %p100 = scmp.eq.s32.totalorder %s18, 0
      %p101 = por %p99, %p100
      %p102 = scmp.ne.s32.totalorder %s94, %s96
      %p103 = scmp.eq.s32.totalorder %s23, 1
      %p104 = por %p102, %p103
      %p105 = scmp.ne.s32.totalorder %s96, %s97
      %p106 = scmp.eq.s32.totalorder %s23, 0
      %p107 = por %p105, %p106
      %p108 = scmp.ne.s32.totalorder %s96, %s97
      %p109 = scmp.eq.s32.totalorder %s24, 1
      %p110 = por %p108, %p109
      %p112 = scmp.ne.s32.totalorder %s97, %s111
      %p113 = scmp.eq.s32.totalorder %s24, 0
      %p114 = por %p112, %p113
      %s115 = ssub.s32 %s18, %s25
      %p116 = scmp.eq.s32.totalorder %s115, 0
      %s118 = sadd.s32 %s117, 1
      %s119 = scalar_select %p116, %s117, %s118
      %p122 = pneg %p116
      %p123 = scmp.eq.s32.totalorder %s18, 1
      %p124 = por %p122, %p123
      %p125 = scmp.ne.s32.totalorder %s117, %s120
      %p126 = scmp.eq.s32.totalorder %s18, 0
      %p127 = por %p125, %p126
      %p128 = scmp.ne.s32.totalorder %s117, %s120
      %p129 = scmp.eq.s32.totalorder %s23, 1
      %p130 = por %p128, %p129
      %p131 = scmp.ne.s32.totalorder %s120, %s121
      %p132 = scmp.eq.s32.totalorder %s23, 0
      %p133 = por %p131, %p132
      %p134 = scmp.ne.s32.totalorder %s120, %s121
      %p135 = scmp.eq.s32.totalorder %s24, 1
      %p136 = por %p134, %p135
      %p138 = scmp.ne.s32.totalorder %s121, %s137
      %p139 = scmp.eq.s32.totalorder %s24, 0
      %p140 = por %p138, %p139
      %s141 = ssub.s32 %s18, %s25
      %p142 = scmp.eq.s32.totalorder %s141, 0
      %s144 = sadd.s32 %s143, 1
      %s145 = scalar_select %p142, %s143, %s144
      %p148 = pneg %p142
      %p149 = scmp.eq.s32.totalorder %s18, 1
      %p150 = por %p148, %p149
      %p151 = scmp.ne.s32.totalorder %s143, %s146
      %p152 = scmp.eq.s32.totalorder %s18, 0
      %p153 = por %p151, %p152
      %p154 = scmp.ne.s32.totalorder %s143, %s146
      %p155 = scmp.eq.s32.totalorder %s23, 1
      %p156 = por %p154, %p155
      %p157 = scmp.ne.s32.totalorder %s146, %s147
      %p158 = scmp.eq.s32.totalorder %s23, 0
      %p159 = por %p157, %p158
      %p160 = scmp.ne.s32.totalorder %s146, %s147
      %p161 = scmp.eq.s32.totalorder %s24, 1
      %p162 = por %p160, %p161
      %p164 = scmp.ne.s32.totalorder %s147, %s163
      %p165 = scmp.eq.s32.totalorder %s24, 0
      %p166 = por %p164, %p165
      %p167 = scmp.le.s32.totalorder 1, %s18
      %p168 = scmp.lt.s32.totalorder %s18, 3
      %p169 = pnand %p167, %p168
      %p170 = pneg %p169
      // Predicated region
      $region9: #{tpu_custom_call.1} parent=5 // pred_check
        _
      $region10: #{tpu_custom_call.1} parent=5 // pred_check_branch
        %172 = sbr.rel (%p169) target = $region12
      $region11: #{tpu_custom_call.1} parent=5 // pred_region
        %s173 = ssub.s32 %s18, 1
        // Predicated region
        $region13: #{tpu_custom_call.1} parent=11 // pred_check
          %p174 = pneg %p65
        $region14: #{tpu_custom_call.1} parent=11 // pred_check_branch
          %176 = sbr.rel (%p174) target = $region16
        $region15: #{tpu_custom_call.1} parent=11 // pred_region
          _
        $region16: #{tpu_custom_call.1} parent=11 // pred_fallthru
          _
        // Predicated region
        $region17: #{tpu_custom_call.1} parent=11 // pred_check
          %p177 = pneg %p86
        $region18: #{tpu_custom_call.1} parent=11 // pred_check_branch
          %179 = sbr.rel (%p177) target = $region20
        $region19: #{tpu_custom_call.1} parent=11 // pred_region
          _
        $region20: #{tpu_custom_call.1} parent=11 // pred_fallthru
          _
        // Predicated region
        $region21: #{tpu_custom_call.1} parent=11 // pred_check
          %p180 = pneg %p107
        $region22: #{tpu_custom_call.1} parent=11 // pred_check_branch
          %182 = sbr.rel (%p180) target = $region24
        $region23: #{tpu_custom_call.1} parent=11 // pred_region
          _
        $region24: #{tpu_custom_call.1} parent=11 // pred_fallthru
          _
      $region12: #{tpu_custom_call.1} parent=5 // pred_fallthru
        _
      %p183 = scmp.lt.s32.totalorder %s18, 2
      // Predicated region
      $region25: #{tpu_custom_call.1} parent=5 // pred_check
        %p184 = pneg %p183
      $region26: #{tpu_custom_call.1} parent=5 // pred_check_branch
        %186 = sbr.rel (%p184) target = $region28
      $region27: #{tpu_custom_call.1} parent=5 // pred_region
        // Predicated region
        $region29: #{tpu_custom_call.1} parent=27 // pred_check
          %p187 = pneg %p38
        $region30: #{tpu_custom_call.1} parent=27 // pred_check_branch
          %189 = sbr.rel (%p187) target = $region32
        $region31: #{tpu_custom_call.1} parent=27 // pred_region
          %s190 = sand.u32 %s28, 1
          %s191 = scalar_lea.sflag [#allocation3], %s190
          %s192 = sand.u32 %s28, 1
          %s193 = smul.addr %s192, 512
          %s194 = scalar_lea.vmem [#allocation2], %s193
          %s195 = smul.u32 64, %s18
          %197 = vsyncadd %s191, 0
          %s198 = smul.addr %s195, 8
          %s199 = scalar_lea.hbm %s0, %s198
          %s200 = sshll.u32 %s199, 4
          %s201 = int_to_ptr.hbm [resolvable:$true] %s200
          %s202 = sshll.u32 %s194, 4
          %s203 = int_to_ptr.vmem [resolvable:$true] %s202
          %208 = dma.hbm_to_vmem [thread:$0]  %s201, 8192, %s203, %s191, 128, 128, 8
        $region32: #{tpu_custom_call.1} parent=27 // pred_fallthru
          _
      $region28: #{tpu_custom_call.1} parent=5 // pred_fallthru
        _
      %p209 = scmp.le.s32.totalorder 1, %s18
      %p210 = scmp.lt.s32.totalorder %s18, 3
      %p211 = pnand %p209, %p210
      %p212 = pneg %p211
      // Predicated region
      $region33: #{tpu_custom_call.1} parent=5 // pred_check
        _
      $region34: #{tpu_custom_call.1} parent=5 // pred_check_branch
        %214 = sbr.rel (%p211) target = $region36
      $region35: #{tpu_custom_call.1} parent=5 // pred_region
        %s215 = ssub.s32 %s18, 1
        %s216 = sand.u32 %s31, 1
        %s217 = scalar_lea.sflag [#allocation3], %s216
        %s218 = sand.u32 %s31, 1
        %s219 = smul.addr %s218, 512
        %s220 = scalar_lea.vmem [#allocation2], %s219
        // Predicated region
        $region37: #{tpu_custom_call.1} parent=35 // pred_check
          %p221 = pneg %p44
        $region38: #{tpu_custom_call.1} parent=35 // pred_check_branch
          %223 = sbr.rel (%p221) target = $region40
        $region39: #{tpu_custom_call.1} parent=35 // pred_region
          %225 = dma.done %s217, 8192
        $region40: #{tpu_custom_call.1} parent=35 // pred_fallthru
          _
        %s226 = sand.u32 %s31, 1
        %s227 = scalar_lea.sflag [#allocation3], %s226
        %s228 = sand.u32 %s31, 1
        %s229 = smul.addr %s228, 512
        %s230 = scalar_lea.vmem [#allocation2], %s229
        %p231 = pneg %p44
        %p232 = pneg %p41
        %p233 = pneg %p65
        %p234 = pneg %p62
        %p235 = pneg %p86
        %p236 = pneg %p83
        %p237 = pneg %p107
        %p238 = pneg %p104
        %p239 = pneg %p133
        %p240 = pneg %p130
        %s241 = sand.u32 %s120, 1
        %s242 = scalar_lea.sflag [#allocation4], %s241
        %s243 = sand.u32 %s120, 1
        %s244 = smul.addr %s243, 512
        %s245 = scalar_lea.vmem [#allocation5], %s244
        %p246 = pneg %p159
        %p247 = pneg %p156
        %s248 = smul.u32 64, %s23
        %p249 = scmp.lt.s32.totalorder %s248, 127
        %s250 = scalar_select %p249, %s248, 127
        %s251 = smul.addr %s250, 8
        %s252 = scalar_lea.vmem %s5, %s251
        %s253 = smul.u32 64, %s23
        %s254 = smul.u32 64, %s23
        %s255 = smul.u32 64, %s23
        %p256 = scmp.lt.s32.totalorder %s255, 127
        %s257 = scalar_select %p256, %s255, 127
        %s258 = smul.addr %s257, 8
        %s259 = scalar_lea.vmem %s5, %s258
        %s260 = smul.u32 64, %s23
        %v261 = vld [vmem:[%s220] sm:$0xff]
        %v262 = vld [vmem:[%s220 + $0x8] sm:$0xff]
        %v263 = vld [vmem:[%s220 + $0x10] sm:$0xff]
        %v264 = vld [vmem:[%s220 + $0x18] sm:$0xff]
        %v265 = vld [vmem:[%s220 + $0x20] sm:$0xff]
        %v266 = vld [vmem:[%s220 + $0x28] sm:$0xff]
        %v267 = vld [vmem:[%s220 + $0x30] sm:$0xff]
        %v268 = vld [vmem:[%s220 + $0x38] sm:$0xff]
        %v269 = vld [vmem:[%s220 + $0x40] sm:$0xff]
        %v270 = vld [vmem:[%s220 + $0x48] sm:$0xff]
        %v271 = vld [vmem:[%s220 + $0x50] sm:$0xff]
        %v272 = vld [vmem:[%s220 + $0x58] sm:$0xff]
        %v273 = vld [vmem:[%s220 + $0x60] sm:$0xff]
        %v274 = vld [vmem:[%s220 + $0x68] sm:$0xff]
        %v275 = vld [vmem:[%s220 + $0x70] sm:$0xff]
        %v276 = vld [vmem:[%s220 + $0x78] sm:$0xff]
        %v277 = vld [vmem:[%s220 + $0x80] sm:$0xff]
        %v278 = vld [vmem:[%s220 + $0x88] sm:$0xff]
        %v279 = vld [vmem:[%s220 + $0x90] sm:$0xff]
        %v280 = vld [vmem:[%s220 + $0x98] sm:$0xff]
        %v281 = vld [vmem:[%s220 + $0xa0] sm:$0xff]
        %v282 = vld [vmem:[%s220 + $0xa8] sm:$0xff]
        %v283 = vld [vmem:[%s220 + $0xb0] sm:$0xff]
        %v284 = vld [vmem:[%s220 + $0xb8] sm:$0xff]
        %v285 = vld [vmem:[%s220 + $0xc0] sm:$0xff]
        %v286 = vld [vmem:[%s220 + $0xc8] sm:$0xff]
        %v287 = vld [vmem:[%s220 + $0xd0] sm:$0xff]
        %v288 = vld [vmem:[%s220 + $0xd8] sm:$0xff]
        %v289 = vld [vmem:[%s220 + $0xe0] sm:$0xff]
        %v290 = vld [vmem:[%s220 + $0xe8] sm:$0xff]
        %v291 = vld [vmem:[%s220 + $0xf0] sm:$0xff]
        %v292 = vld [vmem:[%s220 + $0xf8] sm:$0xff]
        %v293 = vld [vmem:[%s220 + $0x100] sm:$0xff]
        %v294 = vld [vmem:[%s220 + $0x108] sm:$0xff]
        %v295 = vld [vmem:[%s220 + $0x110] sm:$0xff]
        %v296 = vld [vmem:[%s220 + $0x118] sm:$0xff]
        %v297 = vld [vmem:[%s220 + $0x120] sm:$0xff]
        %v298 = vld [vmem:[%s220 + $0x128] sm:$0xff]
        %v299 = vld [vmem:[%s220 + $0x130] sm:$0xff]
        %v300 = vld [vmem:[%s220 + $0x138] sm:$0xff]
        %v301 = vld [vmem:[%s220 + $0x140] sm:$0xff]
        %v302 = vld [vmem:[%s220 + $0x148] sm:$0xff]
        %v303 = vld [vmem:[%s220 + $0x150] sm:$0xff]
        %v304 = vld [vmem:[%s220 + $0x158] sm:$0xff]
        %v305 = vld [vmem:[%s220 + $0x160] sm:$0xff]
        %v306 = vld [vmem:[%s220 + $0x168] sm:$0xff]
        %v307 = vld [vmem:[%s220 + $0x170] sm:$0xff]
        %v308 = vld [vmem:[%s220 + $0x178] sm:$0xff]
        %v309 = vld [vmem:[%s220 + $0x180] sm:$0xff]
        %v310 = vld [vmem:[%s220 + $0x188] sm:$0xff]
        %v311 = vld [vmem:[%s220 + $0x190] sm:$0xff]
        %v312 = vld [vmem:[%s220 + $0x198] sm:$0xff]
        %v313 = vld [vmem:[%s220 + $0x1a0] sm:$0xff]
        %v314 = vld [vmem:[%s220 + $0x1a8] sm:$0xff]
        %v315 = vld [vmem:[%s220 + $0x1b0] sm:$0xff]
        %v316 = vld [vmem:[%s220 + $0x1b8] sm:$0xff]
        %v317 = vld [vmem:[%s220 + $0x1c0] sm:$0xff]
        %v318 = vld [vmem:[%s220 + $0x1c8] sm:$0xff]
        %v319 = vld [vmem:[%s220 + $0x1d0] sm:$0xff]
        %v320 = vld [vmem:[%s220 + $0x1d8] sm:$0xff]
        %v321 = vld [vmem:[%s220 + $0x1e0] sm:$0xff]
        %v322 = vld [vmem:[%s220 + $0x1e8] sm:$0xff]
        %v323 = vld [vmem:[%s220 + $0x1f0] sm:$0xff]
        %v324 = vld [vmem:[%s220 + $0x1f8] sm:$0xff]
        %v325 = vld [vmem:[%s1] sm:$0xff]
        %v326 = vld [vmem:[%s1 + $0x8] sm:$0xff]
        %v327 = vld [vmem:[%s1 + $0x10] sm:$0xff]
        %v328 = vld [vmem:[%s1 + $0x18] sm:$0xff]
        %v329 = vld [vmem:[%s1 + $0x20] sm:$0xff]
        %v330 = vld [vmem:[%s1 + $0x28] sm:$0xff]
        %v331 = vld [vmem:[%s1 + $0x30] sm:$0xff]
        %v332 = vld [vmem:[%s1 + $0x38] sm:$0xff]
        %v333 = vld [vmem:[%s1 + $0x40] sm:$0xff]
        %v334 = vld [vmem:[%s1 + $0x48] sm:$0xff]
        %v335 = vld [vmem:[%s1 + $0x50] sm:$0xff]
        %v336 = vld [vmem:[%s1 + $0x58] sm:$0xff]
        %v337 = vld [vmem:[%s1 + $0x60] sm:$0xff]
        %v338 = vld [vmem:[%s1 + $0x68] sm:$0xff]
        %v339 = vld [vmem:[%s1 + $0x70] sm:$0xff]
        %v340 = vld [vmem:[%s1 + $0x78] sm:$0xff]
        %v341 = vld [vmem:[%s2] sm:$0x1]
        %v343 = vperm.slane %v341, 0
        %345 = vmatpush.msra.mxu0 %v340
        %346 = vmatpush.msra.mxu0 %v339
        %347 = vmatpush.msra.mxu0 %v338
        %348 = vmatpush.msra.mxu0 %v337
        %349 = vmatpush.msra.mxu0 %v336
        %350 = vmatpush.msra.mxu0 %v335
        %351 = vmatpush.msra.mxu0 %v334
        %352 = vmatpush.msra.mxu0 %v333
        %353 = vmatpush.msra.mxu0 %v332
        %354 = vmatpush.msra.mxu0 %v331
        %355 = vmatpush.msra.mxu0 %v330
        %356 = vmatpush.msra.mxu0 %v329
        %357 = vmatpush.msra.mxu0 %v328
        %358 = vmatpush.msra.mxu0 %v327
        %359 = vmatpush.msra.mxu0 %v326
        %360 = vmatpush.msra.mxu0 %v325
        %361 = vmatmul.f32.gmra.mxu0 %v261
        %v362 = vpop.f32.mrf.mxu0
        %v363 = vadd.f32 %v343, %v362
        %364 = vmatmul.f32.gmra.mxu0 %v262
        %v365 = vpop.f32.mrf.mxu0
        %v366 = vadd.f32 %v343, %v365
        %367 = vmatmul.f32.gmra.mxu0 %v263
        %v368 = vpop.f32.mrf.mxu0
        %v369 = vadd.f32 %v343, %v368
        %370 = vmatmul.f32.gmra.mxu0 %v264
        %v371 = vpop.f32.mrf.mxu0
        %v372 = vadd.f32 %v343, %v371
        %373 = vmatmul.f32.gmra.mxu0 %v265
        %v374 = vpop.f32.mrf.mxu0
        %v375 = vadd.f32 %v343, %v374
        %376 = vmatmul.f32.gmra.mxu0 %v266
        %v377 = vpop.f32.mrf.mxu0
        %v378 = vadd.f32 %v343, %v377
        %379 = vmatmul.f32.gmra.mxu0 %v267
        %v380 = vpop.f32.mrf.mxu0
        %v381 = vadd.f32 %v343, %v380
        %382 = vmatmul.f32.gmra.mxu0 %v268
        %v383 = vpop.f32.mrf.mxu0
        %v384 = vadd.f32 %v343, %v383
        %385 = vmatmul.f32.gmra.mxu0 %v269
        %v386 = vpop.f32.mrf.mxu0
        %v387 = vadd.f32 %v343, %v386
        %388 = vmatmul.f32.gmra.mxu0 %v270
        %v389 = vpop.f32.mrf.mxu0
        %v390 = vadd.f32 %v343, %v389
        %391 = vmatmul.f32.gmra.mxu0 %v271
        %v392 = vpop.f32.mrf.mxu0
        %v393 = vadd.f32 %v343, %v392
        %394 = vmatmul.f32.gmra.mxu0 %v272
        %v395 = vpop.f32.mrf.mxu0
        %v396 = vadd.f32 %v343, %v395
        %397 = vmatmul.f32.gmra.mxu0 %v273
        %v398 = vpop.f32.mrf.mxu0
        %v399 = vadd.f32 %v343, %v398
        %400 = vmatmul.f32.gmra.mxu0 %v274
        %v401 = vpop.f32.mrf.mxu0
        %v402 = vadd.f32 %v343, %v401
        %403 = vmatmul.f32.gmra.mxu0 %v275
        %v404 = vpop.f32.mrf.mxu0
        %v405 = vadd.f32 %v343, %v404
        %406 = vmatmul.f32.gmra.mxu0 %v276
        %v407 = vpop.f32.mrf.mxu0
        %v408 = vadd.f32 %v343, %v407
        %409 = vmatmul.f32.gmra.mxu0 %v277
        %v410 = vpop.f32.mrf.mxu0
        %v411 = vadd.f32 %v343, %v410
        %412 = vmatmul.f32.gmra.mxu0 %v278
        %v413 = vpop.f32.mrf.mxu0
        %v414 = vadd.f32 %v343, %v413
        %415 = vmatmul.f32.gmra.mxu0 %v279
        %v416 = vpop.f32.mrf.mxu0
        %v417 = vadd.f32 %v343, %v416
        %418 = vmatmul.f32.gmra.mxu0 %v280
        %v419 = vpop.f32.mrf.mxu0
        %v420 = vadd.f32 %v343, %v419
        %421 = vmatmul.f32.gmra.mxu0 %v281
        %v422 = vpop.f32.mrf.mxu0
        %v423 = vadd.f32 %v343, %v422
        %424 = vmatmul.f32.gmra.mxu0 %v282
        %v425 = vpop.f32.mrf.mxu0
        %v426 = vadd.f32 %v343, %v425
        %427 = vmatmul.f32.gmra.mxu0 %v283
        %v428 = vpop.f32.mrf.mxu0
        %v429 = vadd.f32 %v343, %v428
        %430 = vmatmul.f32.gmra.mxu0 %v284
        %v431 = vpop.f32.mrf.mxu0
        %v432 = vadd.f32 %v343, %v431
        %433 = vmatmul.f32.gmra.mxu0 %v285
        %v434 = vpop.f32.mrf.mxu0
        %v435 = vadd.f32 %v343, %v434
        %436 = vmatmul.f32.gmra.mxu0 %v286
        %v437 = vpop.f32.mrf.mxu0
        %v438 = vadd.f32 %v343, %v437
        %439 = vmatmul.f32.gmra.mxu0 %v287
        %v440 = vpop.f32.mrf.mxu0
        %v441 = vadd.f32 %v343, %v440
        %442 = vmatmul.f32.gmra.mxu0 %v288
        %v443 = vpop.f32.mrf.mxu0
        %v444 = vadd.f32 %v343, %v443
        %445 = vmatmul.f32.gmra.mxu0 %v289
        %v446 = vpop.f32.mrf.mxu0
        %v447 = vadd.f32 %v343, %v446
        %448 = vmatmul.f32.gmra.mxu0 %v290
        %v449 = vpop.f32.mrf.mxu0
        %v450 = vadd.f32 %v343, %v449
        %451 = vmatmul.f32.gmra.mxu0 %v291
        %v452 = vpop.f32.mrf.mxu0
        %v453 = vadd.f32 %v343, %v452
        %454 = vmatmul.f32.gmra.mxu0 %v292
        %v455 = vpop.f32.mrf.mxu0
        %v456 = vadd.f32 %v343, %v455
        %457 = vmatmul.f32.gmra.mxu0 %v293
        %v458 = vpop.f32.mrf.mxu0
        %v459 = vadd.f32 %v343, %v458
        %460 = vmatmul.f32.gmra.mxu0 %v294
        %v461 = vpop.f32.mrf.mxu0
        %v462 = vadd.f32 %v343, %v461
        %463 = vmatmul.f32.gmra.mxu0 %v295
        %v464 = vpop.f32.mrf.mxu0
        %v465 = vadd.f32 %v343, %v464
        %466 = vmatmul.f32.gmra.mxu0 %v296
        %v467 = vpop.f32.mrf.mxu0
        %v468 = vadd.f32 %v343, %v467
        %469 = vmatmul.f32.gmra.mxu0 %v297
        %v470 = vpop.f32.mrf.mxu0
        %v471 = vadd.f32 %v343, %v470
        %472 = vmatmul.f32.gmra.mxu0 %v298
        %v473 = vpop.f32.mrf.mxu0
        %v474 = vadd.f32 %v343, %v473
        %475 = vmatmul.f32.gmra.mxu0 %v299
        %v476 = vpop.f32.mrf.mxu0
        %v477 = vadd.f32 %v343, %v476
        %478 = vmatmul.f32.gmra.mxu0 %v300
        %v479 = vpop.f32.mrf.mxu0
        %v480 = vadd.f32 %v343, %v479
        %481 = vmatmul.f32.gmra.mxu0 %v301
        %v482 = vpop.f32.mrf.mxu0
        %v483 = vadd.f32 %v343, %v482
        %484 = vmatmul.f32.gmra.mxu0 %v302
        %v485 = vpop.f32.mrf.mxu0
        %v486 = vadd.f32 %v343, %v485
        %487 = vmatmul.f32.gmra.mxu0 %v303
        %v488 = vpop.f32.mrf.mxu0
        %v489 = vadd.f32 %v343, %v488
        %490 = vmatmul.f32.gmra.mxu0 %v304
        %v491 = vpop.f32.mrf.mxu0
        %v492 = vadd.f32 %v343, %v491
        %493 = vmatmul.f32.gmra.mxu0 %v305
        %v494 = vpop.f32.mrf.mxu0
        %v495 = vadd.f32 %v343, %v494
        %496 = vmatmul.f32.gmra.mxu0 %v306
        %v497 = vpop.f32.mrf.mxu0
        %v498 = vadd.f32 %v343, %v497
        %499 = vmatmul.f32.gmra.mxu0 %v307
        %v500 = vpop.f32.mrf.mxu0
        %v501 = vadd.f32 %v343, %v500
        %502 = vmatmul.f32.gmra.mxu0 %v308
        %v503 = vpop.f32.mrf.mxu0
        %v504 = vadd.f32 %v343, %v503
        %505 = vmatmul.f32.gmra.mxu0 %v309
        %v506 = vpop.f32.mrf.mxu0
        %v507 = vadd.f32 %v343, %v506
        %508 = vmatmul.f32.gmra.mxu0 %v310
        %v509 = vpop.f32.mrf.mxu0
        %v510 = vadd.f32 %v343, %v509
        %511 = vmatmul.f32.gmra.mxu0 %v311
        %v512 = vpop.f32.mrf.mxu0
        %v513 = vadd.f32 %v343, %v512
        %514 = vmatmul.f32.gmra.mxu0 %v312
        %v515 = vpop.f32.mrf.mxu0
        %v516 = vadd.f32 %v343, %v515
        %517 = vmatmul.f32.gmra.mxu0 %v313
        %v518 = vpop.f32.mrf.mxu0
        %v519 = vadd.f32 %v343, %v518
        %520 = vmatmul.f32.gmra.mxu0 %v314
        %v521 = vpop.f32.mrf.mxu0
        %v522 = vadd.f32 %v343, %v521
        %523 = vmatmul.f32.gmra.mxu0 %v315
        %v524 = vpop.f32.mrf.mxu0
        %v525 = vadd.f32 %v343, %v524
        %526 = vmatmul.f32.gmra.mxu0 %v316
        %v527 = vpop.f32.mrf.mxu0
        %v528 = vadd.f32 %v343, %v527
        %529 = vmatmul.f32.gmra.mxu0 %v317
        %v530 = vpop.f32.mrf.mxu0
        %v531 = vadd.f32 %v343, %v530
        %532 = vmatmul.f32.gmra.mxu0 %v318
        %v533 = vpop.f32.mrf.mxu0
        %v534 = vadd.f32 %v343, %v533
        %535 = vmatmul.f32.gmra.mxu0 %v319
        %v536 = vpop.f32.mrf.mxu0
        %v537 = vadd.f32 %v343, %v536
        %538 = vmatmul.f32.gmra.mxu0 %v320
        %v539 = vpop.f32.mrf.mxu0
        %v540 = vadd.f32 %v343, %v539
        %541 = vmatmul.f32.gmra.mxu0 %v321
        %v542 = vpop.f32.mrf.mxu0
        %v543 = vadd.f32 %v343, %v542
        %544 = vmatmul.f32.gmra.mxu0 %v322
        %v545 = vpop.f32.mrf.mxu0
        %v546 = vadd.f32 %v343, %v545
        %547 = vmatmul.f32.gmra.mxu0 %v323
        %v548 = vpop.f32.mrf.mxu0
        %v549 = vadd.f32 %v343, %v548
        %550 = vmatmul.f32.gmra.mxu0 %v324
        %v551 = vpop.f32.mrf.mxu0
        %v552 = vadd.f32 %v343, %v551
        %553 = vdwg.mxu0
        %554 = vst [vmem:[%s245] sm:$0xff] %v363
        %555 = vst [vmem:[%s245 + $0x8] sm:$0xff] %v366
        %556 = vst [vmem:[%s245 + $0x10] sm:$0xff] %v369
        %557 = vst [vmem:[%s245 + $0x18] sm:$0xff] %v372
        %558 = vst [vmem:[%s245 + $0x20] sm:$0xff] %v375
        %559 = vst [vmem:[%s245 + $0x28] sm:$0xff] %v378
        %560 = vst [vmem:[%s245 + $0x30] sm:$0xff] %v381
        %561 = vst [vmem:[%s245 + $0x38] sm:$0xff] %v384
        %562 = vst [vmem:[%s245 + $0x40] sm:$0xff] %v387
        %563 = vst [vmem:[%s245 + $0x48] sm:$0xff] %v390
        %564 = vst [vmem:[%s245 + $0x50] sm:$0xff] %v393
        %565 = vst [vmem:[%s245 + $0x58] sm:$0xff] %v396
        %566 = vst [vmem:[%s245 + $0x60] sm:$0xff] %v399
        %567 = vst [vmem:[%s245 + $0x68] sm:$0xff] %v402
        %568 = vst [vmem:[%s245 + $0x70] sm:$0xff] %v405
        %569 = vst [vmem:[%s245 + $0x78] sm:$0xff] %v408
        %570 = vst [vmem:[%s245 + $0x80] sm:$0xff] %v411
        %571 = vst [vmem:[%s245 + $0x88] sm:$0xff] %v414
        %572 = vst [vmem:[%s245 + $0x90] sm:$0xff] %v417
        %573 = vst [vmem:[%s245 + $0x98] sm:$0xff] %v420
        %574 = vst [vmem:[%s245 + $0xa0] sm:$0xff] %v423
        %575 = vst [vmem:[%s245 + $0xa8] sm:$0xff] %v426
        %576 = vst [vmem:[%s245 + $0xb0] sm:$0xff] %v429
        %577 = vst [vmem:[%s245 + $0xb8] sm:$0xff] %v432
        %578 = vst [vmem:[%s245 + $0xc0] sm:$0xff] %v435
        %579 = vst [vmem:[%s245 + $0xc8] sm:$0xff] %v438
        %580 = vst [vmem:[%s245 + $0xd0] sm:$0xff] %v441
        %581 = vst [vmem:[%s245 + $0xd8] sm:$0xff] %v444
        %582 = vst [vmem:[%s245 + $0xe0] sm:$0xff] %v447
        %583 = vst [vmem:[%s245 + $0xe8] sm:$0xff] %v450
        %584 = vst [vmem:[%s245 + $0xf0] sm:$0xff] %v453
        %585 = vst [vmem:[%s245 + $0xf8] sm:$0xff] %v456
        %586 = vst [vmem:[%s245 + $0x100] sm:$0xff] %v459
        %587 = vst [vmem:[%s245 + $0x108] sm:$0xff] %v462
        %588 = vst [vmem:[%s245 + $0x110] sm:$0xff] %v465
        %589 = vst [vmem:[%s245 + $0x118] sm:$0xff] %v468
        %590 = vst [vmem:[%s245 + $0x120] sm:$0xff] %v471
        %591 = vst [vmem:[%s245 + $0x128] sm:$0xff] %v474
        %592 = vst [vmem:[%s245 + $0x130] sm:$0xff] %v477
        %593 = vst [vmem:[%s245 + $0x138] sm:$0xff] %v480
        %594 = vst [vmem:[%s245 + $0x140] sm:$0xff] %v483
        %595 = vst [vmem:[%s245 + $0x148] sm:$0xff] %v486
        %596 = vst [vmem:[%s245 + $0x150] sm:$0xff] %v489
        %597 = vst [vmem:[%s245 + $0x158] sm:$0xff] %v492
        %598 = vst [vmem:[%s245 + $0x160] sm:$0xff] %v495
        %599 = vst [vmem:[%s245 + $0x168] sm:$0xff] %v498
        %600 = vst [vmem:[%s245 + $0x170] sm:$0xff] %v501
        %601 = vst [vmem:[%s245 + $0x178] sm:$0xff] %v504
        %602 = vst [vmem:[%s245 + $0x180] sm:$0xff] %v507
        %603 = vst [vmem:[%s245 + $0x188] sm:$0xff] %v510
        %604 = vst [vmem:[%s245 + $0x190] sm:$0xff] %v513
        %605 = vst [vmem:[%s245 + $0x198] sm:$0xff] %v516
        %606 = vst [vmem:[%s245 + $0x1a0] sm:$0xff] %v519
        %607 = vst [vmem:[%s245 + $0x1a8] sm:$0xff] %v522
        %608 = vst [vmem:[%s245 + $0x1b0] sm:$0xff] %v525
        %609 = vst [vmem:[%s245 + $0x1b8] sm:$0xff] %v528
        %610 = vst [vmem:[%s245 + $0x1c0] sm:$0xff] %v531
        %611 = vst [vmem:[%s245 + $0x1c8] sm:$0xff] %v534
        %612 = vst [vmem:[%s245 + $0x1d0] sm:$0xff] %v537
        %613 = vst [vmem:[%s245 + $0x1d8] sm:$0xff] %v540
        %614 = vst [vmem:[%s245 + $0x1e0] sm:$0xff] %v543
        %615 = vst [vmem:[%s245 + $0x1e8] sm:$0xff] %v546
        %616 = vst [vmem:[%s245 + $0x1f0] sm:$0xff] %v549
        %617 = vst [vmem:[%s245 + $0x1f8] sm:$0xff] %v552
        %v618 = vld [vmem:[%s3] sm:$0xff]
        %v619 = vld [vmem:[%s3 + $0x8] sm:$0xff]
        %v620 = vld [vmem:[%s3 + $0x10] sm:$0xff]
        %v621 = vld [vmem:[%s3 + $0x18] sm:$0xff]
        %v622 = vld [vmem:[%s3 + $0x20] sm:$0xff]
        %v623 = vld [vmem:[%s3 + $0x28] sm:$0xff]
        %v624 = vld [vmem:[%s3 + $0x30] sm:$0xff]
        %v625 = vld [vmem:[%s3 + $0x38] sm:$0xff]
        %v626 = vld [vmem:[%s3 + $0x40] sm:$0xff]
        %v627 = vld [vmem:[%s3 + $0x48] sm:$0xff]
        %v628 = vld [vmem:[%s3 + $0x50] sm:$0xff]
        %v629 = vld [vmem:[%s3 + $0x58] sm:$0xff]
        %v630 = vld [vmem:[%s3 + $0x60] sm:$0xff]
        %v631 = vld [vmem:[%s3 + $0x68] sm:$0xff]
        %v632 = vld [vmem:[%s3 + $0x70] sm:$0xff]
        %v633 = vld [vmem:[%s3 + $0x78] sm:$0xff]
        %634 = vmatpush.msra.mxu0 %v633
        %635 = vmatpush.msra.mxu0 %v632
        %636 = vmatpush.msra.mxu0 %v631
        %637 = vmatpush.msra.mxu0 %v630
        %638 = vmatpush.msra.mxu0 %v629
        %639 = vmatpush.msra.mxu0 %v628
        %640 = vmatpush.msra.mxu0 %v627
        %641 = vmatpush.msra.mxu0 %v626
        %642 = vmatpush.msra.mxu0 %v625
        %643 = vmatpush.msra.mxu0 %v624
        %644 = vmatpush.msra.mxu0 %v623
        %645 = vmatpush.msra.mxu0 %v622
        %646 = vmatpush.msra.mxu0 %v621
        %647 = vmatpush.msra.mxu0 %v620
        %648 = vmatpush.msra.mxu0 %v619
        %649 = vmatpush.msra.mxu0 %v618
        %650 = vmatmul.f32.gmra.mxu0 %v363
        %v651 = vpop.f32.mrf.mxu0
        %v652 = vadd.f32 0.0, %v651
        %653 = vmatmul.f32.gmra.mxu0 %v366
        %v654 = vpop.f32.mrf.mxu0
        %v655 = vadd.f32 0.0, %v654
        %656 = vmatmul.f32.gmra.mxu0 %v369
        %v657 = vpop.f32.mrf.mxu0
        %v658 = vadd.f32 0.0, %v657
        %659 = vmatmul.f32.gmra.mxu0 %v372
        %v660 = vpop.f32.mrf.mxu0
        %v661 = vadd.f32 0.0, %v660
        %662 = vmatmul.f32.gmra.mxu0 %v375
        %v663 = vpop.f32.mrf.mxu0
        %v664 = vadd.f32 0.0, %v663
        %665 = vmatmul.f32.gmra.mxu0 %v378
        %v666 = vpop.f32.mrf.mxu0
        %v667 = vadd.f32 0.0, %v666
        %668 = vmatmul.f32.gmra.mxu0 %v381
        %v669 = vpop.f32.mrf.mxu0
        %v670 = vadd.f32 0.0, %v669
        %671 = vmatmul.f32.gmra.mxu0 %v384
        %v672 = vpop.f32.mrf.mxu0
        %v673 = vadd.f32 0.0, %v672
        %674 = vmatmul.f32.gmra.mxu0 %v387
        %v675 = vpop.f32.mrf.mxu0
        %v676 = vadd.f32 0.0, %v675
        %677 = vmatmul.f32.gmra.mxu0 %v390
        %v678 = vpop.f32.mrf.mxu0
        %v679 = vadd.f32 0.0, %v678
        %680 = vmatmul.f32.gmra.mxu0 %v393
        %v681 = vpop.f32.mrf.mxu0
        %v682 = vadd.f32 0.0, %v681
        %683 = vmatmul.f32.gmra.mxu0 %v396
        %v684 = vpop.f32.mrf.mxu0
        %v685 = vadd.f32 0.0, %v684
        %686 = vmatmul.f32.gmra.mxu0 %v399
        %v687 = vpop.f32.mrf.mxu0
        %v688 = vadd.f32 0.0, %v687
        %689 = vmatmul.f32.gmra.mxu0 %v402
        %v690 = vpop.f32.mrf.mxu0
        %v691 = vadd.f32 0.0, %v690
        %692 = vmatmul.f32.gmra.mxu0 %v405
        %v693 = vpop.f32.mrf.mxu0
        %v694 = vadd.f32 0.0, %v693
        %695 = vmatmul.f32.gmra.mxu0 %v408
        %v696 = vpop.f32.mrf.mxu0
        %v697 = vadd.f32 0.0, %v696
        %698 = vmatmul.f32.gmra.mxu0 %v411
        %v699 = vpop.f32.mrf.mxu0
        %v700 = vadd.f32 0.0, %v699
        %701 = vmatmul.f32.gmra.mxu0 %v414
        %v702 = vpop.f32.mrf.mxu0
        %v703 = vadd.f32 0.0, %v702
        %704 = vmatmul.f32.gmra.mxu0 %v417
        %v705 = vpop.f32.mrf.mxu0
        %v706 = vadd.f32 0.0, %v705
        %707 = vmatmul.f32.gmra.mxu0 %v420
        %v708 = vpop.f32.mrf.mxu0
        %v709 = vadd.f32 0.0, %v708
        %710 = vmatmul.f32.gmra.mxu0 %v423
        %v711 = vpop.f32.mrf.mxu0
        %v712 = vadd.f32 0.0, %v711
        %713 = vmatmul.f32.gmra.mxu0 %v426
        %v714 = vpop.f32.mrf.mxu0
        %v715 = vadd.f32 0.0, %v714
        %716 = vmatmul.f32.gmra.mxu0 %v429
        %v717 = vpop.f32.mrf.mxu0
        %v718 = vadd.f32 0.0, %v717
        %719 = vmatmul.f32.gmra.mxu0 %v432
        %v720 = vpop.f32.mrf.mxu0
        %v721 = vadd.f32 0.0, %v720
        %722 = vmatmul.f32.gmra.mxu0 %v435
        %v723 = vpop.f32.mrf.mxu0
        %v724 = vadd.f32 0.0, %v723
        %725 = vmatmul.f32.gmra.mxu0 %v438
        %v726 = vpop.f32.mrf.mxu0
        %v727 = vadd.f32 0.0, %v726
        %728 = vmatmul.f32.gmra.mxu0 %v441
        %v729 = vpop.f32.mrf.mxu0
        %v730 = vadd.f32 0.0, %v729
        %731 = vmatmul.f32.gmra.mxu0 %v444
        %v732 = vpop.f32.mrf.mxu0
        %v733 = vadd.f32 0.0, %v732
        %734 = vmatmul.f32.gmra.mxu0 %v447
        %v735 = vpop.f32.mrf.mxu0
        %v736 = vadd.f32 0.0, %v735
        %737 = vmatmul.f32.gmra.mxu0 %v450
        %v738 = vpop.f32.mrf.mxu0
        %v739 = vadd.f32 0.0, %v738
        %740 = vmatmul.f32.gmra.mxu0 %v453
        %v741 = vpop.f32.mrf.mxu0
        %v742 = vadd.f32 0.0, %v741
        %743 = vmatmul.f32.gmra.mxu0 %v456
        %v744 = vpop.f32.mrf.mxu0
        %v745 = vadd.f32 0.0, %v744
        %746 = vmatmul.f32.gmra.mxu0 %v459
        %v747 = vpop.f32.mrf.mxu0
        %v748 = vadd.f32 0.0, %v747
        %749 = vmatmul.f32.gmra.mxu0 %v462
        %v750 = vpop.f32.mrf.mxu0
        %v751 = vadd.f32 0.0, %v750
        %752 = vmatmul.f32.gmra.mxu0 %v465
        %v753 = vpop.f32.mrf.mxu0
        %v754 = vadd.f32 0.0, %v753
        %755 = vmatmul.f32.gmra.mxu0 %v468
        %v756 = vpop.f32.mrf.mxu0
        %v757 = vadd.f32 0.0, %v756
        %758 = vmatmul.f32.gmra.mxu0 %v471
        %v759 = vpop.f32.mrf.mxu0
        %v760 = vadd.f32 0.0, %v759
        %761 = vmatmul.f32.gmra.mxu0 %v474
        %v762 = vpop.f32.mrf.mxu0
        %v763 = vadd.f32 0.0, %v762
        %764 = vmatmul.f32.gmra.mxu0 %v477
        %v765 = vpop.f32.mrf.mxu0
        %v766 = vadd.f32 0.0, %v765
        %767 = vmatmul.f32.gmra.mxu0 %v480
        %v768 = vpop.f32.mrf.mxu0
        %v769 = vadd.f32 0.0, %v768
        %770 = vmatmul.f32.gmra.mxu0 %v483
        %v771 = vpop.f32.mrf.mxu0
        %v772 = vadd.f32 0.0, %v771
        %773 = vmatmul.f32.gmra.mxu0 %v486
        %v774 = vpop.f32.mrf.mxu0
        %v775 = vadd.f32 0.0, %v774
        %776 = vmatmul.f32.gmra.mxu0 %v489
        %v777 = vpop.f32.mrf.mxu0
        %v778 = vadd.f32 0.0, %v777
        %779 = vmatmul.f32.gmra.mxu0 %v492
        %v780 = vpop.f32.mrf.mxu0
        %v781 = vadd.f32 0.0, %v780
        %782 = vmatmul.f32.gmra.mxu0 %v495
        %v783 = vpop.f32.mrf.mxu0
        %v784 = vadd.f32 0.0, %v783
        %785 = vmatmul.f32.gmra.mxu0 %v498
        %v786 = vpop.f32.mrf.mxu0
        %v787 = vadd.f32 0.0, %v786
        %788 = vmatmul.f32.gmra.mxu0 %v501
        %v789 = vpop.f32.mrf.mxu0
        %v790 = vadd.f32 0.0, %v789
        %791 = vmatmul.f32.gmra.mxu0 %v504
        %v792 = vpop.f32.mrf.mxu0
        %v793 = vadd.f32 0.0, %v792
        %794 = vmatmul.f32.gmra.mxu0 %v507
        %v795 = vpop.f32.mrf.mxu0
        %v796 = vadd.f32 0.0, %v795
        %797 = vmatmul.f32.gmra.mxu0 %v510
        %v798 = vpop.f32.mrf.mxu0
        %v799 = vadd.f32 0.0, %v798
        %800 = vmatmul.f32.gmra.mxu0 %v513
        %v801 = vpop.f32.mrf.mxu0
        %v802 = vadd.f32 0.0, %v801
        %803 = vmatmul.f32.gmra.mxu0 %v516
        %v804 = vpop.f32.mrf.mxu0
        %v805 = vadd.f32 0.0, %v804
        %806 = vmatmul.f32.gmra.mxu0 %v519
        %v807 = vpop.f32.mrf.mxu0
        %v808 = vadd.f32 0.0, %v807
        %809 = vmatmul.f32.gmra.mxu0 %v522
        %v810 = vpop.f32.mrf.mxu0
        %v811 = vadd.f32 0.0, %v810
        %812 = vmatmul.f32.gmra.mxu0 %v525
        %v813 = vpop.f32.mrf.mxu0
        %v814 = vadd.f32 0.0, %v813
        %815 = vmatmul.f32.gmra.mxu0 %v528
        %v816 = vpop.f32.mrf.mxu0
        %v817 = vadd.f32 0.0, %v816
        %818 = vmatmul.f32.gmra.mxu0 %v531
        %v819 = vpop.f32.mrf.mxu0
        %v820 = vadd.f32 0.0, %v819
        %821 = vmatmul.f32.gmra.mxu0 %v534
        %v822 = vpop.f32.mrf.mxu0
        %v823 = vadd.f32 0.0, %v822
        %824 = vmatmul.f32.gmra.mxu0 %v537
        %v825 = vpop.f32.mrf.mxu0
        %v826 = vadd.f32 0.0, %v825
        %827 = vmatmul.f32.gmra.mxu0 %v540
        %v828 = vpop.f32.mrf.mxu0
        %v829 = vadd.f32 0.0, %v828
        %830 = vmatmul.f32.gmra.mxu0 %v543
        %v831 = vpop.f32.mrf.mxu0
        %v832 = vadd.f32 0.0, %v831
        %833 = vmatmul.f32.gmra.mxu0 %v546
        %v834 = vpop.f32.mrf.mxu0
        %v835 = vadd.f32 0.0, %v834
        %836 = vmatmul.f32.gmra.mxu0 %v549
        %v837 = vpop.f32.mrf.mxu0
        %v838 = vadd.f32 0.0, %v837
        %839 = vmatmul.f32.gmra.mxu0 %v552
        %v840 = vpop.f32.mrf.mxu0
        %v841 = vadd.f32 0.0, %v840
        %842 = vdwg.mxu0
        %v843 = vmax.f32 %v652, -2.0
        %v844 = vmax.f32 %v655, -2.0
        %v845 = vmax.f32 %v658, -2.0
        %v846 = vmax.f32 %v661, -2.0
        %v847 = vmax.f32 %v664, -2.0
        %v848 = vmax.f32 %v667, -2.0
        %v849 = vmax.f32 %v670, -2.0
        %v850 = vmax.f32 %v673, -2.0
        %v851 = vmax.f32 %v676, -2.0
        %v852 = vmax.f32 %v679, -2.0
        %v853 = vmax.f32 %v682, -2.0
        %v854 = vmax.f32 %v685, -2.0
        %v855 = vmax.f32 %v688, -2.0
        %v856 = vmax.f32 %v691, -2.0
        %v857 = vmax.f32 %v694, -2.0
        %v858 = vmax.f32 %v697, -2.0
        %v859 = vmax.f32 %v700, -2.0
        %v860 = vmax.f32 %v703, -2.0
        %v861 = vmax.f32 %v706, -2.0
        %v862 = vmax.f32 %v709, -2.0
        %v863 = vmax.f32 %v712, -2.0
        %v864 = vmax.f32 %v715, -2.0
        %v865 = vmax.f32 %v718, -2.0
        %v866 = vmax.f32 %v721, -2.0
        %v867 = vmax.f32 %v724, -2.0
        %v868 = vmax.f32 %v727, -2.0
        %v869 = vmax.f32 %v730, -2.0
        %v870 = vmax.f32 %v733, -2.0
        %v871 = vmax.f32 %v736, -2.0
        %v872 = vmax.f32 %v739, -2.0
        %v873 = vmax.f32 %v742, -2.0
        %v874 = vmax.f32 %v745, -2.0
        %v875 = vmax.f32 %v748, -2.0
        %v876 = vmax.f32 %v751, -2.0
        %v877 = vmax.f32 %v754, -2.0
        %v878 = vmax.f32 %v757, -2.0
        %v879 = vmax.f32 %v760, -2.0
        %v880 = vmax.f32 %v763, -2.0
        %v881 = vmax.f32 %v766, -2.0
        %v882 = vmax.f32 %v769, -2.0
        %v883 = vmax.f32 %v772, -2.0
        %v884 = vmax.f32 %v775, -2.0
        %v885 = vmax.f32 %v778, -2.0
        %v886 = vmax.f32 %v781, -2.0
        %v887 = vmax.f32 %v784, -2.0
        %v888 = vmax.f32 %v787, -2.0
        %v889 = vmax.f32 %v790, -2.0
        %v890 = vmax.f32 %v793, -2.0
        %v891 = vmax.f32 %v796, -2.0
        %v892 = vmax.f32 %v799, -2.0
        %v893 = vmax.f32 %v802, -2.0
        %v894 = vmax.f32 %v805, -2.0
        %v895 = vmax.f32 %v808, -2.0
        %v896 = vmax.f32 %v811, -2.0
        %v897 = vmax.f32 %v814, -2.0
        %v898 = vmax.f32 %v817, -2.0
        %v899 = vmax.f32 %v820, -2.0
        %v900 = vmax.f32 %v823, -2.0
        %v901 = vmax.f32 %v826, -2.0
        %v902 = vmax.f32 %v829, -2.0
        %v903 = vmax.f32 %v832, -2.0
        %v904 = vmax.f32 %v835, -2.0
        %v905 = vmax.f32 %v838, -2.0
        %v906 = vmax.f32 %v841, -2.0
        %v907 = vmin.f32 %v843, 4.0
        %v908 = vmin.f32 %v844, 4.0
        %v909 = vmin.f32 %v845, 4.0
        %v910 = vmin.f32 %v846, 4.0
        %v911 = vmin.f32 %v847, 4.0
        %v912 = vmin.f32 %v848, 4.0
        %v913 = vmin.f32 %v849, 4.0
        %v914 = vmin.f32 %v850, 4.0
        %v915 = vmin.f32 %v851, 4.0
        %v916 = vmin.f32 %v852, 4.0
        %v917 = vmin.f32 %v853, 4.0
        %v918 = vmin.f32 %v854, 4.0
        %v919 = vmin.f32 %v855, 4.0
        %v920 = vmin.f32 %v856, 4.0
        %v921 = vmin.f32 %v857, 4.0
        %v922 = vmin.f32 %v858, 4.0
        %v923 = vmin.f32 %v859, 4.0
        %v924 = vmin.f32 %v860, 4.0
        %v925 = vmin.f32 %v861, 4.0
        %v926 = vmin.f32 %v862, 4.0
        %v927 = vmin.f32 %v863, 4.0
        %v928 = vmin.f32 %v864, 4.0
        %v929 = vmin.f32 %v865, 4.0
        %v930 = vmin.f32 %v866, 4.0
        %v931 = vmin.f32 %v867, 4.0
        %v932 = vmin.f32 %v868, 4.0
        %v933 = vmin.f32 %v869, 4.0
        %v934 = vmin.f32 %v870, 4.0
        %v935 = vmin.f32 %v871, 4.0
        %v936 = vmin.f32 %v872, 4.0
        %v937 = vmin.f32 %v873, 4.0
        %v938 = vmin.f32 %v874, 4.0
        %v939 = vmin.f32 %v875, 4.0
        %v940 = vmin.f32 %v876, 4.0
        %v941 = vmin.f32 %v877, 4.0
        %v942 = vmin.f32 %v878, 4.0
        %v943 = vmin.f32 %v879, 4.0
        %v944 = vmin.f32 %v880, 4.0
        %v945 = vmin.f32 %v881, 4.0
        %v946 = vmin.f32 %v882, 4.0
        %v947 = vmin.f32 %v883, 4.0
        %v948 = vmin.f32 %v884, 4.0
        %v949 = vmin.f32 %v885, 4.0
        %v950 = vmin.f32 %v886, 4.0
        %v951 = vmin.f32 %v887, 4.0
        %v952 = vmin.f32 %v888, 4.0
        %v953 = vmin.f32 %v889, 4.0
        %v954 = vmin.f32 %v890, 4.0
        %v955 = vmin.f32 %v891, 4.0
        %v956 = vmin.f32 %v892, 4.0
        %v957 = vmin.f32 %v893, 4.0
        %v958 = vmin.f32 %v894, 4.0
        %v959 = vmin.f32 %v895, 4.0
        %v960 = vmin.f32 %v896, 4.0
        %v961 = vmin.f32 %v897, 4.0
        %v962 = vmin.f32 %v898, 4.0
        %v963 = vmin.f32 %v899, 4.0
        %v964 = vmin.f32 %v900, 4.0
        %v965 = vmin.f32 %v901, 4.0
        %v966 = vmin.f32 %v902, 4.0
        %v967 = vmin.f32 %v903, 4.0
        %v968 = vmin.f32 %v904, 4.0
        %v969 = vmin.f32 %v905, 4.0
        %v970 = vmin.f32 %v906, 4.0
        %v971 = vsub.f32 1.0, %v907
        %v972 = vsub.f32 1.0, %v908
        %v973 = vsub.f32 1.0, %v909
        %v974 = vsub.f32 1.0, %v910
        %v975 = vsub.f32 1.0, %v911
        %v976 = vsub.f32 1.0, %v912
        %v977 = vsub.f32 1.0, %v913
        %v978 = vsub.f32 1.0, %v914
        %v979 = vsub.f32 1.0, %v915
        %v980 = vsub.f32 1.0, %v916
        %v981 = vsub.f32 1.0, %v917
        %v982 = vsub.f32 1.0, %v918
        %v983 = vsub.f32 1.0, %v919
        %v984 = vsub.f32 1.0, %v920
        %v985 = vsub.f32 1.0, %v921
        %v986 = vsub.f32 1.0, %v922
        %v987 = vsub.f32 1.0, %v923
        %v988 = vsub.f32 1.0, %v924
        %v989 = vsub.f32 1.0, %v925
        %v990 = vsub.f32 1.0, %v926
        %v991 = vsub.f32 1.0, %v927
        %v992 = vsub.f32 1.0, %v928
        %v993 = vsub.f32 1.0, %v929
        %v994 = vsub.f32 1.0, %v930
        %v995 = vsub.f32 1.0, %v931
        %v996 = vsub.f32 1.0, %v932
        %v997 = vsub.f32 1.0, %v933
        %v998 = vsub.f32 1.0, %v934
        %v999 = vsub.f32 1.0, %v935
        %v1000 = vsub.f32 1.0, %v936
        %v1001 = vsub.f32 1.0, %v937
        %v1002 = vsub.f32 1.0, %v938
        %v1003 = vsub.f32 1.0, %v939
        %v1004 = vsub.f32 1.0, %v940
        %v1005 = vsub.f32 1.0, %v941
        %v1006 = vsub.f32 1.0, %v942
        %v1007 = vsub.f32 1.0, %v943
        %v1008 = vsub.f32 1.0, %v944
        %v1009 = vsub.f32 1.0, %v945
        %v1010 = vsub.f32 1.0, %v946
        %v1011 = vsub.f32 1.0, %v947
        %v1012 = vsub.f32 1.0, %v948
        %v1013 = vsub.f32 1.0, %v949
        %v1014 = vsub.f32 1.0, %v950
        %v1015 = vsub.f32 1.0, %v951
        %v1016 = vsub.f32 1.0, %v952
        %v1017 = vsub.f32 1.0, %v953
        %v1018 = vsub.f32 1.0, %v954
        %v1019 = vsub.f32 1.0, %v955
        %v1020 = vsub.f32 1.0, %v956
        %v1021 = vsub.f32 1.0, %v957
        %v1022 = vsub.f32 1.0, %v958
        %v1023 = vsub.f32 1.0, %v959
        %v1024 = vsub.f32 1.0, %v960
        %v1025 = vsub.f32 1.0, %v961
        %v1026 = vsub.f32 1.0, %v962
        %v1027 = vsub.f32 1.0, %v963
        %v1028 = vsub.f32 1.0, %v964
        %v1029 = vsub.f32 1.0, %v965
        %v1030 = vsub.f32 1.0, %v966
        %v1031 = vsub.f32 1.0, %v967
        %v1032 = vsub.f32 1.0, %v968
        %v1033 = vsub.f32 1.0, %v969
        %v1034 = vsub.f32 1.0, %v970
        %v1035 = vsub.f32 2.0, %v907
        %v1036 = vsub.f32 2.0, %v908
        %v1037 = vsub.f32 2.0, %v909
        %v1038 = vsub.f32 2.0, %v910
        %v1039 = vsub.f32 2.0, %v911
        %v1040 = vsub.f32 2.0, %v912
        %v1041 = vsub.f32 2.0, %v913
        %v1042 = vsub.f32 2.0, %v914
        %v1043 = vsub.f32 2.0, %v915
        %v1044 = vsub.f32 2.0, %v916
        %v1045 = vsub.f32 2.0, %v917
        %v1046 = vsub.f32 2.0, %v918
        %v1047 = vsub.f32 2.0, %v919
        %v1048 = vsub.f32 2.0, %v920
        %v1049 = vsub.f32 2.0, %v921
        %v1050 = vsub.f32 2.0, %v922
        %v1051 = vsub.f32 2.0, %v923
        %v1052 = vsub.f32 2.0, %v924
        %v1053 = vsub.f32 2.0, %v925
        %v1054 = vsub.f32 2.0, %v926
        %v1055 = vsub.f32 2.0, %v927
        %v1056 = vsub.f32 2.0, %v928
        %v1057 = vsub.f32 2.0, %v929
        %v1058 = vsub.f32 2.0, %v930
        %v1059 = vsub.f32 2.0, %v931
        %v1060 = vsub.f32 2.0, %v932
        %v1061 = vsub.f32 2.0, %v933
        %v1062 = vsub.f32 2.0, %v934
        %v1063 = vsub.f32 2.0, %v935
        %v1064 = vsub.f32 2.0, %v936
        %v1065 = vsub.f32 2.0, %v937
        %v1066 = vsub.f32 2.0, %v938
        %v1067 = vsub.f32 2.0, %v939
        %v1068 = vsub.f32 2.0, %v940
        %v1069 = vsub.f32 2.0, %v941
        %v1070 = vsub.f32 2.0, %v942
        %v1071 = vsub.f32 2.0, %v943
        %v1072 = vsub.f32 2.0, %v944
        %v1073 = vsub.f32 2.0, %v945
        %v1074 = vsub.f32 2.0, %v946
        %v1075 = vsub.f32 2.0, %v947
        %v1076 = vsub.f32 2.0, %v948
        %v1077 = vsub.f32 2.0, %v949
        %v1078 = vsub.f32 2.0, %v950
        %v1079 = vsub.f32 2.0, %v951
        %v1080 = vsub.f32 2.0, %v952
        %v1081 = vsub.f32 2.0, %v953
        %v1082 = vsub.f32 2.0, %v954
        %v1083 = vsub.f32 2.0, %v955
        %v1084 = vsub.f32 2.0, %v956
        %v1085 = vsub.f32 2.0, %v957
        %v1086 = vsub.f32 2.0, %v958
        %v1087 = vsub.f32 2.0, %v959
        %v1088 = vsub.f32 2.0, %v960
        %v1089 = vsub.f32 2.0, %v961
        %v1090 = vsub.f32 2.0, %v962
        %v1091 = vsub.f32 2.0, %v963
        %v1092 = vsub.f32 2.0, %v964
        %v1093 = vsub.f32 2.0, %v965
        %v1094 = vsub.f32 2.0, %v966
        %v1095 = vsub.f32 2.0, %v967
        %v1096 = vsub.f32 2.0, %v968
        %v1097 = vsub.f32 2.0, %v969
        %v1098 = vsub.f32 2.0, %v970
        %v1099 = vsub.f32 0.0, %v1035
        %v1100 = vsub.f32 0.0, %v1036
        %v1101 = vsub.f32 0.0, %v1037
        %v1102 = vsub.f32 0.0, %v1038
        %v1103 = vsub.f32 0.0, %v1039
        %v1104 = vsub.f32 0.0, %v1040
        %v1105 = vsub.f32 0.0, %v1041
        %v1106 = vsub.f32 0.0, %v1042
        %v1107 = vsub.f32 0.0, %v1043
        %v1108 = vsub.f32 0.0, %v1044
        %v1109 = vsub.f32 0.0, %v1045
        %v1110 = vsub.f32 0.0, %v1046
        %v1111 = vsub.f32 0.0, %v1047
        %v1112 = vsub.f32 0.0, %v1048
        %v1113 = vsub.f32 0.0, %v1049
        %v1114 = vsub.f32 0.0, %v1050
        %v1115 = vsub.f32 0.0, %v1051
        %v1116 = vsub.f32 0.0, %v1052
        %v1117 = vsub.f32 0.0, %v1053
        %v1118 = vsub.f32 0.0, %v1054
        %v1119 = vsub.f32 0.0, %v1055
        %v1120 = vsub.f32 0.0, %v1056
        %v1121 = vsub.f32 0.0, %v1057
        %v1122 = vsub.f32 0.0, %v1058
        %v1123 = vsub.f32 0.0, %v1059
        %v1124 = vsub.f32 0.0, %v1060
        %v1125 = vsub.f32 0.0, %v1061
        %v1126 = vsub.f32 0.0, %v1062
        %v1127 = vsub.f32 0.0, %v1063
        %v1128 = vsub.f32 0.0, %v1064
        %v1129 = vsub.f32 0.0, %v1065
        %v1130 = vsub.f32 0.0, %v1066
        %v1131 = vsub.f32 0.0, %v1067
        %v1132 = vsub.f32 0.0, %v1068
        %v1133 = vsub.f32 0.0, %v1069
        %v1134 = vsub.f32 0.0, %v1070
        %v1135 = vsub.f32 0.0, %v1071
        %v1136 = vsub.f32 0.0, %v1072
        %v1137 = vsub.f32 0.0, %v1073
        %v1138 = vsub.f32 0.0, %v1074
        %v1139 = vsub.f32 0.0, %v1075
        %v1140 = vsub.f32 0.0, %v1076
        %v1141 = vsub.f32 0.0, %v1077
        %v1142 = vsub.f32 0.0, %v1078
        %v1143 = vsub.f32 0.0, %v1079
        %v1144 = vsub.f32 0.0, %v1080
        %v1145 = vsub.f32 0.0, %v1081
        %v1146 = vsub.f32 0.0, %v1082
        %v1147 = vsub.f32 0.0, %v1083
        %v1148 = vsub.f32 0.0, %v1084
        %v1149 = vsub.f32 0.0, %v1085
        %v1150 = vsub.f32 0.0, %v1086
        %v1151 = vsub.f32 0.0, %v1087
        %v1152 = vsub.f32 0.0, %v1088
        %v1153 = vsub.f32 0.0, %v1089
        %v1154 = vsub.f32 0.0, %v1090
        %v1155 = vsub.f32 0.0, %v1091
        %v1156 = vsub.f32 0.0, %v1092
        %v1157 = vsub.f32 0.0, %v1093
        %v1158 = vsub.f32 0.0, %v1094
        %v1159 = vsub.f32 0.0, %v1095
        %v1160 = vsub.f32 0.0, %v1096
        %v1161 = vsub.f32 0.0, %v1097
        %v1162 = vsub.f32 0.0, %v1098
        %v1163 = vsub.f32 0.0, %v971
        %v1164 = vsub.f32 0.0, %v972
        %v1165 = vsub.f32 0.0, %v973
        %v1166 = vsub.f32 0.0, %v974
        %v1167 = vsub.f32 0.0, %v975
        %v1168 = vsub.f32 0.0, %v976
        %v1169 = vsub.f32 0.0, %v977
        %v1170 = vsub.f32 0.0, %v978
        %v1171 = vsub.f32 0.0, %v979
        %v1172 = vsub.f32 0.0, %v980
        %v1173 = vsub.f32 0.0, %v981
        %v1174 = vsub.f32 0.0, %v982
        %v1175 = vsub.f32 0.0, %v983
        %v1176 = vsub.f32 0.0, %v984
        %v1177 = vsub.f32 0.0, %v985
        %v1178 = vsub.f32 0.0, %v986
        %v1179 = vsub.f32 0.0, %v987
        %v1180 = vsub.f32 0.0, %v988
        %v1181 = vsub.f32 0.0, %v989
        %v1182 = vsub.f32 0.0, %v990
        %v1183 = vsub.f32 0.0, %v991
        %v1184 = vsub.f32 0.0, %v992
        %v1185 = vsub.f32 0.0, %v993
        %v1186 = vsub.f32 0.0, %v994
        %v1187 = vsub.f32 0.0, %v995
        %v1188 = vsub.f32 0.0, %v996
        %v1189 = vsub.f32 0.0, %v997
        %v1190 = vsub.f32 0.0, %v998
        %v1191 = vsub.f32 0.0, %v999
        %v1192 = vsub.f32 0.0, %v1000
        %v1193 = vsub.f32 0.0, %v1001
        %v1194 = vsub.f32 0.0, %v1002
        %v1195 = vsub.f32 0.0, %v1003
        %v1196 = vsub.f32 0.0, %v1004
        %v1197 = vsub.f32 0.0, %v1005
        %v1198 = vsub.f32 0.0, %v1006
        %v1199 = vsub.f32 0.0, %v1007
        %v1200 = vsub.f32 0.0, %v1008
        %v1201 = vsub.f32 0.0, %v1009
        %v1202 = vsub.f32 0.0, %v1010
        %v1203 = vsub.f32 0.0, %v1011
        %v1204 = vsub.f32 0.0, %v1012
        %v1205 = vsub.f32 0.0, %v1013
        %v1206 = vsub.f32 0.0, %v1014
        %v1207 = vsub.f32 0.0, %v1015
        %v1208 = vsub.f32 0.0, %v1016
        %v1209 = vsub.f32 0.0, %v1017
        %v1210 = vsub.f32 0.0, %v1018
        %v1211 = vsub.f32 0.0, %v1019
        %v1212 = vsub.f32 0.0, %v1020
        %v1213 = vsub.f32 0.0, %v1021
        %v1214 = vsub.f32 0.0, %v1022
        %v1215 = vsub.f32 0.0, %v1023
        %v1216 = vsub.f32 0.0, %v1024
        %v1217 = vsub.f32 0.0, %v1025
        %v1218 = vsub.f32 0.0, %v1026
        %v1219 = vsub.f32 0.0, %v1027
        %v1220 = vsub.f32 0.0, %v1028
        %v1221 = vsub.f32 0.0, %v1029
        %v1222 = vsub.f32 0.0, %v1030
        %v1223 = vsub.f32 0.0, %v1031
        %v1224 = vsub.f32 0.0, %v1032
        %v1225 = vsub.f32 0.0, %v1033
        %v1226 = vsub.f32 0.0, %v1034
        %v1227 = vmin.f32 %v1163, %v1035
        %v1228 = vmin.f32 %v1164, %v1036
        %v1229 = vmin.f32 %v1165, %v1037
        %v1230 = vmin.f32 %v1166, %v1038
        %v1231 = vmin.f32 %v1167, %v1039
        %v1232 = vmin.f32 %v1168, %v1040
        %v1233 = vmin.f32 %v1169, %v1041
        %v1234 = vmin.f32 %v1170, %v1042
        %v1235 = vmin.f32 %v1171, %v1043
        %v1236 = vmin.f32 %v1172, %v1044
        %v1237 = vmin.f32 %v1173, %v1045
        %v1238 = vmin.f32 %v1174, %v1046
        %v1239 = vmin.f32 %v1175, %v1047
        %v1240 = vmin.f32 %v1176, %v1048
        %v1241 = vmin.f32 %v1177, %v1049
        %v1242 = vmin.f32 %v1178, %v1050
        %v1243 = vmin.f32 %v1179, %v1051
        %v1244 = vmin.f32 %v1180, %v1052
        %v1245 = vmin.f32 %v1181, %v1053
        %v1246 = vmin.f32 %v1182, %v1054
        %v1247 = vmin.f32 %v1183, %v1055
        %v1248 = vmin.f32 %v1184, %v1056
        %v1249 = vmin.f32 %v1185, %v1057
        %v1250 = vmin.f32 %v1186, %v1058
        %v1251 = vmin.f32 %v1187, %v1059
        %v1252 = vmin.f32 %v1188, %v1060
        %v1253 = vmin.f32 %v1189, %v1061
        %v1254 = vmin.f32 %v1190, %v1062
        %v1255 = vmin.f32 %v1191, %v1063
        %v1256 = vmin.f32 %v1192, %v1064
        %v1257 = vmin.f32 %v1193, %v1065
        %v1258 = vmin.f32 %v1194, %v1066
        %v1259 = vmin.f32 %v1195, %v1067
        %v1260 = vmin.f32 %v1196, %v1068
        %v1261 = vmin.f32 %v1197, %v1069
        %v1262 = vmin.f32 %v1198, %v1070
        %v1263 = vmin.f32 %v1199, %v1071
        %v1264 = vmin.f32 %v1200, %v1072
        %v1265 = vmin.f32 %v1201, %v1073
        %v1266 = vmin.f32 %v1202, %v1074
        %v1267 = vmin.f32 %v1203, %v1075
        %v1268 = vmin.f32 %v1204, %v1076
        %v1269 = vmin.f32 %v1205, %v1077
        %v1270 = vmin.f32 %v1206, %v1078
        %v1271 = vmin.f32 %v1207, %v1079
        %v1272 = vmin.f32 %v1208, %v1080
        %v1273 = vmin.f32 %v1209, %v1081
        %v1274 = vmin.f32 %v1210, %v1082
        %v1275 = vmin.f32 %v1211, %v1083
        %v1276 = vmin.f32 %v1212, %v1084
        %v1277 = vmin.f32 %v1213, %v1085
        %v1278 = vmin.f32 %v1214, %v1086
        %v1279 = vmin.f32 %v1215, %v1087
        %v1280 = vmin.f32 %v1216, %v1088
        %v1281 = vmin.f32 %v1217, %v1089
        %v1282 = vmin.f32 %v1218, %v1090
        %v1283 = vmin.f32 %v1219, %v1091
        %v1284 = vmin.f32 %v1220, %v1092
        %v1285 = vmin.f32 %v1221, %v1093
        %v1286 = vmin.f32 %v1222, %v1094
        %v1287 = vmin.f32 %v1223, %v1095
        %v1288 = vmin.f32 %v1224, %v1096
        %v1289 = vmin.f32 %v1225, %v1097
        %v1290 = vmin.f32 %v1226, %v1098
        %v1291 = vmax.f32 %v1099, %v1227
        %v1292 = vmax.f32 %v1100, %v1228
        %v1293 = vmax.f32 %v1101, %v1229
        %v1294 = vmax.f32 %v1102, %v1230
        %v1295 = vmax.f32 %v1103, %v1231
        %v1296 = vmax.f32 %v1104, %v1232
        %v1297 = vmax.f32 %v1105, %v1233
        %v1298 = vmax.f32 %v1106, %v1234
        %v1299 = vmax.f32 %v1107, %v1235
        %v1300 = vmax.f32 %v1108, %v1236
        %v1301 = vmax.f32 %v1109, %v1237
        %v1302 = vmax.f32 %v1110, %v1238
        %v1303 = vmax.f32 %v1111, %v1239
        %v1304 = vmax.f32 %v1112, %v1240
        %v1305 = vmax.f32 %v1113, %v1241
        %v1306 = vmax.f32 %v1114, %v1242
        %v1307 = vmax.f32 %v1115, %v1243
        %v1308 = vmax.f32 %v1116, %v1244
        %v1309 = vmax.f32 %v1117, %v1245
        %v1310 = vmax.f32 %v1118, %v1246
        %v1311 = vmax.f32 %v1119, %v1247
        %v1312 = vmax.f32 %v1120, %v1248
        %v1313 = vmax.f32 %v1121, %v1249
        %v1314 = vmax.f32 %v1122, %v1250
        %v1315 = vmax.f32 %v1123, %v1251
        %v1316 = vmax.f32 %v1124, %v1252
        %v1317 = vmax.f32 %v1125, %v1253
        %v1318 = vmax.f32 %v1126, %v1254
        %v1319 = vmax.f32 %v1127, %v1255
        %v1320 = vmax.f32 %v1128, %v1256
        %v1321 = vmax.f32 %v1129, %v1257
        %v1322 = vmax.f32 %v1130, %v1258
        %v1323 = vmax.f32 %v1131, %v1259
        %v1324 = vmax.f32 %v1132, %v1260
        %v1325 = vmax.f32 %v1133, %v1261
        %v1326 = vmax.f32 %v1134, %v1262
        %v1327 = vmax.f32 %v1135, %v1263
        %v1328 = vmax.f32 %v1136, %v1264
        %v1329 = vmax.f32 %v1137, %v1265
        %v1330 = vmax.f32 %v1138, %v1266
        %v1331 = vmax.f32 %v1139, %v1267
        %v1332 = vmax.f32 %v1140, %v1268
        %v1333 = vmax.f32 %v1141, %v1269
        %v1334 = vmax.f32 %v1142, %v1270
        %v1335 = vmax.f32 %v1143, %v1271
        %v1336 = vmax.f32 %v1144, %v1272
        %v1337 = vmax.f32 %v1145, %v1273
        %v1338 = vmax.f32 %v1146, %v1274
        %v1339 = vmax.f32 %v1147, %v1275
        %v1340 = vmax.f32 %v1148, %v1276
        %v1341 = vmax.f32 %v1149, %v1277
        %v1342 = vmax.f32 %v1150, %v1278
        %v1343 = vmax.f32 %v1151, %v1279
        %v1344 = vmax.f32 %v1152, %v1280
        %v1345 = vmax.f32 %v1153, %v1281
        %v1346 = vmax.f32 %v1154, %v1282
        %v1347 = vmax.f32 %v1155, %v1283
        %v1348 = vmax.f32 %v1156, %v1284
        %v1349 = vmax.f32 %v1157, %v1285
        %v1350 = vmax.f32 %v1158, %v1286
        %v1351 = vmax.f32 %v1159, %v1287
        %v1352 = vmax.f32 %v1160, %v1288
        %v1353 = vmax.f32 %v1161, %v1289
        %v1354 = vmax.f32 %v1162, %v1290
        %v1355 = vmax.f32 %v1291, %v971
        %v1356 = vmax.f32 %v1292, %v972
        %v1357 = vmax.f32 %v1293, %v973
        %v1358 = vmax.f32 %v1294, %v974
        %v1359 = vmax.f32 %v1295, %v975
        %v1360 = vmax.f32 %v1296, %v976
        %v1361 = vmax.f32 %v1297, %v977
        %v1362 = vmax.f32 %v1298, %v978
        %v1363 = vmax.f32 %v1299, %v979
        %v1364 = vmax.f32 %v1300, %v980
        %v1365 = vmax.f32 %v1301, %v981
        %v1366 = vmax.f32 %v1302, %v982
        %v1367 = vmax.f32 %v1303, %v983
        %v1368 = vmax.f32 %v1304, %v984
        %v1369 = vmax.f32 %v1305, %v985
        %v1370 = vmax.f32 %v1306, %v986
        %v1371 = vmax.f32 %v1307, %v987
        %v1372 = vmax.f32 %v1308, %v988
        %v1373 = vmax.f32 %v1309, %v989
        %v1374 = vmax.f32 %v1310, %v990
        %v1375 = vmax.f32 %v1311, %v991
        %v1376 = vmax.f32 %v1312, %v992
        %v1377 = vmax.f32 %v1313, %v993
        %v1378 = vmax.f32 %v1314, %v994
        %v1379 = vmax.f32 %v1315, %v995
        %v1380 = vmax.f32 %v1316, %v996
        %v1381 = vmax.f32 %v1317, %v997
        %v1382 = vmax.f32 %v1318, %v998
        %v1383 = vmax.f32 %v1319, %v999
        %v1384 = vmax.f32 %v1320, %v1000
        %v1385 = vmax.f32 %v1321, %v1001
        %v1386 = vmax.f32 %v1322, %v1002
        %v1387 = vmax.f32 %v1323, %v1003
        %v1388 = vmax.f32 %v1324, %v1004
        %v1389 = vmax.f32 %v1325, %v1005
        %v1390 = vmax.f32 %v1326, %v1006
        %v1391 = vmax.f32 %v1327, %v1007
        %v1392 = vmax.f32 %v1328, %v1008
        %v1393 = vmax.f32 %v1329, %v1009
        %v1394 = vmax.f32 %v1330, %v1010
        %v1395 = vmax.f32 %v1331, %v1011
        %v1396 = vmax.f32 %v1332, %v1012
        %v1397 = vmax.f32 %v1333, %v1013
        %v1398 = vmax.f32 %v1334, %v1014
        %v1399 = vmax.f32 %v1335, %v1015
        %v1400 = vmax.f32 %v1336, %v1016
        %v1401 = vmax.f32 %v1337, %v1017
        %v1402 = vmax.f32 %v1338, %v1018
        %v1403 = vmax.f32 %v1339, %v1019
        %v1404 = vmax.f32 %v1340, %v1020
        %v1405 = vmax.f32 %v1341, %v1021
        %v1406 = vmax.f32 %v1342, %v1022
        %v1407 = vmax.f32 %v1343, %v1023
        %v1408 = vmax.f32 %v1344, %v1024
        %v1409 = vmax.f32 %v1345, %v1025
        %v1410 = vmax.f32 %v1346, %v1026
        %v1411 = vmax.f32 %v1347, %v1027
        %v1412 = vmax.f32 %v1348, %v1028
        %v1413 = vmax.f32 %v1349, %v1029
        %v1414 = vmax.f32 %v1350, %v1030
        %v1415 = vmax.f32 %v1351, %v1031
        %v1416 = vmax.f32 %v1352, %v1032
        %v1417 = vmax.f32 %v1353, %v1033
        %v1418 = vmax.f32 %v1354, %v1034
        %v1419 = vsub.f32 %v1099, %v1355
        %v1420 = vsub.f32 %v1100, %v1356
        %v1421 = vsub.f32 %v1101, %v1357
        %v1422 = vsub.f32 %v1102, %v1358
        %v1423 = vsub.f32 %v1103, %v1359
        %v1424 = vsub.f32 %v1104, %v1360
        %v1425 = vsub.f32 %v1105, %v1361
        %v1426 = vsub.f32 %v1106, %v1362
        %v1427 = vsub.f32 %v1107, %v1363
        %v1428 = vsub.f32 %v1108, %v1364
        %v1429 = vsub.f32 %v1109, %v1365
        %v1430 = vsub.f32 %v1110, %v1366
        %v1431 = vsub.f32 %v1111, %v1367
        %v1432 = vsub.f32 %v1112, %v1368
        %v1433 = vsub.f32 %v1113, %v1369
        %v1434 = vsub.f32 %v1114, %v1370
        %v1435 = vsub.f32 %v1115, %v1371
        %v1436 = vsub.f32 %v1116, %v1372
        %v1437 = vsub.f32 %v1117, %v1373
        %v1438 = vsub.f32 %v1118, %v1374
        %v1439 = vsub.f32 %v1119, %v1375
        %v1440 = vsub.f32 %v1120, %v1376
        %v1441 = vsub.f32 %v1121, %v1377
        %v1442 = vsub.f32 %v1122, %v1378
        %v1443 = vsub.f32 %v1123, %v1379
        %v1444 = vsub.f32 %v1124, %v1380
        %v1445 = vsub.f32 %v1125, %v1381
        %v1446 = vsub.f32 %v1126, %v1382
        %v1447 = vsub.f32 %v1127, %v1383
        %v1448 = vsub.f32 %v1128, %v1384
        %v1449 = vsub.f32 %v1129, %v1385
        %v1450 = vsub.f32 %v1130, %v1386
        %v1451 = vsub.f32 %v1131, %v1387
        %v1452 = vsub.f32 %v1132, %v1388
        %v1453 = vsub.f32 %v1133, %v1389
        %v1454 = vsub.f32 %v1134, %v1390
        %v1455 = vsub.f32 %v1135, %v1391
        %v1456 = vsub.f32 %v1136, %v1392
        %v1457 = vsub.f32 %v1137, %v1393
        %v1458 = vsub.f32 %v1138, %v1394
        %v1459 = vsub.f32 %v1139, %v1395
        %v1460 = vsub.f32 %v1140, %v1396
        %v1461 = vsub.f32 %v1141, %v1397
        %v1462 = vsub.f32 %v1142, %v1398
        %v1463 = vsub.f32 %v1143, %v1399
        %v1464 = vsub.f32 %v1144, %v1400
        %v1465 = vsub.f32 %v1145, %v1401
        %v1466 = vsub.f32 %v1146, %v1402
        %v1467 = vsub.f32 %v1147, %v1403
        %v1468 = vsub.f32 %v1148, %v1404
        %v1469 = vsub.f32 %v1149, %v1405
        %v1470 = vsub.f32 %v1150, %v1406
        %v1471 = vsub.f32 %v1151, %v1407
        %v1472 = vsub.f32 %v1152, %v1408
        %v1473 = vsub.f32 %v1153, %v1409
        %v1474 = vsub.f32 %v1154, %v1410
        %v1475 = vsub.f32 %v1155, %v1411
        %v1476 = vsub.f32 %v1156, %v1412
        %v1477 = vsub.f32 %v1157, %v1413
        %v1478 = vsub.f32 %v1158, %v1414
        %v1479 = vsub.f32 %v1159, %v1415
        %v1480 = vsub.f32 %v1160, %v1416
        %v1481 = vsub.f32 %v1161, %v1417
        %v1482 = vsub.f32 %v1162, %v1418
        %v1483 = vmul.f32 %v1419, 1.442695
        %v1484 = vpow.pop %v1483
        %v1485 = vmul.f32 %v1420, 1.442695
        %v1486 = vpow.pop %v1485
        %v1487 = vmul.f32 %v1421, 1.442695
        %v1488 = vpow.pop %v1487
        %v1489 = vmul.f32 %v1422, 1.442695
        %v1490 = vpow.pop %v1489
        %v1491 = vmul.f32 %v1423, 1.442695
        %v1492 = vpow.pop %v1491
        %v1493 = vmul.f32 %v1424, 1.442695
        %v1494 = vpow.pop %v1493
        %v1495 = vmul.f32 %v1425, 1.442695
        %v1496 = vpow.pop %v1495
        %v1497 = vmul.f32 %v1426, 1.442695
        %v1498 = vpow.pop %v1497
        %v1499 = vmul.f32 %v1427, 1.442695
        %v1500 = vpow.pop %v1499
        %v1501 = vmul.f32 %v1428, 1.442695
        %v1502 = vpow.pop %v1501
        %v1503 = vmul.f32 %v1429, 1.442695
        %v1504 = vpow.pop %v1503
        %v1505 = vmul.f32 %v1430, 1.442695
        %v1506 = vpow.pop %v1505
        %v1507 = vmul.f32 %v1431, 1.442695
        %v1508 = vpow.pop %v1507
        %v1509 = vmul.f32 %v1432, 1.442695
        %v1510 = vpow.pop %v1509
        %v1511 = vmul.f32 %v1433, 1.442695
        %v1512 = vpow.pop %v1511
        %v1513 = vmul.f32 %v1434, 1.442695
        %v1514 = vpow.pop %v1513
        %v1515 = vmul.f32 %v1435, 1.442695
        %v1516 = vpow.pop %v1515
        %v1517 = vmul.f32 %v1436, 1.442695
        %v1518 = vpow.pop %v1517
        %v1519 = vmul.f32 %v1437, 1.442695
        %v1520 = vpow.pop %v1519
        %v1521 = vmul.f32 %v1438, 1.442695
        %v1522 = vpow.pop %v1521
        %v1523 = vmul.f32 %v1439, 1.442695
        %v1524 = vpow.pop %v1523
        %v1525 = vmul.f32 %v1440, 1.442695
        %v1526 = vpow.pop %v1525
        %v1527 = vmul.f32 %v1441, 1.442695
        %v1528 = vpow.pop %v1527
        %v1529 = vmul.f32 %v1442, 1.442695
        %v1530 = vpow.pop %v1529
        %v1531 = vmul.f32 %v1443, 1.442695
        %v1532 = vpow.pop %v1531
        %v1533 = vmul.f32 %v1444, 1.442695
        %v1534 = vpow.pop %v1533
        %v1535 = vmul.f32 %v1445, 1.442695
        %v1536 = vpow.pop %v1535
        %v1537 = vmul.f32 %v1446, 1.442695
        %v1538 = vpow.pop %v1537
        %v1539 = vmul.f32 %v1447, 1.442695
        %v1540 = vpow.pop %v1539
        %v1541 = vmul.f32 %v1448, 1.442695
        %v1542 = vpow.pop %v1541
        %v1543 = vmul.f32 %v1449, 1.442695
        %v1544 = vpow.pop %v1543
        %v1545 = vmul.f32 %v1450, 1.442695
        %v1546 = vpow.pop %v1545
        %v1547 = vmul.f32 %v1451, 1.442695
        %v1548 = vpow.pop %v1547
        %v1549 = vmul.f32 %v1452, 1.442695
        %v1550 = vpow.pop %v1549
        %v1551 = vmul.f32 %v1453, 1.442695
        %v1552 = vpow.pop %v1551
        %v1553 = vmul.f32 %v1454, 1.442695
        %v1554 = vpow.pop %v1553
        %v1555 = vmul.f32 %v1455, 1.442695
        %v1556 = vpow.pop %v1555
        %v1557 = vmul.f32 %v1456, 1.442695
        %v1558 = vpow.pop %v1557
        %v1559 = vmul.f32 %v1457, 1.442695
        %v1560 = vpow.pop %v1559
        %v1561 = vmul.f32 %v1458, 1.442695
        %v1562 = vpow.pop %v1561
        %v1563 = vmul.f32 %v1459, 1.442695
        %v1564 = vpow.pop %v1563
        %v1565 = vmul.f32 %v1460, 1.442695
        %v1566 = vpow.pop %v1565
        %v1567 = vmul.f32 %v1461, 1.442695
        %v1568 = vpow.pop %v1567
        %v1569 = vmul.f32 %v1462, 1.442695
        %v1570 = vpow.pop %v1569
        %v1571 = vmul.f32 %v1463, 1.442695
        %v1572 = vpow.pop %v1571
        %v1573 = vmul.f32 %v1464, 1.442695
        %v1574 = vpow.pop %v1573
        %v1575 = vmul.f32 %v1465, 1.442695
        %v1576 = vpow.pop %v1575
        %v1577 = vmul.f32 %v1466, 1.442695
        %v1578 = vpow.pop %v1577
        %v1579 = vmul.f32 %v1467, 1.442695
        %v1580 = vpow.pop %v1579
        %v1581 = vmul.f32 %v1468, 1.442695
        %v1582 = vpow.pop %v1581
        %v1583 = vmul.f32 %v1469, 1.442695
        %v1584 = vpow.pop %v1583
        %v1585 = vmul.f32 %v1470, 1.442695
        %v1586 = vpow.pop %v1585
        %v1587 = vmul.f32 %v1471, 1.442695
        %v1588 = vpow.pop %v1587
        %v1589 = vmul.f32 %v1472, 1.442695
        %v1590 = vpow.pop %v1589
        %v1591 = vmul.f32 %v1473, 1.442695
        %v1592 = vpow.pop %v1591
        %v1593 = vmul.f32 %v1474, 1.442695
        %v1594 = vpow.pop %v1593
        %v1595 = vmul.f32 %v1475, 1.442695
        %v1596 = vpow.pop %v1595
        %v1597 = vmul.f32 %v1476, 1.442695
        %v1598 = vpow.pop %v1597
        %v1599 = vmul.f32 %v1477, 1.442695
        %v1600 = vpow.pop %v1599
        %v1601 = vmul.f32 %v1478, 1.442695
        %v1602 = vpow.pop %v1601
        %v1603 = vmul.f32 %v1479, 1.442695
        %v1604 = vpow.pop %v1603
        %v1605 = vmul.f32 %v1480, 1.442695
        %v1606 = vpow.pop %v1605
        %v1607 = vmul.f32 %v1481, 1.442695
        %v1608 = vpow.pop %v1607
        %v1609 = vmul.f32 %v1482, 1.442695
        %v1610 = vpow.pop %v1609
        %v1611 = vsub.f32 %v1227, %v1355
        %v1612 = vsub.f32 %v1228, %v1356
        %v1613 = vsub.f32 %v1229, %v1357
        %v1614 = vsub.f32 %v1230, %v1358
        %v1615 = vsub.f32 %v1231, %v1359
        %v1616 = vsub.f32 %v1232, %v1360
        %v1617 = vsub.f32 %v1233, %v1361
        %v1618 = vsub.f32 %v1234, %v1362
        %v1619 = vsub.f32 %v1235, %v1363
        %v1620 = vsub.f32 %v1236, %v1364
        %v1621 = vsub.f32 %v1237, %v1365
        %v1622 = vsub.f32 %v1238, %v1366
        %v1623 = vsub.f32 %v1239, %v1367
        %v1624 = vsub.f32 %v1240, %v1368
        %v1625 = vsub.f32 %v1241, %v1369
        %v1626 = vsub.f32 %v1242, %v1370
        %v1627 = vsub.f32 %v1243, %v1371
        %v1628 = vsub.f32 %v1244, %v1372
        %v1629 = vsub.f32 %v1245, %v1373
        %v1630 = vsub.f32 %v1246, %v1374
        %v1631 = vsub.f32 %v1247, %v1375
        %v1632 = vsub.f32 %v1248, %v1376
        %v1633 = vsub.f32 %v1249, %v1377
        %v1634 = vsub.f32 %v1250, %v1378
        %v1635 = vsub.f32 %v1251, %v1379
        %v1636 = vsub.f32 %v1252, %v1380
        %v1637 = vsub.f32 %v1253, %v1381
        %v1638 = vsub.f32 %v1254, %v1382
        %v1639 = vsub.f32 %v1255, %v1383
        %v1640 = vsub.f32 %v1256, %v1384
        %v1641 = vsub.f32 %v1257, %v1385
        %v1642 = vsub.f32 %v1258, %v1386
        %v1643 = vsub.f32 %v1259, %v1387
        %v1644 = vsub.f32 %v1260, %v1388
        %v1645 = vsub.f32 %v1261, %v1389
        %v1646 = vsub.f32 %v1262, %v1390
        %v1647 = vsub.f32 %v1263, %v1391
        %v1648 = vsub.f32 %v1264, %v1392
        %v1649 = vsub.f32 %v1265, %v1393
        %v1650 = vsub.f32 %v1266, %v1394
        %v1651 = vsub.f32 %v1267, %v1395
        %v1652 = vsub.f32 %v1268, %v1396
        %v1653 = vsub.f32 %v1269, %v1397
        %v1654 = vsub.f32 %v1270, %v1398
        %v1655 = vsub.f32 %v1271, %v1399
        %v1656 = vsub.f32 %v1272, %v1400
        %v1657 = vsub.f32 %v1273, %v1401
        %v1658 = vsub.f32 %v1274, %v1402
        %v1659 = vsub.f32 %v1275, %v1403
        %v1660 = vsub.f32 %v1276, %v1404
        %v1661 = vsub.f32 %v1277, %v1405
        %v1662 = vsub.f32 %v1278, %v1406
        %v1663 = vsub.f32 %v1279, %v1407
        %v1664 = vsub.f32 %v1280, %v1408
        %v1665 = vsub.f32 %v1281, %v1409
        %v1666 = vsub.f32 %v1282, %v1410
        %v1667 = vsub.f32 %v1283, %v1411
        %v1668 = vsub.f32 %v1284, %v1412
        %v1669 = vsub.f32 %v1285, %v1413
        %v1670 = vsub.f32 %v1286, %v1414
        %v1671 = vsub.f32 %v1287, %v1415
        %v1672 = vsub.f32 %v1288, %v1416
        %v1673 = vsub.f32 %v1289, %v1417
        %v1674 = vsub.f32 %v1290, %v1418
        %v1675 = vmul.f32 %v1611, 1.442695
        %v1676 = vpow.pop %v1675
        %v1677 = vmul.f32 %v1612, 1.442695
        %v1678 = vpow.pop %v1677
        %v1679 = vmul.f32 %v1613, 1.442695
        %v1680 = vpow.pop %v1679
        %v1681 = vmul.f32 %v1614, 1.442695
        %v1682 = vpow.pop %v1681
        %v1683 = vmul.f32 %v1615, 1.442695
        %v1684 = vpow.pop %v1683
        %v1685 = vmul.f32 %v1616, 1.442695
        %v1686 = vpow.pop %v1685
        %v1687 = vmul.f32 %v1617, 1.442695
        %v1688 = vpow.pop %v1687
        %v1689 = vmul.f32 %v1618, 1.442695
        %v1690 = vpow.pop %v1689
        %v1691 = vmul.f32 %v1619, 1.442695
        %v1692 = vpow.pop %v1691
        %v1693 = vmul.f32 %v1620, 1.442695
        %v1694 = vpow.pop %v1693
        %v1695 = vmul.f32 %v1621, 1.442695
        %v1696 = vpow.pop %v1695
        %v1697 = vmul.f32 %v1622, 1.442695
        %v1698 = vpow.pop %v1697
        %v1699 = vmul.f32 %v1623, 1.442695
        %v1700 = vpow.pop %v1699
        %v1701 = vmul.f32 %v1624, 1.442695
        %v1702 = vpow.pop %v1701
        %v1703 = vmul.f32 %v1625, 1.442695
        %v1704 = vpow.pop %v1703
        %v1705 = vmul.f32 %v1626, 1.442695
        %v1706 = vpow.pop %v1705
        %v1707 = vmul.f32 %v1627, 1.442695
        %v1708 = vpow.pop %v1707
        %v1709 = vmul.f32 %v1628, 1.442695
        %v1710 = vpow.pop %v1709
        %v1711 = vmul.f32 %v1629, 1.442695
        %v1712 = vpow.pop %v1711
        %v1713 = vmul.f32 %v1630, 1.442695
        %v1714 = vpow.pop %v1713
        %v1715 = vmul.f32 %v1631, 1.442695
        %v1716 = vpow.pop %v1715
        %v1717 = vmul.f32 %v1632, 1.442695
        %v1718 = vpow.pop %v1717
        %v1719 = vmul.f32 %v1633, 1.442695
        %v1720 = vpow.pop %v1719
        %v1721 = vmul.f32 %v1634, 1.442695
        %v1722 = vpow.pop %v1721
        %v1723 = vmul.f32 %v1635, 1.442695
        %v1724 = vpow.pop %v1723
        %v1725 = vmul.f32 %v1636, 1.442695
        %v1726 = vpow.pop %v1725
        %v1727 = vmul.f32 %v1637, 1.442695
        %v1728 = vpow.pop %v1727
        %v1729 = vmul.f32 %v1638, 1.442695
        %v1730 = vpow.pop %v1729
        %v1731 = vmul.f32 %v1639, 1.442695
        %v1732 = vpow.pop %v1731
        %v1733 = vmul.f32 %v1640, 1.442695
        %v1734 = vpow.pop %v1733
        %v1735 = vmul.f32 %v1641, 1.442695
        %v1736 = vpow.pop %v1735
        %v1737 = vmul.f32 %v1642, 1.442695
        %v1738 = vpow.pop %v1737
        %v1739 = vmul.f32 %v1643, 1.442695
        %v1740 = vpow.pop %v1739
        %v1741 = vmul.f32 %v1644, 1.442695
        %v1742 = vpow.pop %v1741
        %v1743 = vmul.f32 %v1645, 1.442695
        %v1744 = vpow.pop %v1743
        %v1745 = vmul.f32 %v1646, 1.442695
        %v1746 = vpow.pop %v1745
        %v1747 = vmul.f32 %v1647, 1.442695
        %v1748 = vpow.pop %v1747
        %v1749 = vmul.f32 %v1648, 1.442695
        %v1750 = vpow.pop %v1749
        %v1751 = vmul.f32 %v1649, 1.442695
        %v1752 = vpow.pop %v1751
        %v1753 = vmul.f32 %v1650, 1.442695
        %v1754 = vpow.pop %v1753
        %v1755 = vmul.f32 %v1651, 1.442695
        %v1756 = vpow.pop %v1755
        %v1757 = vmul.f32 %v1652, 1.442695
        %v1758 = vpow.pop %v1757
        %v1759 = vmul.f32 %v1653, 1.442695
        %v1760 = vpow.pop %v1759
        %v1761 = vmul.f32 %v1654, 1.442695
        %v1762 = vpow.pop %v1761
        %v1763 = vmul.f32 %v1655, 1.442695
        %v1764 = vpow.pop %v1763
        %v1765 = vmul.f32 %v1656, 1.442695
        %v1766 = vpow.pop %v1765
        %v1767 = vmul.f32 %v1657, 1.442695
        %v1768 = vpow.pop %v1767
        %v1769 = vmul.f32 %v1658, 1.442695
        %v1770 = vpow.pop %v1769
        %v1771 = vmul.f32 %v1659, 1.442695
        %v1772 = vpow.pop %v1771
        %v1773 = vmul.f32 %v1660, 1.442695
        %v1774 = vpow.pop %v1773
        %v1775 = vmul.f32 %v1661, 1.442695
        %v1776 = vpow.pop %v1775
        %v1777 = vmul.f32 %v1662, 1.442695
        %v1778 = vpow.pop %v1777
        %v1779 = vmul.f32 %v1663, 1.442695
        %v1780 = vpow.pop %v1779
        %v1781 = vmul.f32 %v1664, 1.442695
        %v1782 = vpow.pop %v1781
        %v1783 = vmul.f32 %v1665, 1.442695
        %v1784 = vpow.pop %v1783
        %v1785 = vmul.f32 %v1666, 1.442695
        %v1786 = vpow.pop %v1785
        %v1787 = vmul.f32 %v1667, 1.442695
        %v1788 = vpow.pop %v1787
        %v1789 = vmul.f32 %v1668, 1.442695
        %v1790 = vpow.pop %v1789
        %v1791 = vmul.f32 %v1669, 1.442695
        %v1792 = vpow.pop %v1791
        %v1793 = vmul.f32 %v1670, 1.442695
        %v1794 = vpow.pop %v1793
        %v1795 = vmul.f32 %v1671, 1.442695
        %v1796 = vpow.pop %v1795
        %v1797 = vmul.f32 %v1672, 1.442695
        %v1798 = vpow.pop %v1797
        %v1799 = vmul.f32 %v1673, 1.442695
        %v1800 = vpow.pop %v1799
        %v1801 = vmul.f32 %v1674, 1.442695
        %v1802 = vpow.pop %v1801
        %v1803 = vsub.f32 %v971, %v1355
        %v1804 = vsub.f32 %v972, %v1356
        %v1805 = vsub.f32 %v973, %v1357
        %v1806 = vsub.f32 %v974, %v1358
        %v1807 = vsub.f32 %v975, %v1359
        %v1808 = vsub.f32 %v976, %v1360
        %v1809 = vsub.f32 %v977, %v1361
        %v1810 = vsub.f32 %v978, %v1362
        %v1811 = vsub.f32 %v979, %v1363
        %v1812 = vsub.f32 %v980, %v1364
        %v1813 = vsub.f32 %v981, %v1365
        %v1814 = vsub.f32 %v982, %v1366
        %v1815 = vsub.f32 %v983, %v1367
        %v1816 = vsub.f32 %v984, %v1368
        %v1817 = vsub.f32 %v985, %v1369
        %v1818 = vsub.f32 %v986, %v1370
        %v1819 = vsub.f32 %v987, %v1371
        %v1820 = vsub.f32 %v988, %v1372
        %v1821 = vsub.f32 %v989, %v1373
        %v1822 = vsub.f32 %v990, %v1374
        %v1823 = vsub.f32 %v991, %v1375
        %v1824 = vsub.f32 %v992, %v1376
        %v1825 = vsub.f32 %v993, %v1377
        %v1826 = vsub.f32 %v994, %v1378
        %v1827 = vsub.f32 %v995, %v1379
        %v1828 = vsub.f32 %v996, %v1380
        %v1829 = vsub.f32 %v997, %v1381
        %v1830 = vsub.f32 %v998, %v1382
        %v1831 = vsub.f32 %v999, %v1383
        %v1832 = vsub.f32 %v1000, %v1384
        %v1833 = vsub.f32 %v1001, %v1385
        %v1834 = vsub.f32 %v1002, %v1386
        %v1835 = vsub.f32 %v1003, %v1387
        %v1836 = vsub.f32 %v1004, %v1388
        %v1837 = vsub.f32 %v1005, %v1389
        %v1838 = vsub.f32 %v1006, %v1390
        %v1839 = vsub.f32 %v1007, %v1391
        %v1840 = vsub.f32 %v1008, %v1392
        %v1841 = vsub.f32 %v1009, %v1393
        %v1842 = vsub.f32 %v1010, %v1394
        %v1843 = vsub.f32 %v1011, %v1395
        %v1844 = vsub.f32 %v1012, %v1396
        %v1845 = vsub.f32 %v1013, %v1397
        %v1846 = vsub.f32 %v1014, %v1398
        %v1847 = vsub.f32 %v1015, %v1399
        %v1848 = vsub.f32 %v1016, %v1400
        %v1849 = vsub.f32 %v1017, %v1401
        %v1850 = vsub.f32 %v1018, %v1402
        %v1851 = vsub.f32 %v1019, %v1403
        %v1852 = vsub.f32 %v1020, %v1404
        %v1853 = vsub.f32 %v1021, %v1405
        %v1854 = vsub.f32 %v1022, %v1406
        %v1855 = vsub.f32 %v1023, %v1407
        %v1856 = vsub.f32 %v1024, %v1408
        %v1857 = vsub.f32 %v1025, %v1409
        %v1858 = vsub.f32 %v1026, %v1410
        %v1859 = vsub.f32 %v1027, %v1411
        %v1860 = vsub.f32 %v1028, %v1412
        %v1861 = vsub.f32 %v1029, %v1413
        %v1862 = vsub.f32 %v1030, %v1414
        %v1863 = vsub.f32 %v1031, %v1415
        %v1864 = vsub.f32 %v1032, %v1416
        %v1865 = vsub.f32 %v1033, %v1417
        %v1866 = vsub.f32 %v1034, %v1418
        %v1867 = vmul.f32 %v1803, 1.442695
        %v1868 = vpow.pop %v1867
        %v1869 = vmul.f32 %v1804, 1.442695
        %v1870 = vpow.pop %v1869
        %v1871 = vmul.f32 %v1805, 1.442695
        %v1872 = vpow.pop %v1871
        %v1873 = vmul.f32 %v1806, 1.442695
        %v1874 = vpow.pop %v1873
        %v1875 = vmul.f32 %v1807, 1.442695
        %v1876 = vpow.pop %v1875
        %v1877 = vmul.f32 %v1808, 1.442695
        %v1878 = vpow.pop %v1877
        %v1879 = vmul.f32 %v1809, 1.442695
        %v1880 = vpow.pop %v1879
        %v1881 = vmul.f32 %v1810, 1.442695
        %v1882 = vpow.pop %v1881
        %v1883 = vmul.f32 %v1811, 1.442695
        %v1884 = vpow.pop %v1883
        %v1885 = vmul.f32 %v1812, 1.442695
        %v1886 = vpow.pop %v1885
        %v1887 = vmul.f32 %v1813, 1.442695
        %v1888 = vpow.pop %v1887
        %v1889 = vmul.f32 %v1814, 1.442695
        %v1890 = vpow.pop %v1889
        %v1891 = vmul.f32 %v1815, 1.442695
        %v1892 = vpow.pop %v1891
        %v1893 = vmul.f32 %v1816, 1.442695
        %v1894 = vpow.pop %v1893
        %v1895 = vmul.f32 %v1817, 1.442695
        %v1896 = vpow.pop %v1895
        %v1897 = vmul.f32 %v1818, 1.442695
        %v1898 = vpow.pop %v1897
        %v1899 = vmul.f32 %v1819, 1.442695
        %v1900 = vpow.pop %v1899
        %v1901 = vmul.f32 %v1820, 1.442695
        %v1902 = vpow.pop %v1901
        %v1903 = vmul.f32 %v1821, 1.442695
        %v1904 = vpow.pop %v1903
        %v1905 = vmul.f32 %v1822, 1.442695
        %v1906 = vpow.pop %v1905
        %v1907 = vmul.f32 %v1823, 1.442695
        %v1908 = vpow.pop %v1907
        %v1909 = vmul.f32 %v1824, 1.442695
        %v1910 = vpow.pop %v1909
        %v1911 = vmul.f32 %v1825, 1.442695
        %v1912 = vpow.pop %v1911
        %v1913 = vmul.f32 %v1826, 1.442695
        %v1914 = vpow.pop %v1913
        %v1915 = vmul.f32 %v1827, 1.442695
        %v1916 = vpow.pop %v1915
        %v1917 = vmul.f32 %v1828, 1.442695
        %v1918 = vpow.pop %v1917
        %v1919 = vmul.f32 %v1829, 1.442695
        %v1920 = vpow.pop %v1919
        %v1921 = vmul.f32 %v1830, 1.442695
        %v1922 = vpow.pop %v1921
        %v1923 = vmul.f32 %v1831, 1.442695
        %v1924 = vpow.pop %v1923
        %v1925 = vmul.f32 %v1832, 1.442695
        %v1926 = vpow.pop %v1925
        %v1927 = vmul.f32 %v1833, 1.442695
        %v1928 = vpow.pop %v1927
        %v1929 = vmul.f32 %v1834, 1.442695
        %v1930 = vpow.pop %v1929
        %v1931 = vmul.f32 %v1835, 1.442695
        %v1932 = vpow.pop %v1931
        %v1933 = vmul.f32 %v1836, 1.442695
        %v1934 = vpow.pop %v1933
        %v1935 = vmul.f32 %v1837, 1.442695
        %v1936 = vpow.pop %v1935
        %v1937 = vmul.f32 %v1838, 1.442695
        %v1938 = vpow.pop %v1937
        %v1939 = vmul.f32 %v1839, 1.442695
        %v1940 = vpow.pop %v1939
        %v1941 = vmul.f32 %v1840, 1.442695
        %v1942 = vpow.pop %v1941
        %v1943 = vmul.f32 %v1841, 1.442695
        %v1944 = vpow.pop %v1943
        %v1945 = vmul.f32 %v1842, 1.442695
        %v1946 = vpow.pop %v1945
        %v1947 = vmul.f32 %v1843, 1.442695
        %v1948 = vpow.pop %v1947
        %v1949 = vmul.f32 %v1844, 1.442695
        %v1950 = vpow.pop %v1949
        %v1951 = vmul.f32 %v1845, 1.442695
        %v1952 = vpow.pop %v1951
        %v1953 = vmul.f32 %v1846, 1.442695
        %v1954 = vpow.pop %v1953
        %v1955 = vmul.f32 %v1847, 1.442695
        %v1956 = vpow.pop %v1955
        %v1957 = vmul.f32 %v1848, 1.442695
        %v1958 = vpow.pop %v1957
        %v1959 = vmul.f32 %v1849, 1.442695
        %v1960 = vpow.pop %v1959
        %v1961 = vmul.f32 %v1850, 1.442695
        %v1962 = vpow.pop %v1961
        %v1963 = vmul.f32 %v1851, 1.442695
        %v1964 = vpow.pop %v1963
        %v1965 = vmul.f32 %v1852, 1.442695
        %v1966 = vpow.pop %v1965
        %v1967 = vmul.f32 %v1853, 1.442695
        %v1968 = vpow.pop %v1967
        %v1969 = vmul.f32 %v1854, 1.442695
        %v1970 = vpow.pop %v1969
        %v1971 = vmul.f32 %v1855, 1.442695
        %v1972 = vpow.pop %v1971
        %v1973 = vmul.f32 %v1856, 1.442695
        %v1974 = vpow.pop %v1973
        %v1975 = vmul.f32 %v1857, 1.442695
        %v1976 = vpow.pop %v1975
        %v1977 = vmul.f32 %v1858, 1.442695
        %v1978 = vpow.pop %v1977
        %v1979 = vmul.f32 %v1859, 1.442695
        %v1980 = vpow.pop %v1979
        %v1981 = vmul.f32 %v1860, 1.442695
        %v1982 = vpow.pop %v1981
        %v1983 = vmul.f32 %v1861, 1.442695
        %v1984 = vpow.pop %v1983
        %v1985 = vmul.f32 %v1862, 1.442695
        %v1986 = vpow.pop %v1985
        %v1987 = vmul.f32 %v1863, 1.442695
        %v1988 = vpow.pop %v1987
        %v1989 = vmul.f32 %v1864, 1.442695
        %v1990 = vpow.pop %v1989
        %v1991 = vmul.f32 %v1865, 1.442695
        %v1992 = vpow.pop %v1991
        %v1993 = vmul.f32 %v1866, 1.442695
        %v1994 = vpow.pop %v1993
        %v1995 = vadd.f32 %v1484, %v1676
        %v1996 = vadd.f32 %v1486, %v1678
        %v1997 = vadd.f32 %v1488, %v1680
        %v1998 = vadd.f32 %v1490, %v1682
        %v1999 = vadd.f32 %v1492, %v1684
        %v2000 = vadd.f32 %v1494, %v1686
        %v2001 = vadd.f32 %v1496, %v1688
        %v2002 = vadd.f32 %v1498, %v1690
        %v2003 = vadd.f32 %v1500, %v1692
        %v2004 = vadd.f32 %v1502, %v1694
        %v2005 = vadd.f32 %v1504, %v1696
        %v2006 = vadd.f32 %v1506, %v1698
        %v2007 = vadd.f32 %v1508, %v1700
        %v2008 = vadd.f32 %v1510, %v1702
        %v2009 = vadd.f32 %v1512, %v1704
        %v2010 = vadd.f32 %v1514, %v1706
        %v2011 = vadd.f32 %v1516, %v1708
        %v2012 = vadd.f32 %v1518, %v1710
        %v2013 = vadd.f32 %v1520, %v1712
        %v2014 = vadd.f32 %v1522, %v1714
        %v2015 = vadd.f32 %v1524, %v1716
        %v2016 = vadd.f32 %v1526, %v1718
        %v2017 = vadd.f32 %v1528, %v1720
        %v2018 = vadd.f32 %v1530, %v1722
        %v2019 = vadd.f32 %v1532, %v1724
        %v2020 = vadd.f32 %v1534, %v1726
        %v2021 = vadd.f32 %v1536, %v1728
        %v2022 = vadd.f32 %v1538, %v1730
        %v2023 = vadd.f32 %v1540, %v1732
        %v2024 = vadd.f32 %v1542, %v1734
        %v2025 = vadd.f32 %v1544, %v1736
        %v2026 = vadd.f32 %v1546, %v1738
        %v2027 = vadd.f32 %v1548, %v1740
        %v2028 = vadd.f32 %v1550, %v1742
        %v2029 = vadd.f32 %v1552, %v1744
        %v2030 = vadd.f32 %v1554, %v1746
        %v2031 = vadd.f32 %v1556, %v1748
        %v2032 = vadd.f32 %v1558, %v1750
        %v2033 = vadd.f32 %v1560, %v1752
        %v2034 = vadd.f32 %v1562, %v1754
        %v2035 = vadd.f32 %v1564, %v1756
        %v2036 = vadd.f32 %v1566, %v1758
        %v2037 = vadd.f32 %v1568, %v1760
        %v2038 = vadd.f32 %v1570, %v1762
        %v2039 = vadd.f32 %v1572, %v1764
        %v2040 = vadd.f32 %v1574, %v1766
        %v2041 = vadd.f32 %v1576, %v1768
        %v2042 = vadd.f32 %v1578, %v1770
        %v2043 = vadd.f32 %v1580, %v1772
        %v2044 = vadd.f32 %v1582, %v1774
        %v2045 = vadd.f32 %v1584, %v1776
        %v2046 = vadd.f32 %v1586, %v1778
        %v2047 = vadd.f32 %v1588, %v1780
        %v2048 = vadd.f32 %v1590, %v1782
        %v2049 = vadd.f32 %v1592, %v1784
        %v2050 = vadd.f32 %v1594, %v1786
        %v2051 = vadd.f32 %v1596, %v1788
        %v2052 = vadd.f32 %v1598, %v1790
        %v2053 = vadd.f32 %v1600, %v1792
        %v2054 = vadd.f32 %v1602, %v1794
        %v2055 = vadd.f32 %v1604, %v1796
        %v2056 = vadd.f32 %v1606, %v1798
        %v2057 = vadd.f32 %v1608, %v1800
        %v2058 = vadd.f32 %v1610, %v1802
        %v2059 = vadd.f32 %v1995, %v1868
        %v2060 = vadd.f32 %v1996, %v1870
        %v2061 = vadd.f32 %v1997, %v1872
        %v2062 = vadd.f32 %v1998, %v1874
        %v2063 = vadd.f32 %v1999, %v1876
        %v2064 = vadd.f32 %v2000, %v1878
        %v2065 = vadd.f32 %v2001, %v1880
        %v2066 = vadd.f32 %v2002, %v1882
        %v2067 = vadd.f32 %v2003, %v1884
        %v2068 = vadd.f32 %v2004, %v1886
        %v2069 = vadd.f32 %v2005, %v1888
        %v2070 = vadd.f32 %v2006, %v1890
        %v2071 = vadd.f32 %v2007, %v1892
        %v2072 = vadd.f32 %v2008, %v1894
        %v2073 = vadd.f32 %v2009, %v1896
        %v2074 = vadd.f32 %v2010, %v1898
        %v2075 = vadd.f32 %v2011, %v1900
        %v2076 = vadd.f32 %v2012, %v1902
        %v2077 = vadd.f32 %v2013, %v1904
        %v2078 = vadd.f32 %v2014, %v1906
        %v2079 = vadd.f32 %v2015, %v1908
        %v2080 = vadd.f32 %v2016, %v1910
        %v2081 = vadd.f32 %v2017, %v1912
        %v2082 = vadd.f32 %v2018, %v1914
        %v2083 = vadd.f32 %v2019, %v1916
        %v2084 = vadd.f32 %v2020, %v1918
        %v2085 = vadd.f32 %v2021, %v1920
        %v2086 = vadd.f32 %v2022, %v1922
        %v2087 = vadd.f32 %v2023, %v1924
        %v2088 = vadd.f32 %v2024, %v1926
        %v2089 = vadd.f32 %v2025, %v1928
        %v2090 = vadd.f32 %v2026, %v1930
        %v2091 = vadd.f32 %v2027, %v1932
        %v2092 = vadd.f32 %v2028, %v1934
        %v2093 = vadd.f32 %v2029, %v1936
        %v2094 = vadd.f32 %v2030, %v1938
        %v2095 = vadd.f32 %v2031, %v1940
        %v2096 = vadd.f32 %v2032, %v1942
        %v2097 = vadd.f32 %v2033, %v1944
        %v2098 = vadd.f32 %v2034, %v1946
        %v2099 = vadd.f32 %v2035, %v1948
        %v2100 = vadd.f32 %v2036, %v1950
        %v2101 = vadd.f32 %v2037, %v1952
        %v2102 = vadd.f32 %v2038, %v1954
        %v2103 = vadd.f32 %v2039, %v1956
        %v2104 = vadd.f32 %v2040, %v1958
        %v2105 = vadd.f32 %v2041, %v1960
        %v2106 = vadd.f32 %v2042, %v1962
        %v2107 = vadd.f32 %v2043, %v1964
        %v2108 = vadd.f32 %v2044, %v1966
        %v2109 = vadd.f32 %v2045, %v1968
        %v2110 = vadd.f32 %v2046, %v1970
        %v2111 = vadd.f32 %v2047, %v1972
        %v2112 = vadd.f32 %v2048, %v1974
        %v2113 = vadd.f32 %v2049, %v1976
        %v2114 = vadd.f32 %v2050, %v1978
        %v2115 = vadd.f32 %v2051, %v1980
        %v2116 = vadd.f32 %v2052, %v1982
        %v2117 = vadd.f32 %v2053, %v1984
        %v2118 = vadd.f32 %v2054, %v1986
        %v2119 = vadd.f32 %v2055, %v1988
        %v2120 = vadd.f32 %v2056, %v1990
        %v2121 = vadd.f32 %v2057, %v1992
        %v2122 = vadd.f32 %v2058, %v1994
        %v2123 = vrcp.pop %v2059
        %v2124 = vmul.f32 %v2059, %v2123
        %v2125 = vsub.f32 1.0, %v2124
        %v2126 = vmul.f32 %v2123, %v2125
        %v2127 = vadd.f32 %v2123, %v2126
        %vm2128 = vweird.f32 %v2059
        %vm2129 = vweird.f32 %v2123
        %vm2130 = vmor %vm2128, %vm2129
        %v2131 = vsel %vm2130, %v2123, %v2127
        %v2132 = vand.u32 2147483647, %v2059
        %vm2133 = vcmp.eq.f32.partialorder %v2132, 8.507059e+37
        %v2134 = vand.u32 %v2059, 2147483648
        %v2135 = vor.u32 1.1754944e-38, %v2134
        %v2136 = vsel %vm2133, %v2135, %v2131
        %v2137 = vrcp.pop %v2060
        %v2138 = vmul.f32 %v2060, %v2137
        %v2139 = vsub.f32 1.0, %v2138
        %v2140 = vmul.f32 %v2137, %v2139
        %v2141 = vadd.f32 %v2137, %v2140
        %vm2142 = vweird.f32 %v2060
        %vm2143 = vweird.f32 %v2137
        %vm2144 = vmor %vm2142, %vm2143
        %v2145 = vsel %vm2144, %v2137, %v2141
        %v2146 = vand.u32 2147483647, %v2060
        %vm2147 = vcmp.eq.f32.partialorder %v2146, 8.507059e+37
        %v2148 = vand.u32 %v2060, 2147483648
        %v2149 = vor.u32 1.1754944e-38, %v2148
        %v2150 = vsel %vm2147, %v2149, %v2145
        %v2151 = vrcp.pop %v2061
        %v2152 = vmul.f32 %v2061, %v2151
        %v2153 = vsub.f32 1.0, %v2152
        %v2154 = vmul.f32 %v2151, %v2153
        %v2155 = vadd.f32 %v2151, %v2154
        %vm2156 = vweird.f32 %v2061
        %vm2157 = vweird.f32 %v2151
        %vm2158 = vmor %vm2156, %vm2157
        %v2159 = vsel %vm2158, %v2151, %v2155
        %v2160 = vand.u32 2147483647, %v2061
        %vm2161 = vcmp.eq.f32.partialorder %v2160, 8.507059e+37
        %v2162 = vand.u32 %v2061, 2147483648
        %v2163 = vor.u32 1.1754944e-38, %v2162
        %v2164 = vsel %vm2161, %v2163, %v2159
        %v2165 = vrcp.pop %v2062
        %v2166 = vmul.f32 %v2062, %v2165
        %v2167 = vsub.f32 1.0, %v2166
        %v2168 = vmul.f32 %v2165, %v2167
        %v2169 = vadd.f32 %v2165, %v2168
        %vm2170 = vweird.f32 %v2062
        %vm2171 = vweird.f32 %v2165
        %vm2172 = vmor %vm2170, %vm2171
        %v2173 = vsel %vm2172, %v2165, %v2169
        %v2174 = vand.u32 2147483647, %v2062
        %vm2175 = vcmp.eq.f32.partialorder %v2174, 8.507059e+37
        %v2176 = vand.u32 %v2062, 2147483648
        %v2177 = vor.u32 1.1754944e-38, %v2176
        %v2178 = vsel %vm2175, %v2177, %v2173
        %v2179 = vrcp.pop %v2063
        %v2180 = vmul.f32 %v2063, %v2179
        %v2181 = vsub.f32 1.0, %v2180
        %v2182 = vmul.f32 %v2179, %v2181
        %v2183 = vadd.f32 %v2179, %v2182
        %vm2184 = vweird.f32 %v2063
        %vm2185 = vweird.f32 %v2179
        %vm2186 = vmor %vm2184, %vm2185
        %v2187 = vsel %vm2186, %v2179, %v2183
        %v2188 = vand.u32 2147483647, %v2063
        %vm2189 = vcmp.eq.f32.partialorder %v2188, 8.507059e+37
        %v2190 = vand.u32 %v2063, 2147483648
        %v2191 = vor.u32 1.1754944e-38, %v2190
        %v2192 = vsel %vm2189, %v2191, %v2187
        %v2193 = vrcp.pop %v2064
        %v2194 = vmul.f32 %v2064, %v2193
        %v2195 = vsub.f32 1.0, %v2194
        %v2196 = vmul.f32 %v2193, %v2195
        %v2197 = vadd.f32 %v2193, %v2196
        %vm2198 = vweird.f32 %v2064
        %vm2199 = vweird.f32 %v2193
        %vm2200 = vmor %vm2198, %vm2199
        %v2201 = vsel %vm2200, %v2193, %v2197
        %v2202 = vand.u32 2147483647, %v2064
        %vm2203 = vcmp.eq.f32.partialorder %v2202, 8.507059e+37
        %v2204 = vand.u32 %v2064, 2147483648
        %v2205 = vor.u32 1.1754944e-38, %v2204
        %v2206 = vsel %vm2203, %v2205, %v2201
        %v2207 = vrcp.pop %v2065
        %v2208 = vmul.f32 %v2065, %v2207
        %v2209 = vsub.f32 1.0, %v2208
        %v2210 = vmul.f32 %v2207, %v2209
        %v2211 = vadd.f32 %v2207, %v2210
        %vm2212 = vweird.f32 %v2065
        %vm2213 = vweird.f32 %v2207
        %vm2214 = vmor %vm2212, %vm2213
        %v2215 = vsel %vm2214, %v2207, %v2211
        %v2216 = vand.u32 2147483647, %v2065
        %vm2217 = vcmp.eq.f32.partialorder %v2216, 8.507059e+37
        %v2218 = vand.u32 %v2065, 2147483648
        %v2219 = vor.u32 1.1754944e-38, %v2218
        %v2220 = vsel %vm2217, %v2219, %v2215
        %v2221 = vrcp.pop %v2066
        %v2222 = vmul.f32 %v2066, %v2221
        %v2223 = vsub.f32 1.0, %v2222
        %v2224 = vmul.f32 %v2221, %v2223
        %v2225 = vadd.f32 %v2221, %v2224
        %vm2226 = vweird.f32 %v2066
        %vm2227 = vweird.f32 %v2221
        %vm2228 = vmor %vm2226, %vm2227
        %v2229 = vsel %vm2228, %v2221, %v2225
        %v2230 = vand.u32 2147483647, %v2066
        %vm2231 = vcmp.eq.f32.partialorder %v2230, 8.507059e+37
        %v2232 = vand.u32 %v2066, 2147483648
        %v2233 = vor.u32 1.1754944e-38, %v2232
        %v2234 = vsel %vm2231, %v2233, %v2229
        %v2235 = vrcp.pop %v2067
        %v2236 = vmul.f32 %v2067, %v2235
        %v2237 = vsub.f32 1.0, %v2236
        %v2238 = vmul.f32 %v2235, %v2237
        %v2239 = vadd.f32 %v2235, %v2238
        %vm2240 = vweird.f32 %v2067
        %vm2241 = vweird.f32 %v2235
        %vm2242 = vmor %vm2240, %vm2241
        %v2243 = vsel %vm2242, %v2235, %v2239
        %v2244 = vand.u32 2147483647, %v2067
        %vm2245 = vcmp.eq.f32.partialorder %v2244, 8.507059e+37
        %v2246 = vand.u32 %v2067, 2147483648
        %v2247 = vor.u32 1.1754944e-38, %v2246
        %v2248 = vsel %vm2245, %v2247, %v2243
        %v2249 = vrcp.pop %v2068
        %v2250 = vmul.f32 %v2068, %v2249
        %v2251 = vsub.f32 1.0, %v2250
        %v2252 = vmul.f32 %v2249, %v2251
        %v2253 = vadd.f32 %v2249, %v2252
        %vm2254 = vweird.f32 %v2068
        %vm2255 = vweird.f32 %v2249
        %vm2256 = vmor %vm2254, %vm2255
        %v2257 = vsel %vm2256, %v2249, %v2253
        %v2258 = vand.u32 2147483647, %v2068
        %vm2259 = vcmp.eq.f32.partialorder %v2258, 8.507059e+37
        %v2260 = vand.u32 %v2068, 2147483648
        %v2261 = vor.u32 1.1754944e-38, %v2260
        %v2262 = vsel %vm2259, %v2261, %v2257
        %v2263 = vrcp.pop %v2069
        %v2264 = vmul.f32 %v2069, %v2263
        %v2265 = vsub.f32 1.0, %v2264
        %v2266 = vmul.f32 %v2263, %v2265
        %v2267 = vadd.f32 %v2263, %v2266
        %vm2268 = vweird.f32 %v2069
        %vm2269 = vweird.f32 %v2263
        %vm2270 = vmor %vm2268, %vm2269
        %v2271 = vsel %vm2270, %v2263, %v2267
        %v2272 = vand.u32 2147483647, %v2069
        %vm2273 = vcmp.eq.f32.partialorder %v2272, 8.507059e+37
        %v2274 = vand.u32 %v2069, 2147483648
        %v2275 = vor.u32 1.1754944e-38, %v2274
        %v2276 = vsel %vm2273, %v2275, %v2271
        %v2277 = vrcp.pop %v2070
        %v2278 = vmul.f32 %v2070, %v2277
        %v2279 = vsub.f32 1.0, %v2278
        %v2280 = vmul.f32 %v2277, %v2279
        %v2281 = vadd.f32 %v2277, %v2280
        %vm2282 = vweird.f32 %v2070
        %vm2283 = vweird.f32 %v2277
        %vm2284 = vmor %vm2282, %vm2283
        %v2285 = vsel %vm2284, %v2277, %v2281
        %v2286 = vand.u32 2147483647, %v2070
        %vm2287 = vcmp.eq.f32.partialorder %v2286, 8.507059e+37
        %v2288 = vand.u32 %v2070, 2147483648
        %v2289 = vor.u32 1.1754944e-38, %v2288
        %v2290 = vsel %vm2287, %v2289, %v2285
        %v2291 = vrcp.pop %v2071
        %v2292 = vmul.f32 %v2071, %v2291
        %v2293 = vsub.f32 1.0, %v2292
        %v2294 = vmul.f32 %v2291, %v2293
        %v2295 = vadd.f32 %v2291, %v2294
        %vm2296 = vweird.f32 %v2071
        %vm2297 = vweird.f32 %v2291
        %vm2298 = vmor %vm2296, %vm2297
        %v2299 = vsel %vm2298, %v2291, %v2295
        %v2300 = vand.u32 2147483647, %v2071
        %vm2301 = vcmp.eq.f32.partialorder %v2300, 8.507059e+37
        %v2302 = vand.u32 %v2071, 2147483648
        %v2303 = vor.u32 1.1754944e-38, %v2302
        %v2304 = vsel %vm2301, %v2303, %v2299
        %v2305 = vrcp.pop %v2072
        %v2306 = vmul.f32 %v2072, %v2305
        %v2307 = vsub.f32 1.0, %v2306
        %v2308 = vmul.f32 %v2305, %v2307
        %v2309 = vadd.f32 %v2305, %v2308
        %vm2310 = vweird.f32 %v2072
        %vm2311 = vweird.f32 %v2305
        %vm2312 = vmor %vm2310, %vm2311
        %v2313 = vsel %vm2312, %v2305, %v2309
        %v2314 = vand.u32 2147483647, %v2072
        %vm2315 = vcmp.eq.f32.partialorder %v2314, 8.507059e+37
        %v2316 = vand.u32 %v2072, 2147483648
        %v2317 = vor.u32 1.1754944e-38, %v2316
        %v2318 = vsel %vm2315, %v2317, %v2313
        %v2319 = vrcp.pop %v2073
        %v2320 = vmul.f32 %v2073, %v2319
        %v2321 = vsub.f32 1.0, %v2320
        %v2322 = vmul.f32 %v2319, %v2321
        %v2323 = vadd.f32 %v2319, %v2322
        %vm2324 = vweird.f32 %v2073
        %vm2325 = vweird.f32 %v2319
        %vm2326 = vmor %vm2324, %vm2325
        %v2327 = vsel %vm2326, %v2319, %v2323
        %v2328 = vand.u32 2147483647, %v2073
        %vm2329 = vcmp.eq.f32.partialorder %v2328, 8.507059e+37
        %v2330 = vand.u32 %v2073, 2147483648
        %v2331 = vor.u32 1.1754944e-38, %v2330
        %v2332 = vsel %vm2329, %v2331, %v2327
        %v2333 = vrcp.pop %v2074
        %v2334 = vmul.f32 %v2074, %v2333
        %v2335 = vsub.f32 1.0, %v2334
        %v2336 = vmul.f32 %v2333, %v2335
        %v2337 = vadd.f32 %v2333, %v2336
        %vm2338 = vweird.f32 %v2074
        %vm2339 = vweird.f32 %v2333
        %vm2340 = vmor %vm2338, %vm2339
        %v2341 = vsel %vm2340, %v2333, %v2337
        %v2342 = vand.u32 2147483647, %v2074
        %vm2343 = vcmp.eq.f32.partialorder %v2342, 8.507059e+37
        %v2344 = vand.u32 %v2074, 2147483648
        %v2345 = vor.u32 1.1754944e-38, %v2344
        %v2346 = vsel %vm2343, %v2345, %v2341
        %v2347 = vrcp.pop %v2075
        %v2348 = vmul.f32 %v2075, %v2347
        %v2349 = vsub.f32 1.0, %v2348
        %v2350 = vmul.f32 %v2347, %v2349
        %v2351 = vadd.f32 %v2347, %v2350
        %vm2352 = vweird.f32 %v2075
        %vm2353 = vweird.f32 %v2347
        %vm2354 = vmor %vm2352, %vm2353
        %v2355 = vsel %vm2354, %v2347, %v2351
        %v2356 = vand.u32 2147483647, %v2075
        %vm2357 = vcmp.eq.f32.partialorder %v2356, 8.507059e+37
        %v2358 = vand.u32 %v2075, 2147483648
        %v2359 = vor.u32 1.1754944e-38, %v2358
        %v2360 = vsel %vm2357, %v2359, %v2355
        %v2361 = vrcp.pop %v2076
        %v2362 = vmul.f32 %v2076, %v2361
        %v2363 = vsub.f32 1.0, %v2362
        %v2364 = vmul.f32 %v2361, %v2363
        %v2365 = vadd.f32 %v2361, %v2364
        %vm2366 = vweird.f32 %v2076
        %vm2367 = vweird.f32 %v2361
        %vm2368 = vmor %vm2366, %vm2367
        %v2369 = vsel %vm2368, %v2361, %v2365
        %v2370 = vand.u32 2147483647, %v2076
        %vm2371 = vcmp.eq.f32.partialorder %v2370, 8.507059e+37
        %v2372 = vand.u32 %v2076, 2147483648
        %v2373 = vor.u32 1.1754944e-38, %v2372
        %v2374 = vsel %vm2371, %v2373, %v2369
        %v2375 = vrcp.pop %v2077
        %v2376 = vmul.f32 %v2077, %v2375
        %v2377 = vsub.f32 1.0, %v2376
        %v2378 = vmul.f32 %v2375, %v2377
        %v2379 = vadd.f32 %v2375, %v2378
        %vm2380 = vweird.f32 %v2077
        %vm2381 = vweird.f32 %v2375
        %vm2382 = vmor %vm2380, %vm2381
        %v2383 = vsel %vm2382, %v2375, %v2379
        %v2384 = vand.u32 2147483647, %v2077
        %vm2385 = vcmp.eq.f32.partialorder %v2384, 8.507059e+37
        %v2386 = vand.u32 %v2077, 2147483648
        %v2387 = vor.u32 1.1754944e-38, %v2386
        %v2388 = vsel %vm2385, %v2387, %v2383
        %v2389 = vrcp.pop %v2078
        %v2390 = vmul.f32 %v2078, %v2389
        %v2391 = vsub.f32 1.0, %v2390
        %v2392 = vmul.f32 %v2389, %v2391
        %v2393 = vadd.f32 %v2389, %v2392
        %vm2394 = vweird.f32 %v2078
        %vm2395 = vweird.f32 %v2389
        %vm2396 = vmor %vm2394, %vm2395
        %v2397 = vsel %vm2396, %v2389, %v2393
        %v2398 = vand.u32 2147483647, %v2078
        %vm2399 = vcmp.eq.f32.partialorder %v2398, 8.507059e+37
        %v2400 = vand.u32 %v2078, 2147483648
        %v2401 = vor.u32 1.1754944e-38, %v2400
        %v2402 = vsel %vm2399, %v2401, %v2397
        %v2403 = vrcp.pop %v2079
        %v2404 = vmul.f32 %v2079, %v2403
        %v2405 = vsub.f32 1.0, %v2404
        %v2406 = vmul.f32 %v2403, %v2405
        %v2407 = vadd.f32 %v2403, %v2406
        %vm2408 = vweird.f32 %v2079
        %vm2409 = vweird.f32 %v2403
        %vm2410 = vmor %vm2408, %vm2409
        %v2411 = vsel %vm2410, %v2403, %v2407
        %v2412 = vand.u32 2147483647, %v2079
        %vm2413 = vcmp.eq.f32.partialorder %v2412, 8.507059e+37
        %v2414 = vand.u32 %v2079, 2147483648
        %v2415 = vor.u32 1.1754944e-38, %v2414
        %v2416 = vsel %vm2413, %v2415, %v2411
        %v2417 = vrcp.pop %v2080
        %v2418 = vmul.f32 %v2080, %v2417
        %v2419 = vsub.f32 1.0, %v2418
        %v2420 = vmul.f32 %v2417, %v2419
        %v2421 = vadd.f32 %v2417, %v2420
        %vm2422 = vweird.f32 %v2080
        %vm2423 = vweird.f32 %v2417
        %vm2424 = vmor %vm2422, %vm2423
        %v2425 = vsel %vm2424, %v2417, %v2421
        %v2426 = vand.u32 2147483647, %v2080
        %vm2427 = vcmp.eq.f32.partialorder %v2426, 8.507059e+37
        %v2428 = vand.u32 %v2080, 2147483648
        %v2429 = vor.u32 1.1754944e-38, %v2428
        %v2430 = vsel %vm2427, %v2429, %v2425
        %v2431 = vrcp.pop %v2081
        %v2432 = vmul.f32 %v2081, %v2431
        %v2433 = vsub.f32 1.0, %v2432
        %v2434 = vmul.f32 %v2431, %v2433
        %v2435 = vadd.f32 %v2431, %v2434
        %vm2436 = vweird.f32 %v2081
        %vm2437 = vweird.f32 %v2431
        %vm2438 = vmor %vm2436, %vm2437
        %v2439 = vsel %vm2438, %v2431, %v2435
        %v2440 = vand.u32 2147483647, %v2081
        %vm2441 = vcmp.eq.f32.partialorder %v2440, 8.507059e+37
        %v2442 = vand.u32 %v2081, 2147483648
        %v2443 = vor.u32 1.1754944e-38, %v2442
        %v2444 = vsel %vm2441, %v2443, %v2439
        %v2445 = vrcp.pop %v2082
        %v2446 = vmul.f32 %v2082, %v2445
        %v2447 = vsub.f32 1.0, %v2446
        %v2448 = vmul.f32 %v2445, %v2447
        %v2449 = vadd.f32 %v2445, %v2448
        %vm2450 = vweird.f32 %v2082
        %vm2451 = vweird.f32 %v2445
        %vm2452 = vmor %vm2450, %vm2451
        %v2453 = vsel %vm2452, %v2445, %v2449
        %v2454 = vand.u32 2147483647, %v2082
        %vm2455 = vcmp.eq.f32.partialorder %v2454, 8.507059e+37
        %v2456 = vand.u32 %v2082, 2147483648
        %v2457 = vor.u32 1.1754944e-38, %v2456
        %v2458 = vsel %vm2455, %v2457, %v2453
        %v2459 = vrcp.pop %v2083
        %v2460 = vmul.f32 %v2083, %v2459
        %v2461 = vsub.f32 1.0, %v2460
        %v2462 = vmul.f32 %v2459, %v2461
        %v2463 = vadd.f32 %v2459, %v2462
        %vm2464 = vweird.f32 %v2083
        %vm2465 = vweird.f32 %v2459
        %vm2466 = vmor %vm2464, %vm2465
        %v2467 = vsel %vm2466, %v2459, %v2463
        %v2468 = vand.u32 2147483647, %v2083
        %vm2469 = vcmp.eq.f32.partialorder %v2468, 8.507059e+37
        %v2470 = vand.u32 %v2083, 2147483648
        %v2471 = vor.u32 1.1754944e-38, %v2470
        %v2472 = vsel %vm2469, %v2471, %v2467
        %v2473 = vrcp.pop %v2084
        %v2474 = vmul.f32 %v2084, %v2473
        %v2475 = vsub.f32 1.0, %v2474
        %v2476 = vmul.f32 %v2473, %v2475
        %v2477 = vadd.f32 %v2473, %v2476
        %vm2478 = vweird.f32 %v2084
        %vm2479 = vweird.f32 %v2473
        %vm2480 = vmor %vm2478, %vm2479
        %v2481 = vsel %vm2480, %v2473, %v2477
        %v2482 = vand.u32 2147483647, %v2084
        %vm2483 = vcmp.eq.f32.partialorder %v2482, 8.507059e+37
        %v2484 = vand.u32 %v2084, 2147483648
        %v2485 = vor.u32 1.1754944e-38, %v2484
        %v2486 = vsel %vm2483, %v2485, %v2481
        %v2487 = vrcp.pop %v2085
        %v2488 = vmul.f32 %v2085, %v2487
        %v2489 = vsub.f32 1.0, %v2488
        %v2490 = vmul.f32 %v2487, %v2489
        %v2491 = vadd.f32 %v2487, %v2490
        %vm2492 = vweird.f32 %v2085
        %vm2493 = vweird.f32 %v2487
        %vm2494 = vmor %vm2492, %vm2493
        %v2495 = vsel %vm2494, %v2487, %v2491
        %v2496 = vand.u32 2147483647, %v2085
        %vm2497 = vcmp.eq.f32.partialorder %v2496, 8.507059e+37
        %v2498 = vand.u32 %v2085, 2147483648
        %v2499 = vor.u32 1.1754944e-38, %v2498
        %v2500 = vsel %vm2497, %v2499, %v2495
        %v2501 = vrcp.pop %v2086
        %v2502 = vmul.f32 %v2086, %v2501
        %v2503 = vsub.f32 1.0, %v2502
        %v2504 = vmul.f32 %v2501, %v2503
        %v2505 = vadd.f32 %v2501, %v2504
        %vm2506 = vweird.f32 %v2086
        %vm2507 = vweird.f32 %v2501
        %vm2508 = vmor %vm2506, %vm2507
        %v2509 = vsel %vm2508, %v2501, %v2505
        %v2510 = vand.u32 2147483647, %v2086
        %vm2511 = vcmp.eq.f32.partialorder %v2510, 8.507059e+37
        %v2512 = vand.u32 %v2086, 2147483648
        %v2513 = vor.u32 1.1754944e-38, %v2512
        %v2514 = vsel %vm2511, %v2513, %v2509
        %v2515 = vrcp.pop %v2087
        %v2516 = vmul.f32 %v2087, %v2515
        %v2517 = vsub.f32 1.0, %v2516
        %v2518 = vmul.f32 %v2515, %v2517
        %v2519 = vadd.f32 %v2515, %v2518
        %vm2520 = vweird.f32 %v2087
        %vm2521 = vweird.f32 %v2515
        %vm2522 = vmor %vm2520, %vm2521
        %v2523 = vsel %vm2522, %v2515, %v2519
        %v2524 = vand.u32 2147483647, %v2087
        %vm2525 = vcmp.eq.f32.partialorder %v2524, 8.507059e+37
        %v2526 = vand.u32 %v2087, 2147483648
        %v2527 = vor.u32 1.1754944e-38, %v2526
        %v2528 = vsel %vm2525, %v2527, %v2523
        %v2529 = vrcp.pop %v2088
        %v2530 = vmul.f32 %v2088, %v2529
        %v2531 = vsub.f32 1.0, %v2530
        %v2532 = vmul.f32 %v2529, %v2531
        %v2533 = vadd.f32 %v2529, %v2532
        %vm2534 = vweird.f32 %v2088
        %vm2535 = vweird.f32 %v2529
        %vm2536 = vmor %vm2534, %vm2535
        %v2537 = vsel %vm2536, %v2529, %v2533
        %v2538 = vand.u32 2147483647, %v2088
        %vm2539 = vcmp.eq.f32.partialorder %v2538, 8.507059e+37
        %v2540 = vand.u32 %v2088, 2147483648
        %v2541 = vor.u32 1.1754944e-38, %v2540
        %v2542 = vsel %vm2539, %v2541, %v2537
        %v2543 = vrcp.pop %v2089
        %v2544 = vmul.f32 %v2089, %v2543
        %v2545 = vsub.f32 1.0, %v2544
        %v2546 = vmul.f32 %v2543, %v2545
        %v2547 = vadd.f32 %v2543, %v2546
        %vm2548 = vweird.f32 %v2089
        %vm2549 = vweird.f32 %v2543
        %vm2550 = vmor %vm2548, %vm2549
        %v2551 = vsel %vm2550, %v2543, %v2547
        %v2552 = vand.u32 2147483647, %v2089
        %vm2553 = vcmp.eq.f32.partialorder %v2552, 8.507059e+37
        %v2554 = vand.u32 %v2089, 2147483648
        %v2555 = vor.u32 1.1754944e-38, %v2554
        %v2556 = vsel %vm2553, %v2555, %v2551
        %v2557 = vrcp.pop %v2090
        %v2558 = vmul.f32 %v2090, %v2557
        %v2559 = vsub.f32 1.0, %v2558
        %v2560 = vmul.f32 %v2557, %v2559
        %v2561 = vadd.f32 %v2557, %v2560
        %vm2562 = vweird.f32 %v2090
        %vm2563 = vweird.f32 %v2557
        %vm2564 = vmor %vm2562, %vm2563
        %v2565 = vsel %vm2564, %v2557, %v2561
        %v2566 = vand.u32 2147483647, %v2090
        %vm2567 = vcmp.eq.f32.partialorder %v2566, 8.507059e+37
        %v2568 = vand.u32 %v2090, 2147483648
        %v2569 = vor.u32 1.1754944e-38, %v2568
        %v2570 = vsel %vm2567, %v2569, %v2565
        %v2571 = vrcp.pop %v2091
        %v2572 = vmul.f32 %v2091, %v2571
        %v2573 = vsub.f32 1.0, %v2572
        %v2574 = vmul.f32 %v2571, %v2573
        %v2575 = vadd.f32 %v2571, %v2574
        %vm2576 = vweird.f32 %v2091
        %vm2577 = vweird.f32 %v2571
        %vm2578 = vmor %vm2576, %vm2577
        %v2579 = vsel %vm2578, %v2571, %v2575
        %v2580 = vand.u32 2147483647, %v2091
        %vm2581 = vcmp.eq.f32.partialorder %v2580, 8.507059e+37
        %v2582 = vand.u32 %v2091, 2147483648
        %v2583 = vor.u32 1.1754944e-38, %v2582
        %v2584 = vsel %vm2581, %v2583, %v2579
        %v2585 = vrcp.pop %v2092
        %v2586 = vmul.f32 %v2092, %v2585
        %v2587 = vsub.f32 1.0, %v2586
        %v2588 = vmul.f32 %v2585, %v2587
        %v2589 = vadd.f32 %v2585, %v2588
        %vm2590 = vweird.f32 %v2092
        %vm2591 = vweird.f32 %v2585
        %vm2592 = vmor %vm2590, %vm2591
        %v2593 = vsel %vm2592, %v2585, %v2589
        %v2594 = vand.u32 2147483647, %v2092
        %vm2595 = vcmp.eq.f32.partialorder %v2594, 8.507059e+37
        %v2596 = vand.u32 %v2092, 2147483648
        %v2597 = vor.u32 1.1754944e-38, %v2596
        %v2598 = vsel %vm2595, %v2597, %v2593
        %v2599 = vrcp.pop %v2093
        %v2600 = vmul.f32 %v2093, %v2599
        %v2601 = vsub.f32 1.0, %v2600
        %v2602 = vmul.f32 %v2599, %v2601
        %v2603 = vadd.f32 %v2599, %v2602
        %vm2604 = vweird.f32 %v2093
        %vm2605 = vweird.f32 %v2599
        %vm2606 = vmor %vm2604, %vm2605
        %v2607 = vsel %vm2606, %v2599, %v2603
        %v2608 = vand.u32 2147483647, %v2093
        %vm2609 = vcmp.eq.f32.partialorder %v2608, 8.507059e+37
        %v2610 = vand.u32 %v2093, 2147483648
        %v2611 = vor.u32 1.1754944e-38, %v2610
        %v2612 = vsel %vm2609, %v2611, %v2607
        %v2613 = vrcp.pop %v2094
        %v2614 = vmul.f32 %v2094, %v2613
        %v2615 = vsub.f32 1.0, %v2614
        %v2616 = vmul.f32 %v2613, %v2615
        %v2617 = vadd.f32 %v2613, %v2616
        %vm2618 = vweird.f32 %v2094
        %vm2619 = vweird.f32 %v2613
        %vm2620 = vmor %vm2618, %vm2619
        %v2621 = vsel %vm2620, %v2613, %v2617
        %v2622 = vand.u32 2147483647, %v2094
        %vm2623 = vcmp.eq.f32.partialorder %v2622, 8.507059e+37
        %v2624 = vand.u32 %v2094, 2147483648
        %v2625 = vor.u32 1.1754944e-38, %v2624
        %v2626 = vsel %vm2623, %v2625, %v2621
        %v2627 = vrcp.pop %v2095
        %v2628 = vmul.f32 %v2095, %v2627
        %v2629 = vsub.f32 1.0, %v2628
        %v2630 = vmul.f32 %v2627, %v2629
        %v2631 = vadd.f32 %v2627, %v2630
        %vm2632 = vweird.f32 %v2095
        %vm2633 = vweird.f32 %v2627
        %vm2634 = vmor %vm2632, %vm2633
        %v2635 = vsel %vm2634, %v2627, %v2631
        %v2636 = vand.u32 2147483647, %v2095
        %vm2637 = vcmp.eq.f32.partialorder %v2636, 8.507059e+37
        %v2638 = vand.u32 %v2095, 2147483648
        %v2639 = vor.u32 1.1754944e-38, %v2638
        %v2640 = vsel %vm2637, %v2639, %v2635
        %v2641 = vrcp.pop %v2096
        %v2642 = vmul.f32 %v2096, %v2641
        %v2643 = vsub.f32 1.0, %v2642
        %v2644 = vmul.f32 %v2641, %v2643
        %v2645 = vadd.f32 %v2641, %v2644
        %vm2646 = vweird.f32 %v2096
        %vm2647 = vweird.f32 %v2641
        %vm2648 = vmor %vm2646, %vm2647
        %v2649 = vsel %vm2648, %v2641, %v2645
        %v2650 = vand.u32 2147483647, %v2096
        %vm2651 = vcmp.eq.f32.partialorder %v2650, 8.507059e+37
        %v2652 = vand.u32 %v2096, 2147483648
        %v2653 = vor.u32 1.1754944e-38, %v2652
        %v2654 = vsel %vm2651, %v2653, %v2649
        %v2655 = vrcp.pop %v2097
        %v2656 = vmul.f32 %v2097, %v2655
        %v2657 = vsub.f32 1.0, %v2656
        %v2658 = vmul.f32 %v2655, %v2657
        %v2659 = vadd.f32 %v2655, %v2658
        %vm2660 = vweird.f32 %v2097
        %vm2661 = vweird.f32 %v2655
        %vm2662 = vmor %vm2660, %vm2661
        %v2663 = vsel %vm2662, %v2655, %v2659
        %v2664 = vand.u32 2147483647, %v2097
        %vm2665 = vcmp.eq.f32.partialorder %v2664, 8.507059e+37
        %v2666 = vand.u32 %v2097, 2147483648
        %v2667 = vor.u32 1.1754944e-38, %v2666
        %v2668 = vsel %vm2665, %v2667, %v2663
        %v2669 = vrcp.pop %v2098
        %v2670 = vmul.f32 %v2098, %v2669
        %v2671 = vsub.f32 1.0, %v2670
        %v2672 = vmul.f32 %v2669, %v2671
        %v2673 = vadd.f32 %v2669, %v2672
        %vm2674 = vweird.f32 %v2098
        %vm2675 = vweird.f32 %v2669
        %vm2676 = vmor %vm2674, %vm2675
        %v2677 = vsel %vm2676, %v2669, %v2673
        %v2678 = vand.u32 2147483647, %v2098
        %vm2679 = vcmp.eq.f32.partialorder %v2678, 8.507059e+37
        %v2680 = vand.u32 %v2098, 2147483648
        %v2681 = vor.u32 1.1754944e-38, %v2680
        %v2682 = vsel %vm2679, %v2681, %v2677
        %v2683 = vrcp.pop %v2099
        %v2684 = vmul.f32 %v2099, %v2683
        %v2685 = vsub.f32 1.0, %v2684
        %v2686 = vmul.f32 %v2683, %v2685
        %v2687 = vadd.f32 %v2683, %v2686
        %vm2688 = vweird.f32 %v2099
        %vm2689 = vweird.f32 %v2683
        %vm2690 = vmor %vm2688, %vm2689
        %v2691 = vsel %vm2690, %v2683, %v2687
        %v2692 = vand.u32 2147483647, %v2099
        %vm2693 = vcmp.eq.f32.partialorder %v2692, 8.507059e+37
        %v2694 = vand.u32 %v2099, 2147483648
        %v2695 = vor.u32 1.1754944e-38, %v2694
        %v2696 = vsel %vm2693, %v2695, %v2691
        %v2697 = vrcp.pop %v2100
        %v2698 = vmul.f32 %v2100, %v2697
        %v2699 = vsub.f32 1.0, %v2698
        %v2700 = vmul.f32 %v2697, %v2699
        %v2701 = vadd.f32 %v2697, %v2700
        %vm2702 = vweird.f32 %v2100
        %vm2703 = vweird.f32 %v2697
        %vm2704 = vmor %vm2702, %vm2703
        %v2705 = vsel %vm2704, %v2697, %v2701
        %v2706 = vand.u32 2147483647, %v2100
        %vm2707 = vcmp.eq.f32.partialorder %v2706, 8.507059e+37
        %v2708 = vand.u32 %v2100, 2147483648
        %v2709 = vor.u32 1.1754944e-38, %v2708
        %v2710 = vsel %vm2707, %v2709, %v2705
        %v2711 = vrcp.pop %v2101
        %v2712 = vmul.f32 %v2101, %v2711
        %v2713 = vsub.f32 1.0, %v2712
        %v2714 = vmul.f32 %v2711, %v2713
        %v2715 = vadd.f32 %v2711, %v2714
        %vm2716 = vweird.f32 %v2101
        %vm2717 = vweird.f32 %v2711
        %vm2718 = vmor %vm2716, %vm2717
        %v2719 = vsel %vm2718, %v2711, %v2715
        %v2720 = vand.u32 2147483647, %v2101
        %vm2721 = vcmp.eq.f32.partialorder %v2720, 8.507059e+37
        %v2722 = vand.u32 %v2101, 2147483648
        %v2723 = vor.u32 1.1754944e-38, %v2722
        %v2724 = vsel %vm2721, %v2723, %v2719
        %v2725 = vrcp.pop %v2102
        %v2726 = vmul.f32 %v2102, %v2725
        %v2727 = vsub.f32 1.0, %v2726
        %v2728 = vmul.f32 %v2725, %v2727
        %v2729 = vadd.f32 %v2725, %v2728
        %vm2730 = vweird.f32 %v2102
        %vm2731 = vweird.f32 %v2725
        %vm2732 = vmor %vm2730, %vm2731
        %v2733 = vsel %vm2732, %v2725, %v2729
        %v2734 = vand.u32 2147483647, %v2102
        %vm2735 = vcmp.eq.f32.partialorder %v2734, 8.507059e+37
        %v2736 = vand.u32 %v2102, 2147483648
        %v2737 = vor.u32 1.1754944e-38, %v2736
        %v2738 = vsel %vm2735, %v2737, %v2733
        %v2739 = vrcp.pop %v2103
        %v2740 = vmul.f32 %v2103, %v2739
        %v2741 = vsub.f32 1.0, %v2740
        %v2742 = vmul.f32 %v2739, %v2741
        %v2743 = vadd.f32 %v2739, %v2742
        %vm2744 = vweird.f32 %v2103
        %vm2745 = vweird.f32 %v2739
        %vm2746 = vmor %vm2744, %vm2745
        %v2747 = vsel %vm2746, %v2739, %v2743
        %v2748 = vand.u32 2147483647, %v2103
        %vm2749 = vcmp.eq.f32.partialorder %v2748, 8.507059e+37
        %v2750 = vand.u32 %v2103, 2147483648
        %v2751 = vor.u32 1.1754944e-38, %v2750
        %v2752 = vsel %vm2749, %v2751, %v2747
        %v2753 = vrcp.pop %v2104
        %v2754 = vmul.f32 %v2104, %v2753
        %v2755 = vsub.f32 1.0, %v2754
        %v2756 = vmul.f32 %v2753, %v2755
        %v2757 = vadd.f32 %v2753, %v2756
        %vm2758 = vweird.f32 %v2104
        %vm2759 = vweird.f32 %v2753
        %vm2760 = vmor %vm2758, %vm2759
        %v2761 = vsel %vm2760, %v2753, %v2757
        %v2762 = vand.u32 2147483647, %v2104
        %vm2763 = vcmp.eq.f32.partialorder %v2762, 8.507059e+37
        %v2764 = vand.u32 %v2104, 2147483648
        %v2765 = vor.u32 1.1754944e-38, %v2764
        %v2766 = vsel %vm2763, %v2765, %v2761
        %v2767 = vrcp.pop %v2105
        %v2768 = vmul.f32 %v2105, %v2767
        %v2769 = vsub.f32 1.0, %v2768
        %v2770 = vmul.f32 %v2767, %v2769
        %v2771 = vadd.f32 %v2767, %v2770
        %vm2772 = vweird.f32 %v2105
        %vm2773 = vweird.f32 %v2767
        %vm2774 = vmor %vm2772, %vm2773
        %v2775 = vsel %vm2774, %v2767, %v2771
        %v2776 = vand.u32 2147483647, %v2105
        %vm2777 = vcmp.eq.f32.partialorder %v2776, 8.507059e+37
        %v2778 = vand.u32 %v2105, 2147483648
        %v2779 = vor.u32 1.1754944e-38, %v2778
        %v2780 = vsel %vm2777, %v2779, %v2775
        %v2781 = vrcp.pop %v2106
        %v2782 = vmul.f32 %v2106, %v2781
        %v2783 = vsub.f32 1.0, %v2782
        %v2784 = vmul.f32 %v2781, %v2783
        %v2785 = vadd.f32 %v2781, %v2784
        %vm2786 = vweird.f32 %v2106
        %vm2787 = vweird.f32 %v2781
        %vm2788 = vmor %vm2786, %vm2787
        %v2789 = vsel %vm2788, %v2781, %v2785
        %v2790 = vand.u32 2147483647, %v2106
        %vm2791 = vcmp.eq.f32.partialorder %v2790, 8.507059e+37
        %v2792 = vand.u32 %v2106, 2147483648
        %v2793 = vor.u32 1.1754944e-38, %v2792
        %v2794 = vsel %vm2791, %v2793, %v2789
        %v2795 = vrcp.pop %v2107
        %v2796 = vmul.f32 %v2107, %v2795
        %v2797 = vsub.f32 1.0, %v2796
        %v2798 = vmul.f32 %v2795, %v2797
        %v2799 = vadd.f32 %v2795, %v2798
        %vm2800 = vweird.f32 %v2107
        %vm2801 = vweird.f32 %v2795
        %vm2802 = vmor %vm2800, %vm2801
        %v2803 = vsel %vm2802, %v2795, %v2799
        %v2804 = vand.u32 2147483647, %v2107
        %vm2805 = vcmp.eq.f32.partialorder %v2804, 8.507059e+37
        %v2806 = vand.u32 %v2107, 2147483648
        %v2807 = vor.u32 1.1754944e-38, %v2806
        %v2808 = vsel %vm2805, %v2807, %v2803
        %v2809 = vrcp.pop %v2108
        %v2810 = vmul.f32 %v2108, %v2809
        %v2811 = vsub.f32 1.0, %v2810
        %v2812 = vmul.f32 %v2809, %v2811
        %v2813 = vadd.f32 %v2809, %v2812
        %vm2814 = vweird.f32 %v2108
        %vm2815 = vweird.f32 %v2809
        %vm2816 = vmor %vm2814, %vm2815
        %v2817 = vsel %vm2816, %v2809, %v2813
        %v2818 = vand.u32 2147483647, %v2108
        %vm2819 = vcmp.eq.f32.partialorder %v2818, 8.507059e+37
        %v2820 = vand.u32 %v2108, 2147483648
        %v2821 = vor.u32 1.1754944e-38, %v2820
        %v2822 = vsel %vm2819, %v2821, %v2817
        %v2823 = vrcp.pop %v2109
        %v2824 = vmul.f32 %v2109, %v2823
        %v2825 = vsub.f32 1.0, %v2824
        %v2826 = vmul.f32 %v2823, %v2825
        %v2827 = vadd.f32 %v2823, %v2826
        %vm2828 = vweird.f32 %v2109
        %vm2829 = vweird.f32 %v2823
        %vm2830 = vmor %vm2828, %vm2829
        %v2831 = vsel %vm2830, %v2823, %v2827
        %v2832 = vand.u32 2147483647, %v2109
        %vm2833 = vcmp.eq.f32.partialorder %v2832, 8.507059e+37
        %v2834 = vand.u32 %v2109, 2147483648
        %v2835 = vor.u32 1.1754944e-38, %v2834
        %v2836 = vsel %vm2833, %v2835, %v2831
        %v2837 = vrcp.pop %v2110
        %v2838 = vmul.f32 %v2110, %v2837
        %v2839 = vsub.f32 1.0, %v2838
        %v2840 = vmul.f32 %v2837, %v2839
        %v2841 = vadd.f32 %v2837, %v2840
        %vm2842 = vweird.f32 %v2110
        %vm2843 = vweird.f32 %v2837
        %vm2844 = vmor %vm2842, %vm2843
        %v2845 = vsel %vm2844, %v2837, %v2841
        %v2846 = vand.u32 2147483647, %v2110
        %vm2847 = vcmp.eq.f32.partialorder %v2846, 8.507059e+37
        %v2848 = vand.u32 %v2110, 2147483648
        %v2849 = vor.u32 1.1754944e-38, %v2848
        %v2850 = vsel %vm2847, %v2849, %v2845
        %v2851 = vrcp.pop %v2111
        %v2852 = vmul.f32 %v2111, %v2851
        %v2853 = vsub.f32 1.0, %v2852
        %v2854 = vmul.f32 %v2851, %v2853
        %v2855 = vadd.f32 %v2851, %v2854
        %vm2856 = vweird.f32 %v2111
        %vm2857 = vweird.f32 %v2851
        %vm2858 = vmor %vm2856, %vm2857
        %v2859 = vsel %vm2858, %v2851, %v2855
        %v2860 = vand.u32 2147483647, %v2111
        %vm2861 = vcmp.eq.f32.partialorder %v2860, 8.507059e+37
        %v2862 = vand.u32 %v2111, 2147483648
        %v2863 = vor.u32 1.1754944e-38, %v2862
        %v2864 = vsel %vm2861, %v2863, %v2859
        %v2865 = vrcp.pop %v2112
        %v2866 = vmul.f32 %v2112, %v2865
        %v2867 = vsub.f32 1.0, %v2866
        %v2868 = vmul.f32 %v2865, %v2867
        %v2869 = vadd.f32 %v2865, %v2868
        %vm2870 = vweird.f32 %v2112
        %vm2871 = vweird.f32 %v2865
        %vm2872 = vmor %vm2870, %vm2871
        %v2873 = vsel %vm2872, %v2865, %v2869
        %v2874 = vand.u32 2147483647, %v2112
        %vm2875 = vcmp.eq.f32.partialorder %v2874, 8.507059e+37
        %v2876 = vand.u32 %v2112, 2147483648
        %v2877 = vor.u32 1.1754944e-38, %v2876
        %v2878 = vsel %vm2875, %v2877, %v2873
        %v2879 = vrcp.pop %v2113
        %v2880 = vmul.f32 %v2113, %v2879
        %v2881 = vsub.f32 1.0, %v2880
        %v2882 = vmul.f32 %v2879, %v2881
        %v2883 = vadd.f32 %v2879, %v2882
        %vm2884 = vweird.f32 %v2113
        %vm2885 = vweird.f32 %v2879
        %vm2886 = vmor %vm2884, %vm2885
        %v2887 = vsel %vm2886, %v2879, %v2883
        %v2888 = vand.u32 2147483647, %v2113
        %vm2889 = vcmp.eq.f32.partialorder %v2888, 8.507059e+37
        %v2890 = vand.u32 %v2113, 2147483648
        %v2891 = vor.u32 1.1754944e-38, %v2890
        %v2892 = vsel %vm2889, %v2891, %v2887
        %v2893 = vrcp.pop %v2114
        %v2894 = vmul.f32 %v2114, %v2893
        %v2895 = vsub.f32 1.0, %v2894
        %v2896 = vmul.f32 %v2893, %v2895
        %v2897 = vadd.f32 %v2893, %v2896
        %vm2898 = vweird.f32 %v2114
        %vm2899 = vweird.f32 %v2893
        %vm2900 = vmor %vm2898, %vm2899
        %v2901 = vsel %vm2900, %v2893, %v2897
        %v2902 = vand.u32 2147483647, %v2114
        %vm2903 = vcmp.eq.f32.partialorder %v2902, 8.507059e+37
        %v2904 = vand.u32 %v2114, 2147483648
        %v2905 = vor.u32 1.1754944e-38, %v2904
        %v2906 = vsel %vm2903, %v2905, %v2901
        %v2907 = vrcp.pop %v2115
        %v2908 = vmul.f32 %v2115, %v2907
        %v2909 = vsub.f32 1.0, %v2908
        %v2910 = vmul.f32 %v2907, %v2909
        %v2911 = vadd.f32 %v2907, %v2910
        %vm2912 = vweird.f32 %v2115
        %vm2913 = vweird.f32 %v2907
        %vm2914 = vmor %vm2912, %vm2913
        %v2915 = vsel %vm2914, %v2907, %v2911
        %v2916 = vand.u32 2147483647, %v2115
        %vm2917 = vcmp.eq.f32.partialorder %v2916, 8.507059e+37
        %v2918 = vand.u32 %v2115, 2147483648
        %v2919 = vor.u32 1.1754944e-38, %v2918
        %v2920 = vsel %vm2917, %v2919, %v2915
        %v2921 = vrcp.pop %v2116
        %v2922 = vmul.f32 %v2116, %v2921
        %v2923 = vsub.f32 1.0, %v2922
        %v2924 = vmul.f32 %v2921, %v2923
        %v2925 = vadd.f32 %v2921, %v2924
        %vm2926 = vweird.f32 %v2116
        %vm2927 = vweird.f32 %v2921
        %vm2928 = vmor %vm2926, %vm2927
        %v2929 = vsel %vm2928, %v2921, %v2925
        %v2930 = vand.u32 2147483647, %v2116
        %vm2931 = vcmp.eq.f32.partialorder %v2930, 8.507059e+37
        %v2932 = vand.u32 %v2116, 2147483648
        %v2933 = vor.u32 1.1754944e-38, %v2932
        %v2934 = vsel %vm2931, %v2933, %v2929
        %v2935 = vrcp.pop %v2117
        %v2936 = vmul.f32 %v2117, %v2935
        %v2937 = vsub.f32 1.0, %v2936
        %v2938 = vmul.f32 %v2935, %v2937
        %v2939 = vadd.f32 %v2935, %v2938
        %vm2940 = vweird.f32 %v2117
        %vm2941 = vweird.f32 %v2935
        %vm2942 = vmor %vm2940, %vm2941
        %v2943 = vsel %vm2942, %v2935, %v2939
        %v2944 = vand.u32 2147483647, %v2117
        %vm2945 = vcmp.eq.f32.partialorder %v2944, 8.507059e+37
        %v2946 = vand.u32 %v2117, 2147483648
        %v2947 = vor.u32 1.1754944e-38, %v2946
        %v2948 = vsel %vm2945, %v2947, %v2943
        %v2949 = vrcp.pop %v2118
        %v2950 = vmul.f32 %v2118, %v2949
        %v2951 = vsub.f32 1.0, %v2950
        %v2952 = vmul.f32 %v2949, %v2951
        %v2953 = vadd.f32 %v2949, %v2952
        %vm2954 = vweird.f32 %v2118
        %vm2955 = vweird.f32 %v2949
        %vm2956 = vmor %vm2954, %vm2955
        %v2957 = vsel %vm2956, %v2949, %v2953
        %v2958 = vand.u32 2147483647, %v2118
        %vm2959 = vcmp.eq.f32.partialorder %v2958, 8.507059e+37
        %v2960 = vand.u32 %v2118, 2147483648
        %v2961 = vor.u32 1.1754944e-38, %v2960
        %v2962 = vsel %vm2959, %v2961, %v2957
        %v2963 = vrcp.pop %v2119
        %v2964 = vmul.f32 %v2119, %v2963
        %v2965 = vsub.f32 1.0, %v2964
        %v2966 = vmul.f32 %v2963, %v2965
        %v2967 = vadd.f32 %v2963, %v2966
        %vm2968 = vweird.f32 %v2119
        %vm2969 = vweird.f32 %v2963
        %vm2970 = vmor %vm2968, %vm2969
        %v2971 = vsel %vm2970, %v2963, %v2967
        %v2972 = vand.u32 2147483647, %v2119
        %vm2973 = vcmp.eq.f32.partialorder %v2972, 8.507059e+37
        %v2974 = vand.u32 %v2119, 2147483648
        %v2975 = vor.u32 1.1754944e-38, %v2974
        %v2976 = vsel %vm2973, %v2975, %v2971
        %v2977 = vrcp.pop %v2120
        %v2978 = vmul.f32 %v2120, %v2977
        %v2979 = vsub.f32 1.0, %v2978
        %v2980 = vmul.f32 %v2977, %v2979
        %v2981 = vadd.f32 %v2977, %v2980
        %vm2982 = vweird.f32 %v2120
        %vm2983 = vweird.f32 %v2977
        %vm2984 = vmor %vm2982, %vm2983
        %v2985 = vsel %vm2984, %v2977, %v2981
        %v2986 = vand.u32 2147483647, %v2120
        %vm2987 = vcmp.eq.f32.partialorder %v2986, 8.507059e+37
        %v2988 = vand.u32 %v2120, 2147483648
        %v2989 = vor.u32 1.1754944e-38, %v2988
        %v2990 = vsel %vm2987, %v2989, %v2985
        %v2991 = vrcp.pop %v2121
        %v2992 = vmul.f32 %v2121, %v2991
        %v2993 = vsub.f32 1.0, %v2992
        %v2994 = vmul.f32 %v2991, %v2993
        %v2995 = vadd.f32 %v2991, %v2994
        %vm2996 = vweird.f32 %v2121
        %vm2997 = vweird.f32 %v2991
        %vm2998 = vmor %vm2996, %vm2997
        %v2999 = vsel %vm2998, %v2991, %v2995
        %v3000 = vand.u32 2147483647, %v2121
        %vm3001 = vcmp.eq.f32.partialorder %v3000, 8.507059e+37
        %v3002 = vand.u32 %v2121, 2147483648
        %v3003 = vor.u32 1.1754944e-38, %v3002
        %v3004 = vsel %vm3001, %v3003, %v2999
        %v3005 = vrcp.pop %v2122
        %v3006 = vmul.f32 %v2122, %v3005
        %v3007 = vsub.f32 1.0, %v3006
        %v3008 = vmul.f32 %v3005, %v3007
        %v3009 = vadd.f32 %v3005, %v3008
        %vm3010 = vweird.f32 %v2122
        %vm3011 = vweird.f32 %v3005
        %vm3012 = vmor %vm3010, %vm3011
        %v3013 = vsel %vm3012, %v3005, %v3009
        %v3014 = vand.u32 2147483647, %v2122
        %vm3015 = vcmp.eq.f32.partialorder %v3014, 8.507059e+37
        %v3016 = vand.u32 %v2122, 2147483648
        %v3017 = vor.u32 1.1754944e-38, %v3016
        %v3018 = vsel %vm3015, %v3017, %v3013
        %vm3019 = vcmask 7168
        %3020 = vst.msk [vmem:[%s259] sm:$0xff] %vm3019, %v907
        %3021 = vst.msk [vmem:[%s259 + $0x8] sm:$0xff] %vm3019, %v908
        %3022 = vst.msk [vmem:[%s259 + $0x10] sm:$0xff] %vm3019, %v909
        %3023 = vst.msk [vmem:[%s259 + $0x18] sm:$0xff] %vm3019, %v910
        %3024 = vst.msk [vmem:[%s259 + $0x20] sm:$0xff] %vm3019, %v911
        %3025 = vst.msk [vmem:[%s259 + $0x28] sm:$0xff] %vm3019, %v912
        %3026 = vst.msk [vmem:[%s259 + $0x30] sm:$0xff] %vm3019, %v913
        %3027 = vst.msk [vmem:[%s259 + $0x38] sm:$0xff] %vm3019, %v914
        %3028 = vst.msk [vmem:[%s259 + $0x40] sm:$0xff] %vm3019, %v915
        %3029 = vst.msk [vmem:[%s259 + $0x48] sm:$0xff] %vm3019, %v916
        %3030 = vst.msk [vmem:[%s259 + $0x50] sm:$0xff] %vm3019, %v917
        %3031 = vst.msk [vmem:[%s259 + $0x58] sm:$0xff] %vm3019, %v918
        %3032 = vst.msk [vmem:[%s259 + $0x60] sm:$0xff] %vm3019, %v919
        %3033 = vst.msk [vmem:[%s259 + $0x68] sm:$0xff] %vm3019, %v920
        %3034 = vst.msk [vmem:[%s259 + $0x70] sm:$0xff] %vm3019, %v921
        %3035 = vst.msk [vmem:[%s259 + $0x78] sm:$0xff] %vm3019, %v922
        %3036 = vst.msk [vmem:[%s259 + $0x80] sm:$0xff] %vm3019, %v923
        %3037 = vst.msk [vmem:[%s259 + $0x88] sm:$0xff] %vm3019, %v924
        %3038 = vst.msk [vmem:[%s259 + $0x90] sm:$0xff] %vm3019, %v925
        %3039 = vst.msk [vmem:[%s259 + $0x98] sm:$0xff] %vm3019, %v926
        %3040 = vst.msk [vmem:[%s259 + $0xa0] sm:$0xff] %vm3019, %v927
        %3041 = vst.msk [vmem:[%s259 + $0xa8] sm:$0xff] %vm3019, %v928
        %3042 = vst.msk [vmem:[%s259 + $0xb0] sm:$0xff] %vm3019, %v929
        %3043 = vst.msk [vmem:[%s259 + $0xb8] sm:$0xff] %vm3019, %v930
        %3044 = vst.msk [vmem:[%s259 + $0xc0] sm:$0xff] %vm3019, %v931
        %3045 = vst.msk [vmem:[%s259 + $0xc8] sm:$0xff] %vm3019, %v932
        %3046 = vst.msk [vmem:[%s259 + $0xd0] sm:$0xff] %vm3019, %v933
        %3047 = vst.msk [vmem:[%s259 + $0xd8] sm:$0xff] %vm3019, %v934
        %3048 = vst.msk [vmem:[%s259 + $0xe0] sm:$0xff] %vm3019, %v935
        %3049 = vst.msk [vmem:[%s259 + $0xe8] sm:$0xff] %vm3019, %v936
        %3050 = vst.msk [vmem:[%s259 + $0xf0] sm:$0xff] %vm3019, %v937
        %3051 = vst.msk [vmem:[%s259 + $0xf8] sm:$0xff] %vm3019, %v938
        %3052 = vst.msk [vmem:[%s259 + $0x100] sm:$0xff] %vm3019, %v939
        %3053 = vst.msk [vmem:[%s259 + $0x108] sm:$0xff] %vm3019, %v940
        %3054 = vst.msk [vmem:[%s259 + $0x110] sm:$0xff] %vm3019, %v941
        %3055 = vst.msk [vmem:[%s259 + $0x118] sm:$0xff] %vm3019, %v942
        %3056 = vst.msk [vmem:[%s259 + $0x120] sm:$0xff] %vm3019, %v943
        %3057 = vst.msk [vmem:[%s259 + $0x128] sm:$0xff] %vm3019, %v944
        %3058 = vst.msk [vmem:[%s259 + $0x130] sm:$0xff] %vm3019, %v945
        %3059 = vst.msk [vmem:[%s259 + $0x138] sm:$0xff] %vm3019, %v946
        %3060 = vst.msk [vmem:[%s259 + $0x140] sm:$0xff] %vm3019, %v947
        %3061 = vst.msk [vmem:[%s259 + $0x148] sm:$0xff] %vm3019, %v948
        %3062 = vst.msk [vmem:[%s259 + $0x150] sm:$0xff] %vm3019, %v949
        %3063 = vst.msk [vmem:[%s259 + $0x158] sm:$0xff] %vm3019, %v950
        %3064 = vst.msk [vmem:[%s259 + $0x160] sm:$0xff] %vm3019, %v951
        %3065 = vst.msk [vmem:[%s259 + $0x168] sm:$0xff] %vm3019, %v952
        %3066 = vst.msk [vmem:[%s259 + $0x170] sm:$0xff] %vm3019, %v953
        %3067 = vst.msk [vmem:[%s259 + $0x178] sm:$0xff] %vm3019, %v954
        %3068 = vst.msk [vmem:[%s259 + $0x180] sm:$0xff] %vm3019, %v955
        %3069 = vst.msk [vmem:[%s259 + $0x188] sm:$0xff] %vm3019, %v956
        %3070 = vst.msk [vmem:[%s259 + $0x190] sm:$0xff] %vm3019, %v957
        %3071 = vst.msk [vmem:[%s259 + $0x198] sm:$0xff] %vm3019, %v958
        %3072 = vst.msk [vmem:[%s259 + $0x1a0] sm:$0xff] %vm3019, %v959
        %3073 = vst.msk [vmem:[%s259 + $0x1a8] sm:$0xff] %vm3019, %v960
        %3074 = vst.msk [vmem:[%s259 + $0x1b0] sm:$0xff] %vm3019, %v961
        %3075 = vst.msk [vmem:[%s259 + $0x1b8] sm:$0xff] %vm3019, %v962
        %3076 = vst.msk [vmem:[%s259 + $0x1c0] sm:$0xff] %vm3019, %v963
        %3077 = vst.msk [vmem:[%s259 + $0x1c8] sm:$0xff] %vm3019, %v964
        %3078 = vst.msk [vmem:[%s259 + $0x1d0] sm:$0xff] %vm3019, %v965
        %3079 = vst.msk [vmem:[%s259 + $0x1d8] sm:$0xff] %vm3019, %v966
        %3080 = vst.msk [vmem:[%s259 + $0x1e0] sm:$0xff] %vm3019, %v967
        %3081 = vst.msk [vmem:[%s259 + $0x1e8] sm:$0xff] %vm3019, %v968
        %3082 = vst.msk [vmem:[%s259 + $0x1f0] sm:$0xff] %vm3019, %v969
        %3083 = vst.msk [vmem:[%s259 + $0x1f8] sm:$0xff] %vm3019, %v970
        %v3084 = vmul.f32 %v1484, %v2136
        %v3085 = vmul.f32 %v1486, %v2150
        %v3086 = vmul.f32 %v1488, %v2164
        %v3087 = vmul.f32 %v1490, %v2178
        %v3088 = vmul.f32 %v1492, %v2192
        %v3089 = vmul.f32 %v1494, %v2206
        %v3090 = vmul.f32 %v1496, %v2220
        %v3091 = vmul.f32 %v1498, %v2234
        %v3092 = vmul.f32 %v1500, %v2248
        %v3093 = vmul.f32 %v1502, %v2262
        %v3094 = vmul.f32 %v1504, %v2276
        %v3095 = vmul.f32 %v1506, %v2290
        %v3096 = vmul.f32 %v1508, %v2304
        %v3097 = vmul.f32 %v1510, %v2318
        %v3098 = vmul.f32 %v1512, %v2332
        %v3099 = vmul.f32 %v1514, %v2346
        %v3100 = vmul.f32 %v1516, %v2360
        %v3101 = vmul.f32 %v1518, %v2374
        %v3102 = vmul.f32 %v1520, %v2388
        %v3103 = vmul.f32 %v1522, %v2402
        %v3104 = vmul.f32 %v1524, %v2416
        %v3105 = vmul.f32 %v1526, %v2430
        %v3106 = vmul.f32 %v1528, %v2444
        %v3107 = vmul.f32 %v1530, %v2458
        %v3108 = vmul.f32 %v1532, %v2472
        %v3109 = vmul.f32 %v1534, %v2486
        %v3110 = vmul.f32 %v1536, %v2500
        %v3111 = vmul.f32 %v1538, %v2514
        %v3112 = vmul.f32 %v1540, %v2528
        %v3113 = vmul.f32 %v1542, %v2542
        %v3114 = vmul.f32 %v1544, %v2556
        %v3115 = vmul.f32 %v1546, %v2570
        %v3116 = vmul.f32 %v1548, %v2584
        %v3117 = vmul.f32 %v1550, %v2598
        %v3118 = vmul.f32 %v1552, %v2612
        %v3119 = vmul.f32 %v1554, %v2626
        %v3120 = vmul.f32 %v1556, %v2640
        %v3121 = vmul.f32 %v1558, %v2654
        %v3122 = vmul.f32 %v1560, %v2668
        %v3123 = vmul.f32 %v1562, %v2682
        %v3124 = vmul.f32 %v1564, %v2696
        %v3125 = vmul.f32 %v1566, %v2710
        %v3126 = vmul.f32 %v1568, %v2724
        %v3127 = vmul.f32 %v1570, %v2738
        %v3128 = vmul.f32 %v1572, %v2752
        %v3129 = vmul.f32 %v1574, %v2766
        %v3130 = vmul.f32 %v1576, %v2780
        %v3131 = vmul.f32 %v1578, %v2794
        %v3132 = vmul.f32 %v1580, %v2808
        %v3133 = vmul.f32 %v1582, %v2822
        %v3134 = vmul.f32 %v1584, %v2836
        %v3135 = vmul.f32 %v1586, %v2850
        %v3136 = vmul.f32 %v1588, %v2864
        %v3137 = vmul.f32 %v1590, %v2878
        %v3138 = vmul.f32 %v1592, %v2892
        %v3139 = vmul.f32 %v1594, %v2906
        %v3140 = vmul.f32 %v1596, %v2920
        %v3141 = vmul.f32 %v1598, %v2934
        %v3142 = vmul.f32 %v1600, %v2948
        %v3143 = vmul.f32 %v1602, %v2962
        %v3144 = vmul.f32 %v1604, %v2976
        %v3145 = vmul.f32 %v1606, %v2990
        %v3146 = vmul.f32 %v1608, %v3004
        %v3147 = vmul.f32 %v1610, %v3018
        %3212 = vrot.lane.b32.xlu0 %v3084, 1
        %v3213 = vpop.permute.xlu0 %3212
        %3214 = vrot.lane.b32.xlu0 %v3085, 1
        %v3215 = vpop.permute.xlu0 %3214
        %3216 = vrot.lane.b32.xlu0 %v3086, 1
        %v3217 = vpop.permute.xlu0 %3216
        %3218 = vrot.lane.b32.xlu0 %v3087, 1
        %v3219 = vpop.permute.xlu0 %3218
        %3220 = vrot.lane.b32.xlu0 %v3088, 1
        %v3221 = vpop.permute.xlu0 %3220
        %3222 = vrot.lane.b32.xlu0 %v3089, 1
        %v3223 = vpop.permute.xlu0 %3222
        %3224 = vrot.lane.b32.xlu0 %v3090, 1
        %v3225 = vpop.permute.xlu0 %3224
        %3226 = vrot.lane.b32.xlu0 %v3091, 1
        %v3227 = vpop.permute.xlu0 %3226
        %3228 = vrot.lane.b32.xlu0 %v3092, 1
        %v3229 = vpop.permute.xlu0 %3228
        %3230 = vrot.lane.b32.xlu0 %v3093, 1
        %v3231 = vpop.permute.xlu0 %3230
        %3232 = vrot.lane.b32.xlu0 %v3094, 1
        %v3233 = vpop.permute.xlu0 %3232
        %3234 = vrot.lane.b32.xlu0 %v3095, 1
        %v3235 = vpop.permute.xlu0 %3234
        %3236 = vrot.lane.b32.xlu0 %v3096, 1
        %v3237 = vpop.permute.xlu0 %3236
        %3238 = vrot.lane.b32.xlu0 %v3097, 1
        %v3239 = vpop.permute.xlu0 %3238
        %3240 = vrot.lane.b32.xlu0 %v3098, 1
        %v3241 = vpop.permute.xlu0 %3240
        %3242 = vrot.lane.b32.xlu0 %v3099, 1
        %v3243 = vpop.permute.xlu0 %3242
        %3244 = vrot.lane.b32.xlu0 %v3100, 1
        %v3245 = vpop.permute.xlu0 %3244
        %3246 = vrot.lane.b32.xlu0 %v3101, 1
        %v3247 = vpop.permute.xlu0 %3246
        %3248 = vrot.lane.b32.xlu0 %v3102, 1
        %v3249 = vpop.permute.xlu0 %3248
        %3250 = vrot.lane.b32.xlu0 %v3103, 1
        %v3251 = vpop.permute.xlu0 %3250
        %3252 = vrot.lane.b32.xlu0 %v3104, 1
        %v3253 = vpop.permute.xlu0 %3252
        %3254 = vrot.lane.b32.xlu0 %v3105, 1
        %v3255 = vpop.permute.xlu0 %3254
        %3256 = vrot.lane.b32.xlu0 %v3106, 1
        %v3257 = vpop.permute.xlu0 %3256
        %3258 = vrot.lane.b32.xlu0 %v3107, 1
        %v3259 = vpop.permute.xlu0 %3258
        %3260 = vrot.lane.b32.xlu0 %v3108, 1
        %v3261 = vpop.permute.xlu0 %3260
        %3262 = vrot.lane.b32.xlu0 %v3109, 1
        %v3263 = vpop.permute.xlu0 %3262
        %3264 = vrot.lane.b32.xlu0 %v3110, 1
        %v3265 = vpop.permute.xlu0 %3264
        %3266 = vrot.lane.b32.xlu0 %v3111, 1
        %v3267 = vpop.permute.xlu0 %3266
        %3268 = vrot.lane.b32.xlu0 %v3112, 1
        %v3269 = vpop.permute.xlu0 %3268
        %3270 = vrot.lane.b32.xlu0 %v3113, 1
        %v3271 = vpop.permute.xlu0 %3270
        %3272 = vrot.lane.b32.xlu0 %v3114, 1
        %v3273 = vpop.permute.xlu0 %3272
        %3274 = vrot.lane.b32.xlu0 %v3115, 1
        %v3275 = vpop.permute.xlu0 %3274
        %3276 = vrot.lane.b32.xlu0 %v3116, 1
        %v3277 = vpop.permute.xlu0 %3276
        %3278 = vrot.lane.b32.xlu0 %v3117, 1
        %v3279 = vpop.permute.xlu0 %3278
        %3280 = vrot.lane.b32.xlu0 %v3118, 1
        %v3281 = vpop.permute.xlu0 %3280
        %3282 = vrot.lane.b32.xlu0 %v3119, 1
        %v3283 = vpop.permute.xlu0 %3282
        %3284 = vrot.lane.b32.xlu0 %v3120, 1
        %v3285 = vpop.permute.xlu0 %3284
        %3286 = vrot.lane.b32.xlu0 %v3121, 1
        %v3287 = vpop.permute.xlu0 %3286
        %3288 = vrot.lane.b32.xlu0 %v3122, 1
        %v3289 = vpop.permute.xlu0 %3288
        %3290 = vrot.lane.b32.xlu0 %v3123, 1
        %v3291 = vpop.permute.xlu0 %3290
        %3292 = vrot.lane.b32.xlu0 %v3124, 1
        %v3293 = vpop.permute.xlu0 %3292
        %3294 = vrot.lane.b32.xlu0 %v3125, 1
        %v3295 = vpop.permute.xlu0 %3294
        %3296 = vrot.lane.b32.xlu0 %v3126, 1
        %v3297 = vpop.permute.xlu0 %3296
        %3298 = vrot.lane.b32.xlu0 %v3127, 1
        %v3299 = vpop.permute.xlu0 %3298
        %3300 = vrot.lane.b32.xlu0 %v3128, 1
        %v3301 = vpop.permute.xlu0 %3300
        %3302 = vrot.lane.b32.xlu0 %v3129, 1
        %v3303 = vpop.permute.xlu0 %3302
        %3304 = vrot.lane.b32.xlu0 %v3130, 1
        %v3305 = vpop.permute.xlu0 %3304
        %3306 = vrot.lane.b32.xlu0 %v3131, 1
        %v3307 = vpop.permute.xlu0 %3306
        %3308 = vrot.lane.b32.xlu0 %v3132, 1
        %v3309 = vpop.permute.xlu0 %3308
        %3310 = vrot.lane.b32.xlu0 %v3133, 1
        %v3311 = vpop.permute.xlu0 %3310
        %3312 = vrot.lane.b32.xlu0 %v3134, 1
        %v3313 = vpop.permute.xlu0 %3312
        %3314 = vrot.lane.b32.xlu0 %v3135, 1
        %v3315 = vpop.permute.xlu0 %3314
        %3316 = vrot.lane.b32.xlu0 %v3136, 1
        %v3317 = vpop.permute.xlu0 %3316
        %3318 = vrot.lane.b32.xlu0 %v3137, 1
        %v3319 = vpop.permute.xlu0 %3318
        %3320 = vrot.lane.b32.xlu0 %v3138, 1
        %v3321 = vpop.permute.xlu0 %3320
        %3322 = vrot.lane.b32.xlu0 %v3139, 1
        %v3323 = vpop.permute.xlu0 %3322
        %3324 = vrot.lane.b32.xlu0 %v3140, 1
        %v3325 = vpop.permute.xlu0 %3324
        %3326 = vrot.lane.b32.xlu0 %v3141, 1
        %v3327 = vpop.permute.xlu0 %3326
        %3328 = vrot.lane.b32.xlu0 %v3142, 1
        %v3329 = vpop.permute.xlu0 %3328
        %3330 = vrot.lane.b32.xlu0 %v3143, 1
        %v3331 = vpop.permute.xlu0 %3330
        %3332 = vrot.lane.b32.xlu0 %v3144, 1
        %v3333 = vpop.permute.xlu0 %3332
        %3334 = vrot.lane.b32.xlu0 %v3145, 1
        %v3335 = vpop.permute.xlu0 %3334
        %3336 = vrot.lane.b32.xlu0 %v3146, 1
        %v3337 = vpop.permute.xlu0 %3336
        %3338 = vrot.lane.b32.xlu0 %v3147, 1
        %v3339 = vpop.permute.xlu0 %3338
        %vm3404 = vcmask 15368
        %3405 = vst.msk [vmem:[%s259] sm:$0xff] %vm3404, %v3213
        %3406 = vst.msk [vmem:[%s259 + $0x8] sm:$0xff] %vm3404, %v3215
        %3407 = vst.msk [vmem:[%s259 + $0x10] sm:$0xff] %vm3404, %v3217
        %3408 = vst.msk [vmem:[%s259 + $0x18] sm:$0xff] %vm3404, %v3219
        %3409 = vst.msk [vmem:[%s259 + $0x20] sm:$0xff] %vm3404, %v3221
        %3410 = vst.msk [vmem:[%s259 + $0x28] sm:$0xff] %vm3404, %v3223
        %3411 = vst.msk [vmem:[%s259 + $0x30] sm:$0xff] %vm3404, %v3225
        %3412 = vst.msk [vmem:[%s259 + $0x38] sm:$0xff] %vm3404, %v3227
        %3413 = vst.msk [vmem:[%s259 + $0x40] sm:$0xff] %vm3404, %v3229
        %3414 = vst.msk [vmem:[%s259 + $0x48] sm:$0xff] %vm3404, %v3231
        %3415 = vst.msk [vmem:[%s259 + $0x50] sm:$0xff] %vm3404, %v3233
        %3416 = vst.msk [vmem:[%s259 + $0x58] sm:$0xff] %vm3404, %v3235
        %3417 = vst.msk [vmem:[%s259 + $0x60] sm:$0xff] %vm3404, %v3237
        %3418 = vst.msk [vmem:[%s259 + $0x68] sm:$0xff] %vm3404, %v3239
        %3419 = vst.msk [vmem:[%s259 + $0x70] sm:$0xff] %vm3404, %v3241
        %3420 = vst.msk [vmem:[%s259 + $0x78] sm:$0xff] %vm3404, %v3243
        %3421 = vst.msk [vmem:[%s259 + $0x80] sm:$0xff] %vm3404, %v3245
        %3422 = vst.msk [vmem:[%s259 + $0x88] sm:$0xff] %vm3404, %v3247
        %3423 = vst.msk [vmem:[%s259 + $0x90] sm:$0xff] %vm3404, %v3249
        %3424 = vst.msk [vmem:[%s259 + $0x98] sm:$0xff] %vm3404, %v3251
        %3425 = vst.msk [vmem:[%s259 + $0xa0] sm:$0xff] %vm3404, %v3253
        %3426 = vst.msk [vmem:[%s259 + $0xa8] sm:$0xff] %vm3404, %v3255
        %3427 = vst.msk [vmem:[%s259 + $0xb0] sm:$0xff] %vm3404, %v3257
        %3428 = vst.msk [vmem:[%s259 + $0xb8] sm:$0xff] %vm3404, %v3259
        %3429 = vst.msk [vmem:[%s259 + $0xc0] sm:$0xff] %vm3404, %v3261
        %3430 = vst.msk [vmem:[%s259 + $0xc8] sm:$0xff] %vm3404, %v3263
        %3431 = vst.msk [vmem:[%s259 + $0xd0] sm:$0xff] %vm3404, %v3265
        %3432 = vst.msk [vmem:[%s259 + $0xd8] sm:$0xff] %vm3404, %v3267
        %3433 = vst.msk [vmem:[%s259 + $0xe0] sm:$0xff] %vm3404, %v3269
        %3434 = vst.msk [vmem:[%s259 + $0xe8] sm:$0xff] %vm3404, %v3271
        %3435 = vst.msk [vmem:[%s259 + $0xf0] sm:$0xff] %vm3404, %v3273
        %3436 = vst.msk [vmem:[%s259 + $0xf8] sm:$0xff] %vm3404, %v3275
        %3437 = vst.msk [vmem:[%s259 + $0x100] sm:$0xff] %vm3404, %v3277
        %3438 = vst.msk [vmem:[%s259 + $0x108] sm:$0xff] %vm3404, %v3279
        %3439 = vst.msk [vmem:[%s259 + $0x110] sm:$0xff] %vm3404, %v3281
        %3440 = vst.msk [vmem:[%s259 + $0x118] sm:$0xff] %vm3404, %v3283
        %3441 = vst.msk [vmem:[%s259 + $0x120] sm:$0xff] %vm3404, %v3285
        %3442 = vst.msk [vmem:[%s259 + $0x128] sm:$0xff] %vm3404, %v3287
        %3443 = vst.msk [vmem:[%s259 + $0x130] sm:$0xff] %vm3404, %v3289
        %3444 = vst.msk [vmem:[%s259 + $0x138] sm:$0xff] %vm3404, %v3291
        %3445 = vst.msk [vmem:[%s259 + $0x140] sm:$0xff] %vm3404, %v3293
        %3446 = vst.msk [vmem:[%s259 + $0x148] sm:$0xff] %vm3404, %v3295
        %3447 = vst.msk [vmem:[%s259 + $0x150] sm:$0xff] %vm3404, %v3297
        %3448 = vst.msk [vmem:[%s259 + $0x158] sm:$0xff] %vm3404, %v3299
        %3449 = vst.msk [vmem:[%s259 + $0x160] sm:$0xff] %vm3404, %v3301
        %3450 = vst.msk [vmem:[%s259 + $0x168] sm:$0xff] %vm3404, %v3303
        %3451 = vst.msk [vmem:[%s259 + $0x170] sm:$0xff] %vm3404, %v3305
        %3452 = vst.msk [vmem:[%s259 + $0x178] sm:$0xff] %vm3404, %v3307
        %3453 = vst.msk [vmem:[%s259 + $0x180] sm:$0xff] %vm3404, %v3309
        %3454 = vst.msk [vmem:[%s259 + $0x188] sm:$0xff] %vm3404, %v3311
        %3455 = vst.msk [vmem:[%s259 + $0x190] sm:$0xff] %vm3404, %v3313
        %3456 = vst.msk [vmem:[%s259 + $0x198] sm:$0xff] %vm3404, %v3315
        %3457 = vst.msk [vmem:[%s259 + $0x1a0] sm:$0xff] %vm3404, %v3317
        %3458 = vst.msk [vmem:[%s259 + $0x1a8] sm:$0xff] %vm3404, %v3319
        %3459 = vst.msk [vmem:[%s259 + $0x1b0] sm:$0xff] %vm3404, %v3321
        %3460 = vst.msk [vmem:[%s259 + $0x1b8] sm:$0xff] %vm3404, %v3323
        %3461 = vst.msk [vmem:[%s259 + $0x1c0] sm:$0xff] %vm3404, %v3325
        %3462 = vst.msk [vmem:[%s259 + $0x1c8] sm:$0xff] %vm3404, %v3327
        %3463 = vst.msk [vmem:[%s259 + $0x1d0] sm:$0xff] %vm3404, %v3329
        %3464 = vst.msk [vmem:[%s259 + $0x1d8] sm:$0xff] %vm3404, %v3331
        %3465 = vst.msk [vmem:[%s259 + $0x1e0] sm:$0xff] %vm3404, %v3333
        %3466 = vst.msk [vmem:[%s259 + $0x1e8] sm:$0xff] %vm3404, %v3335
        %3467 = vst.msk [vmem:[%s259 + $0x1f0] sm:$0xff] %vm3404, %v3337
        %3468 = vst.msk [vmem:[%s259 + $0x1f8] sm:$0xff] %vm3404, %v3339
        %v3469 = vmul.f32 %v1676, %v2136
        %v3470 = vmul.f32 %v1678, %v2150
        %v3471 = vmul.f32 %v1680, %v2164
        %v3472 = vmul.f32 %v1682, %v2178
        %v3473 = vmul.f32 %v1684, %v2192
        %v3474 = vmul.f32 %v1686, %v2206
        %v3475 = vmul.f32 %v1688, %v2220
        %v3476 = vmul.f32 %v1690, %v2234
        %v3477 = vmul.f32 %v1692, %v2248
        %v3478 = vmul.f32 %v1694, %v2262
        %v3479 = vmul.f32 %v1696, %v2276
        %v3480 = vmul.f32 %v1698, %v2290
        %v3481 = vmul.f32 %v1700, %v2304
        %v3482 = vmul.f32 %v1702, %v2318
        %v3483 = vmul.f32 %v1704, %v2332
        %v3484 = vmul.f32 %v1706, %v2346
        %v3485 = vmul.f32 %v1708, %v2360
        %v3486 = vmul.f32 %v1710, %v2374
        %v3487 = vmul.f32 %v1712, %v2388
        %v3488 = vmul.f32 %v1714, %v2402
        %v3489 = vmul.f32 %v1716, %v2416
        %v3490 = vmul.f32 %v1718, %v2430
        %v3491 = vmul.f32 %v1720, %v2444
        %v3492 = vmul.f32 %v1722, %v2458
        %v3493 = vmul.f32 %v1724, %v2472
        %v3494 = vmul.f32 %v1726, %v2486
        %v3495 = vmul.f32 %v1728, %v2500
        %v3496 = vmul.f32 %v1730, %v2514
        %v3497 = vmul.f32 %v1732, %v2528
        %v3498 = vmul.f32 %v1734, %v2542
        %v3499 = vmul.f32 %v1736, %v2556
        %v3500 = vmul.f32 %v1738, %v2570
        %v3501 = vmul.f32 %v1740, %v2584
        %v3502 = vmul.f32 %v1742, %v2598
        %v3503 = vmul.f32 %v1744, %v2612
        %v3504 = vmul.f32 %v1746, %v2626
        %v3505 = vmul.f32 %v1748, %v2640
        %v3506 = vmul.f32 %v1750, %v2654
        %v3507 = vmul.f32 %v1752, %v2668
        %v3508 = vmul.f32 %v1754, %v2682
        %v3509 = vmul.f32 %v1756, %v2696
        %v3510 = vmul.f32 %v1758, %v2710
        %v3511 = vmul.f32 %v1760, %v2724
        %v3512 = vmul.f32 %v1762, %v2738
        %v3513 = vmul.f32 %v1764, %v2752
        %v3514 = vmul.f32 %v1766, %v2766
        %v3515 = vmul.f32 %v1768, %v2780
        %v3516 = vmul.f32 %v1770, %v2794
        %v3517 = vmul.f32 %v1772, %v2808
        %v3518 = vmul.f32 %v1774, %v2822
        %v3519 = vmul.f32 %v1776, %v2836
        %v3520 = vmul.f32 %v1778, %v2850
        %v3521 = vmul.f32 %v1780, %v2864
        %v3522 = vmul.f32 %v1782, %v2878
        %v3523 = vmul.f32 %v1784, %v2892
        %v3524 = vmul.f32 %v1786, %v2906
        %v3525 = vmul.f32 %v1788, %v2920
        %v3526 = vmul.f32 %v1790, %v2934
        %v3527 = vmul.f32 %v1792, %v2948
        %v3528 = vmul.f32 %v1794, %v2962
        %v3529 = vmul.f32 %v1796, %v2976
        %v3530 = vmul.f32 %v1798, %v2990
        %v3531 = vmul.f32 %v1800, %v3004
        %v3532 = vmul.f32 %v1802, %v3018
        %3597 = vrot.lane.b32.xlu0 %v3469, 2
        %v3598 = vpop.permute.xlu0 %3597
        %3599 = vrot.lane.b32.xlu0 %v3470, 2
        %v3600 = vpop.permute.xlu0 %3599
        %3601 = vrot.lane.b32.xlu0 %v3471, 2
        %v3602 = vpop.permute.xlu0 %3601
        %3603 = vrot.lane.b32.xlu0 %v3472, 2
        %v3604 = vpop.permute.xlu0 %3603
        %3605 = vrot.lane.b32.xlu0 %v3473, 2
        %v3606 = vpop.permute.xlu0 %3605
        %3607 = vrot.lane.b32.xlu0 %v3474, 2
        %v3608 = vpop.permute.xlu0 %3607
        %3609 = vrot.lane.b32.xlu0 %v3475, 2
        %v3610 = vpop.permute.xlu0 %3609
        %3611 = vrot.lane.b32.xlu0 %v3476, 2
        %v3612 = vpop.permute.xlu0 %3611
        %3613 = vrot.lane.b32.xlu0 %v3477, 2
        %v3614 = vpop.permute.xlu0 %3613
        %3615 = vrot.lane.b32.xlu0 %v3478, 2
        %v3616 = vpop.permute.xlu0 %3615
        %3617 = vrot.lane.b32.xlu0 %v3479, 2
        %v3618 = vpop.permute.xlu0 %3617
        %3619 = vrot.lane.b32.xlu0 %v3480, 2
        %v3620 = vpop.permute.xlu0 %3619
        %3621 = vrot.lane.b32.xlu0 %v3481, 2
        %v3622 = vpop.permute.xlu0 %3621
        %3623 = vrot.lane.b32.xlu0 %v3482, 2
        %v3624 = vpop.permute.xlu0 %3623
        %3625 = vrot.lane.b32.xlu0 %v3483, 2
        %v3626 = vpop.permute.xlu0 %3625
        %3627 = vrot.lane.b32.xlu0 %v3484, 2
        %v3628 = vpop.permute.xlu0 %3627
        %3629 = vrot.lane.b32.xlu0 %v3485, 2
        %v3630 = vpop.permute.xlu0 %3629
        %3631 = vrot.lane.b32.xlu0 %v3486, 2
        %v3632 = vpop.permute.xlu0 %3631
        %3633 = vrot.lane.b32.xlu0 %v3487, 2
        %v3634 = vpop.permute.xlu0 %3633
        %3635 = vrot.lane.b32.xlu0 %v3488, 2
        %v3636 = vpop.permute.xlu0 %3635
        %3637 = vrot.lane.b32.xlu0 %v3489, 2
        %v3638 = vpop.permute.xlu0 %3637
        %3639 = vrot.lane.b32.xlu0 %v3490, 2
        %v3640 = vpop.permute.xlu0 %3639
        %3641 = vrot.lane.b32.xlu0 %v3491, 2
        %v3642 = vpop.permute.xlu0 %3641
        %3643 = vrot.lane.b32.xlu0 %v3492, 2
        %v3644 = vpop.permute.xlu0 %3643
        %3645 = vrot.lane.b32.xlu0 %v3493, 2
        %v3646 = vpop.permute.xlu0 %3645
        %3647 = vrot.lane.b32.xlu0 %v3494, 2
        %v3648 = vpop.permute.xlu0 %3647
        %3649 = vrot.lane.b32.xlu0 %v3495, 2
        %v3650 = vpop.permute.xlu0 %3649
        %3651 = vrot.lane.b32.xlu0 %v3496, 2
        %v3652 = vpop.permute.xlu0 %3651
        %3653 = vrot.lane.b32.xlu0 %v3497, 2
        %v3654 = vpop.permute.xlu0 %3653
        %3655 = vrot.lane.b32.xlu0 %v3498, 2
        %v3656 = vpop.permute.xlu0 %3655
        %3657 = vrot.lane.b32.xlu0 %v3499, 2
        %v3658 = vpop.permute.xlu0 %3657
        %3659 = vrot.lane.b32.xlu0 %v3500, 2
        %v3660 = vpop.permute.xlu0 %3659
        %3661 = vrot.lane.b32.xlu0 %v3501, 2
        %v3662 = vpop.permute.xlu0 %3661
        %3663 = vrot.lane.b32.xlu0 %v3502, 2
        %v3664 = vpop.permute.xlu0 %3663
        %3665 = vrot.lane.b32.xlu0 %v3503, 2
        %v3666 = vpop.permute.xlu0 %3665
        %3667 = vrot.lane.b32.xlu0 %v3504, 2
        %v3668 = vpop.permute.xlu0 %3667
        %3669 = vrot.lane.b32.xlu0 %v3505, 2
        %v3670 = vpop.permute.xlu0 %3669
        %3671 = vrot.lane.b32.xlu0 %v3506, 2
        %v3672 = vpop.permute.xlu0 %3671
        %3673 = vrot.lane.b32.xlu0 %v3507, 2
        %v3674 = vpop.permute.xlu0 %3673
        %3675 = vrot.lane.b32.xlu0 %v3508, 2
        %v3676 = vpop.permute.xlu0 %3675
        %3677 = vrot.lane.b32.xlu0 %v3509, 2
        %v3678 = vpop.permute.xlu0 %3677
        %3679 = vrot.lane.b32.xlu0 %v3510, 2
        %v3680 = vpop.permute.xlu0 %3679
        %3681 = vrot.lane.b32.xlu0 %v3511, 2
        %v3682 = vpop.permute.xlu0 %3681
        %3683 = vrot.lane.b32.xlu0 %v3512, 2
        %v3684 = vpop.permute.xlu0 %3683
        %3685 = vrot.lane.b32.xlu0 %v3513, 2
        %v3686 = vpop.permute.xlu0 %3685
        %3687 = vrot.lane.b32.xlu0 %v3514, 2
        %v3688 = vpop.permute.xlu0 %3687
        %3689 = vrot.lane.b32.xlu0 %v3515, 2
        %v3690 = vpop.permute.xlu0 %3689
        %3691 = vrot.lane.b32.xlu0 %v3516, 2
        %v3692 = vpop.permute.xlu0 %3691
        %3693 = vrot.lane.b32.xlu0 %v3517, 2
        %v3694 = vpop.permute.xlu0 %3693
        %3695 = vrot.lane.b32.xlu0 %v3518, 2
        %v3696 = vpop.permute.xlu0 %3695
        %3697 = vrot.lane.b32.xlu0 %v3519, 2
        %v3698 = vpop.permute.xlu0 %3697
        %3699 = vrot.lane.b32.xlu0 %v3520, 2
        %v3700 = vpop.permute.xlu0 %3699
        %3701 = vrot.lane.b32.xlu0 %v3521, 2
        %v3702 = vpop.permute.xlu0 %3701
        %3703 = vrot.lane.b32.xlu0 %v3522, 2
        %v3704 = vpop.permute.xlu0 %3703
        %3705 = vrot.lane.b32.xlu0 %v3523, 2
        %v3706 = vpop.permute.xlu0 %3705
        %3707 = vrot.lane.b32.xlu0 %v3524, 2
        %v3708 = vpop.permute.xlu0 %3707
        %3709 = vrot.lane.b32.xlu0 %v3525, 2
        %v3710 = vpop.permute.xlu0 %3709
        %3711 = vrot.lane.b32.xlu0 %v3526, 2
        %v3712 = vpop.permute.xlu0 %3711
        %3713 = vrot.lane.b32.xlu0 %v3527, 2
        %v3714 = vpop.permute.xlu0 %3713
        %3715 = vrot.lane.b32.xlu0 %v3528, 2
        %v3716 = vpop.permute.xlu0 %3715
        %3717 = vrot.lane.b32.xlu0 %v3529, 2
        %v3718 = vpop.permute.xlu0 %3717
        %3719 = vrot.lane.b32.xlu0 %v3530, 2
        %v3720 = vpop.permute.xlu0 %3719
        %3721 = vrot.lane.b32.xlu0 %v3531, 2
        %v3722 = vpop.permute.xlu0 %3721
        %3723 = vrot.lane.b32.xlu0 %v3532, 2
        %v3724 = vpop.permute.xlu0 %3723
        %vm3789 = vcmask 23568
        %3790 = vst.msk [vmem:[%s259] sm:$0xff] %vm3789, %v3598
        %3791 = vst.msk [vmem:[%s259 + $0x8] sm:$0xff] %vm3789, %v3600
        %3792 = vst.msk [vmem:[%s259 + $0x10] sm:$0xff] %vm3789, %v3602
        %3793 = vst.msk [vmem:[%s259 + $0x18] sm:$0xff] %vm3789, %v3604
        %3794 = vst.msk [vmem:[%s259 + $0x20] sm:$0xff] %vm3789, %v3606
        %3795 = vst.msk [vmem:[%s259 + $0x28] sm:$0xff] %vm3789, %v3608
        %3796 = vst.msk [vmem:[%s259 + $0x30] sm:$0xff] %vm3789, %v3610
        %3797 = vst.msk [vmem:[%s259 + $0x38] sm:$0xff] %vm3789, %v3612
        %3798 = vst.msk [vmem:[%s259 + $0x40] sm:$0xff] %vm3789, %v3614
        %3799 = vst.msk [vmem:[%s259 + $0x48] sm:$0xff] %vm3789, %v3616
        %3800 = vst.msk [vmem:[%s259 + $0x50] sm:$0xff] %vm3789, %v3618
        %3801 = vst.msk [vmem:[%s259 + $0x58] sm:$0xff] %vm3789, %v3620
        %3802 = vst.msk [vmem:[%s259 + $0x60] sm:$0xff] %vm3789, %v3622
        %3803 = vst.msk [vmem:[%s259 + $0x68] sm:$0xff] %vm3789, %v3624
        %3804 = vst.msk [vmem:[%s259 + $0x70] sm:$0xff] %vm3789, %v3626
        %3805 = vst.msk [vmem:[%s259 + $0x78] sm:$0xff] %vm3789, %v3628
        %3806 = vst.msk [vmem:[%s259 + $0x80] sm:$0xff] %vm3789, %v3630
        %3807 = vst.msk [vmem:[%s259 + $0x88] sm:$0xff] %vm3789, %v3632
        %3808 = vst.msk [vmem:[%s259 + $0x90] sm:$0xff] %vm3789, %v3634
        %3809 = vst.msk [vmem:[%s259 + $0x98] sm:$0xff] %vm3789, %v3636
        %3810 = vst.msk [vmem:[%s259 + $0xa0] sm:$0xff] %vm3789, %v3638
        %3811 = vst.msk [vmem:[%s259 + $0xa8] sm:$0xff] %vm3789, %v3640
        %3812 = vst.msk [vmem:[%s259 + $0xb0] sm:$0xff] %vm3789, %v3642
        %3813 = vst.msk [vmem:[%s259 + $0xb8] sm:$0xff] %vm3789, %v3644
        %3814 = vst.msk [vmem:[%s259 + $0xc0] sm:$0xff] %vm3789, %v3646
        %3815 = vst.msk [vmem:[%s259 + $0xc8] sm:$0xff] %vm3789, %v3648
        %3816 = vst.msk [vmem:[%s259 + $0xd0] sm:$0xff] %vm3789, %v3650
        %3817 = vst.msk [vmem:[%s259 + $0xd8] sm:$0xff] %vm3789, %v3652
        %3818 = vst.msk [vmem:[%s259 + $0xe0] sm:$0xff] %vm3789, %v3654
        %3819 = vst.msk [vmem:[%s259 + $0xe8] sm:$0xff] %vm3789, %v3656
        %3820 = vst.msk [vmem:[%s259 + $0xf0] sm:$0xff] %vm3789, %v3658
        %3821 = vst.msk [vmem:[%s259 + $0xf8] sm:$0xff] %vm3789, %v3660
        %3822 = vst.msk [vmem:[%s259 + $0x100] sm:$0xff] %vm3789, %v3662
        %3823 = vst.msk [vmem:[%s259 + $0x108] sm:$0xff] %vm3789, %v3664
        %3824 = vst.msk [vmem:[%s259 + $0x110] sm:$0xff] %vm3789, %v3666
        %3825 = vst.msk [vmem:[%s259 + $0x118] sm:$0xff] %vm3789, %v3668
        %3826 = vst.msk [vmem:[%s259 + $0x120] sm:$0xff] %vm3789, %v3670
        %3827 = vst.msk [vmem:[%s259 + $0x128] sm:$0xff] %vm3789, %v3672
        %3828 = vst.msk [vmem:[%s259 + $0x130] sm:$0xff] %vm3789, %v3674
        %3829 = vst.msk [vmem:[%s259 + $0x138] sm:$0xff] %vm3789, %v3676
        %3830 = vst.msk [vmem:[%s259 + $0x140] sm:$0xff] %vm3789, %v3678
        %3831 = vst.msk [vmem:[%s259 + $0x148] sm:$0xff] %vm3789, %v3680
        %3832 = vst.msk [vmem:[%s259 + $0x150] sm:$0xff] %vm3789, %v3682
        %3833 = vst.msk [vmem:[%s259 + $0x158] sm:$0xff] %vm3789, %v3684
        %3834 = vst.msk [vmem:[%s259 + $0x160] sm:$0xff] %vm3789, %v3686
        %3835 = vst.msk [vmem:[%s259 + $0x168] sm:$0xff] %vm3789, %v3688
        %3836 = vst.msk [vmem:[%s259 + $0x170] sm:$0xff] %vm3789, %v3690
        %3837 = vst.msk [vmem:[%s259 + $0x178] sm:$0xff] %vm3789, %v3692
        %3838 = vst.msk [vmem:[%s259 + $0x180] sm:$0xff] %vm3789, %v3694
        %3839 = vst.msk [vmem:[%s259 + $0x188] sm:$0xff] %vm3789, %v3696
        %3840 = vst.msk [vmem:[%s259 + $0x190] sm:$0xff] %vm3789, %v3698
        %3841 = vst.msk [vmem:[%s259 + $0x198] sm:$0xff] %vm3789, %v3700
        %3842 = vst.msk [vmem:[%s259 + $0x1a0] sm:$0xff] %vm3789, %v3702
        %3843 = vst.msk [vmem:[%s259 + $0x1a8] sm:$0xff] %vm3789, %v3704
        %3844 = vst.msk [vmem:[%s259 + $0x1b0] sm:$0xff] %vm3789, %v3706
        %3845 = vst.msk [vmem:[%s259 + $0x1b8] sm:$0xff] %vm3789, %v3708
        %3846 = vst.msk [vmem:[%s259 + $0x1c0] sm:$0xff] %vm3789, %v3710
        %3847 = vst.msk [vmem:[%s259 + $0x1c8] sm:$0xff] %vm3789, %v3712
        %3848 = vst.msk [vmem:[%s259 + $0x1d0] sm:$0xff] %vm3789, %v3714
        %3849 = vst.msk [vmem:[%s259 + $0x1d8] sm:$0xff] %vm3789, %v3716
        %3850 = vst.msk [vmem:[%s259 + $0x1e0] sm:$0xff] %vm3789, %v3718
        %3851 = vst.msk [vmem:[%s259 + $0x1e8] sm:$0xff] %vm3789, %v3720
        %3852 = vst.msk [vmem:[%s259 + $0x1f0] sm:$0xff] %vm3789, %v3722
        %3853 = vst.msk [vmem:[%s259 + $0x1f8] sm:$0xff] %vm3789, %v3724
        %v3854 = vmul.f32 %v1868, %v2136
        %v3855 = vmul.f32 %v1870, %v2150
        %v3856 = vmul.f32 %v1872, %v2164
        %v3857 = vmul.f32 %v1874, %v2178
        %v3858 = vmul.f32 %v1876, %v2192
        %v3859 = vmul.f32 %v1878, %v2206
        %v3860 = vmul.f32 %v1880, %v2220
        %v3861 = vmul.f32 %v1882, %v2234
        %v3862 = vmul.f32 %v1884, %v2248
        %v3863 = vmul.f32 %v1886, %v2262
        %v3864 = vmul.f32 %v1888, %v2276
        %v3865 = vmul.f32 %v1890, %v2290
        %v3866 = vmul.f32 %v1892, %v2304
        %v3867 = vmul.f32 %v1894, %v2318
        %v3868 = vmul.f32 %v1896, %v2332
        %v3869 = vmul.f32 %v1898, %v2346
        %v3870 = vmul.f32 %v1900, %v2360
        %v3871 = vmul.f32 %v1902, %v2374
        %v3872 = vmul.f32 %v1904, %v2388
        %v3873 = vmul.f32 %v1906, %v2402
        %v3874 = vmul.f32 %v1908, %v2416
        %v3875 = vmul.f32 %v1910, %v2430
        %v3876 = vmul.f32 %v1912, %v2444
        %v3877 = vmul.f32 %v1914, %v2458
        %v3878 = vmul.f32 %v1916, %v2472
        %v3879 = vmul.f32 %v1918, %v2486
        %v3880 = vmul.f32 %v1920, %v2500
        %v3881 = vmul.f32 %v1922, %v2514
        %v3882 = vmul.f32 %v1924, %v2528
        %v3883 = vmul.f32 %v1926, %v2542
        %v3884 = vmul.f32 %v1928, %v2556
        %v3885 = vmul.f32 %v1930, %v2570
        %v3886 = vmul.f32 %v1932, %v2584
        %v3887 = vmul.f32 %v1934, %v2598
        %v3888 = vmul.f32 %v1936, %v2612
        %v3889 = vmul.f32 %v1938, %v2626
        %v3890 = vmul.f32 %v1940, %v2640
        %v3891 = vmul.f32 %v1942, %v2654
        %v3892 = vmul.f32 %v1944, %v2668
        %v3893 = vmul.f32 %v1946, %v2682
        %v3894 = vmul.f32 %v1948, %v2696
        %v3895 = vmul.f32 %v1950, %v2710
        %v3896 = vmul.f32 %v1952, %v2724
        %v3897 = vmul.f32 %v1954, %v2738
        %v3898 = vmul.f32 %v1956, %v2752
        %v3899 = vmul.f32 %v1958, %v2766
        %v3900 = vmul.f32 %v1960, %v2780
        %v3901 = vmul.f32 %v1962, %v2794
        %v3902 = vmul.f32 %v1964, %v2808
        %v3903 = vmul.f32 %v1966, %v2822
        %v3904 = vmul.f32 %v1968, %v2836
        %v3905 = vmul.f32 %v1970, %v2850
        %v3906 = vmul.f32 %v1972, %v2864
        %v3907 = vmul.f32 %v1974, %v2878
        %v3908 = vmul.f32 %v1976, %v2892
        %v3909 = vmul.f32 %v1978, %v2906
        %v3910 = vmul.f32 %v1980, %v2920
        %v3911 = vmul.f32 %v1982, %v2934
        %v3912 = vmul.f32 %v1984, %v2948
        %v3913 = vmul.f32 %v1986, %v2962
        %v3914 = vmul.f32 %v1988, %v2976
        %v3915 = vmul.f32 %v1990, %v2990
        %v3916 = vmul.f32 %v1992, %v3004
        %v3917 = vmul.f32 %v1994, %v3018
        %3982 = vrot.lane.b32.xlu0 %v3854, 3
        %v3983 = vpop.permute.xlu0 %3982
        %3984 = vrot.lane.b32.xlu0 %v3855, 3
        %v3985 = vpop.permute.xlu0 %3984
        %3986 = vrot.lane.b32.xlu0 %v3856, 3
        %v3987 = vpop.permute.xlu0 %3986
        %3988 = vrot.lane.b32.xlu0 %v3857, 3
        %v3989 = vpop.permute.xlu0 %3988
        %3990 = vrot.lane.b32.xlu0 %v3858, 3
        %v3991 = vpop.permute.xlu0 %3990
        %3992 = vrot.lane.b32.xlu0 %v3859, 3
        %v3993 = vpop.permute.xlu0 %3992
        %3994 = vrot.lane.b32.xlu0 %v3860, 3
        %v3995 = vpop.permute.xlu0 %3994
        %3996 = vrot.lane.b32.xlu0 %v3861, 3
        %v3997 = vpop.permute.xlu0 %3996
        %3998 = vrot.lane.b32.xlu0 %v3862, 3
        %v3999 = vpop.permute.xlu0 %3998
        %4000 = vrot.lane.b32.xlu0 %v3863, 3
        %v4001 = vpop.permute.xlu0 %4000
        %4002 = vrot.lane.b32.xlu0 %v3864, 3
        %v4003 = vpop.permute.xlu0 %4002
        %4004 = vrot.lane.b32.xlu0 %v3865, 3
        %v4005 = vpop.permute.xlu0 %4004
        %4006 = vrot.lane.b32.xlu0 %v3866, 3
        %v4007 = vpop.permute.xlu0 %4006
        %4008 = vrot.lane.b32.xlu0 %v3867, 3
        %v4009 = vpop.permute.xlu0 %4008
        %4010 = vrot.lane.b32.xlu0 %v3868, 3
        %v4011 = vpop.permute.xlu0 %4010
        %4012 = vrot.lane.b32.xlu0 %v3869, 3
        %v4013 = vpop.permute.xlu0 %4012
        %4014 = vrot.lane.b32.xlu0 %v3870, 3
        %v4015 = vpop.permute.xlu0 %4014
        %4016 = vrot.lane.b32.xlu0 %v3871, 3
        %v4017 = vpop.permute.xlu0 %4016
        %4018 = vrot.lane.b32.xlu0 %v3872, 3
        %v4019 = vpop.permute.xlu0 %4018
        %4020 = vrot.lane.b32.xlu0 %v3873, 3
        %v4021 = vpop.permute.xlu0 %4020
        %4022 = vrot.lane.b32.xlu0 %v3874, 3
        %v4023 = vpop.permute.xlu0 %4022
        %4024 = vrot.lane.b32.xlu0 %v3875, 3
        %v4025 = vpop.permute.xlu0 %4024
        %4026 = vrot.lane.b32.xlu0 %v3876, 3
        %v4027 = vpop.permute.xlu0 %4026
        %4028 = vrot.lane.b32.xlu0 %v3877, 3
        %v4029 = vpop.permute.xlu0 %4028
        %4030 = vrot.lane.b32.xlu0 %v3878, 3
        %v4031 = vpop.permute.xlu0 %4030
        %4032 = vrot.lane.b32.xlu0 %v3879, 3
        %v4033 = vpop.permute.xlu0 %4032
        %4034 = vrot.lane.b32.xlu0 %v3880, 3
        %v4035 = vpop.permute.xlu0 %4034
        %4036 = vrot.lane.b32.xlu0 %v3881, 3
        %v4037 = vpop.permute.xlu0 %4036
        %4038 = vrot.lane.b32.xlu0 %v3882, 3
        %v4039 = vpop.permute.xlu0 %4038
        %4040 = vrot.lane.b32.xlu0 %v3883, 3
        %v4041 = vpop.permute.xlu0 %4040
        %4042 = vrot.lane.b32.xlu0 %v3884, 3
        %v4043 = vpop.permute.xlu0 %4042
        %4044 = vrot.lane.b32.xlu0 %v3885, 3
        %v4045 = vpop.permute.xlu0 %4044
        %4046 = vrot.lane.b32.xlu0 %v3886, 3
        %v4047 = vpop.permute.xlu0 %4046
        %4048 = vrot.lane.b32.xlu0 %v3887, 3
        %v4049 = vpop.permute.xlu0 %4048
        %4050 = vrot.lane.b32.xlu0 %v3888, 3
        %v4051 = vpop.permute.xlu0 %4050
        %4052 = vrot.lane.b32.xlu0 %v3889, 3
        %v4053 = vpop.permute.xlu0 %4052
        %4054 = vrot.lane.b32.xlu0 %v3890, 3
        %v4055 = vpop.permute.xlu0 %4054
        %4056 = vrot.lane.b32.xlu0 %v3891, 3
        %v4057 = vpop.permute.xlu0 %4056
        %4058 = vrot.lane.b32.xlu0 %v3892, 3
        %v4059 = vpop.permute.xlu0 %4058
        %4060 = vrot.lane.b32.xlu0 %v3893, 3
        %v4061 = vpop.permute.xlu0 %4060
        %4062 = vrot.lane.b32.xlu0 %v3894, 3
        %v4063 = vpop.permute.xlu0 %4062
        %4064 = vrot.lane.b32.xlu0 %v3895, 3
        %v4065 = vpop.permute.xlu0 %4064
        %4066 = vrot.lane.b32.xlu0 %v3896, 3
        %v4067 = vpop.permute.xlu0 %4066
        %4068 = vrot.lane.b32.xlu0 %v3897, 3
        %v4069 = vpop.permute.xlu0 %4068
        %4070 = vrot.lane.b32.xlu0 %v3898, 3
        %v4071 = vpop.permute.xlu0 %4070
        %4072 = vrot.lane.b32.xlu0 %v3899, 3
        %v4073 = vpop.permute.xlu0 %4072
        %4074 = vrot.lane.b32.xlu0 %v3900, 3
        %v4075 = vpop.permute.xlu0 %4074
        %4076 = vrot.lane.b32.xlu0 %v3901, 3
        %v4077 = vpop.permute.xlu0 %4076
        %4078 = vrot.lane.b32.xlu0 %v3902, 3
        %v4079 = vpop.permute.xlu0 %4078
        %4080 = vrot.lane.b32.xlu0 %v3903, 3
        %v4081 = vpop.permute.xlu0 %4080
        %4082 = vrot.lane.b32.xlu0 %v3904, 3
        %v4083 = vpop.permute.xlu0 %4082
        %4084 = vrot.lane.b32.xlu0 %v3905, 3
        %v4085 = vpop.permute.xlu0 %4084
        %4086 = vrot.lane.b32.xlu0 %v3906, 3
        %v4087 = vpop.permute.xlu0 %4086
        %4088 = vrot.lane.b32.xlu0 %v3907, 3
        %v4089 = vpop.permute.xlu0 %4088
        %4090 = vrot.lane.b32.xlu0 %v3908, 3
        %v4091 = vpop.permute.xlu0 %4090
        %4092 = vrot.lane.b32.xlu0 %v3909, 3
        %v4093 = vpop.permute.xlu0 %4092
        %4094 = vrot.lane.b32.xlu0 %v3910, 3
        %v4095 = vpop.permute.xlu0 %4094
        %4096 = vrot.lane.b32.xlu0 %v3911, 3
        %v4097 = vpop.permute.xlu0 %4096
        %4098 = vrot.lane.b32.xlu0 %v3912, 3
        %v4099 = vpop.permute.xlu0 %4098
        %4100 = vrot.lane.b32.xlu0 %v3913, 3
        %v4101 = vpop.permute.xlu0 %4100
        %4102 = vrot.lane.b32.xlu0 %v3914, 3
        %v4103 = vpop.permute.xlu0 %4102
        %4104 = vrot.lane.b32.xlu0 %v3915, 3
        %v4105 = vpop.permute.xlu0 %4104
        %4106 = vrot.lane.b32.xlu0 %v3916, 3
        %v4107 = vpop.permute.xlu0 %4106
        %4108 = vrot.lane.b32.xlu0 %v3917, 3
        %v4109 = vpop.permute.xlu0 %4108
        %vm4174 = vcmask 31768
        %4175 = vst.msk [vmem:[%s259] sm:$0xff] %vm4174, %v3983
        %4176 = vst.msk [vmem:[%s259 + $0x8] sm:$0xff] %vm4174, %v3985
        %4177 = vst.msk [vmem:[%s259 + $0x10] sm:$0xff] %vm4174, %v3987
        %4178 = vst.msk [vmem:[%s259 + $0x18] sm:$0xff] %vm4174, %v3989
        %4179 = vst.msk [vmem:[%s259 + $0x20] sm:$0xff] %vm4174, %v3991
        %4180 = vst.msk [vmem:[%s259 + $0x28] sm:$0xff] %vm4174, %v3993
        %4181 = vst.msk [vmem:[%s259 + $0x30] sm:$0xff] %vm4174, %v3995
        %4182 = vst.msk [vmem:[%s259 + $0x38] sm:$0xff] %vm4174, %v3997
        %4183 = vst.msk [vmem:[%s259 + $0x40] sm:$0xff] %vm4174, %v3999
        %4184 = vst.msk [vmem:[%s259 + $0x48] sm:$0xff] %vm4174, %v4001
        %4185 = vst.msk [vmem:[%s259 + $0x50] sm:$0xff] %vm4174, %v4003
        %4186 = vst.msk [vmem:[%s259 + $0x58] sm:$0xff] %vm4174, %v4005
        %4187 = vst.msk [vmem:[%s259 + $0x60] sm:$0xff] %vm4174, %v4007
        %4188 = vst.msk [vmem:[%s259 + $0x68] sm:$0xff] %vm4174, %v4009
        %4189 = vst.msk [vmem:[%s259 + $0x70] sm:$0xff] %vm4174, %v4011
        %4190 = vst.msk [vmem:[%s259 + $0x78] sm:$0xff] %vm4174, %v4013
        %4191 = vst.msk [vmem:[%s259 + $0x80] sm:$0xff] %vm4174, %v4015
        %4192 = vst.msk [vmem:[%s259 + $0x88] sm:$0xff] %vm4174, %v4017
        %4193 = vst.msk [vmem:[%s259 + $0x90] sm:$0xff] %vm4174, %v4019
        %4194 = vst.msk [vmem:[%s259 + $0x98] sm:$0xff] %vm4174, %v4021
        %4195 = vst.msk [vmem:[%s259 + $0xa0] sm:$0xff] %vm4174, %v4023
        %4196 = vst.msk [vmem:[%s259 + $0xa8] sm:$0xff] %vm4174, %v4025
        %4197 = vst.msk [vmem:[%s259 + $0xb0] sm:$0xff] %vm4174, %v4027
        %4198 = vst.msk [vmem:[%s259 + $0xb8] sm:$0xff] %vm4174, %v4029
        %4199 = vst.msk [vmem:[%s259 + $0xc0] sm:$0xff] %vm4174, %v4031
        %4200 = vst.msk [vmem:[%s259 + $0xc8] sm:$0xff] %vm4174, %v4033
        %4201 = vst.msk [vmem:[%s259 + $0xd0] sm:$0xff] %vm4174, %v4035
        %4202 = vst.msk [vmem:[%s259 + $0xd8] sm:$0xff] %vm4174, %v4037
        %4203 = vst.msk [vmem:[%s259 + $0xe0] sm:$0xff] %vm4174, %v4039
        %4204 = vst.msk [vmem:[%s259 + $0xe8] sm:$0xff] %vm4174, %v4041
        %4205 = vst.msk [vmem:[%s259 + $0xf0] sm:$0xff] %vm4174, %v4043
        %4206 = vst.msk [vmem:[%s259 + $0xf8] sm:$0xff] %vm4174, %v4045
        %4207 = vst.msk [vmem:[%s259 + $0x100] sm:$0xff] %vm4174, %v4047
        %4208 = vst.msk [vmem:[%s259 + $0x108] sm:$0xff] %vm4174, %v4049
        %4209 = vst.msk [vmem:[%s259 + $0x110] sm:$0xff] %vm4174, %v4051
        %4210 = vst.msk [vmem:[%s259 + $0x118] sm:$0xff] %vm4174, %v4053
        %4211 = vst.msk [vmem:[%s259 + $0x120] sm:$0xff] %vm4174, %v4055
        %4212 = vst.msk [vmem:[%s259 + $0x128] sm:$0xff] %vm4174, %v4057
        %4213 = vst.msk [vmem:[%s259 + $0x130] sm:$0xff] %vm4174, %v4059
        %4214 = vst.msk [vmem:[%s259 + $0x138] sm:$0xff] %vm4174, %v4061
        %4215 = vst.msk [vmem:[%s259 + $0x140] sm:$0xff] %vm4174, %v4063
        %4216 = vst.msk [vmem:[%s259 + $0x148] sm:$0xff] %vm4174, %v4065
        %4217 = vst.msk [vmem:[%s259 + $0x150] sm:$0xff] %vm4174, %v4067
        %4218 = vst.msk [vmem:[%s259 + $0x158] sm:$0xff] %vm4174, %v4069
        %4219 = vst.msk [vmem:[%s259 + $0x160] sm:$0xff] %vm4174, %v4071
        %4220 = vst.msk [vmem:[%s259 + $0x168] sm:$0xff] %vm4174, %v4073
        %4221 = vst.msk [vmem:[%s259 + $0x170] sm:$0xff] %vm4174, %v4075
        %4222 = vst.msk [vmem:[%s259 + $0x178] sm:$0xff] %vm4174, %v4077
        %4223 = vst.msk [vmem:[%s259 + $0x180] sm:$0xff] %vm4174, %v4079
        %4224 = vst.msk [vmem:[%s259 + $0x188] sm:$0xff] %vm4174, %v4081
        %4225 = vst.msk [vmem:[%s259 + $0x190] sm:$0xff] %vm4174, %v4083
        %4226 = vst.msk [vmem:[%s259 + $0x198] sm:$0xff] %vm4174, %v4085
        %4227 = vst.msk [vmem:[%s259 + $0x1a0] sm:$0xff] %vm4174, %v4087
        %4228 = vst.msk [vmem:[%s259 + $0x1a8] sm:$0xff] %vm4174, %v4089
        %4229 = vst.msk [vmem:[%s259 + $0x1b0] sm:$0xff] %vm4174, %v4091
        %4230 = vst.msk [vmem:[%s259 + $0x1b8] sm:$0xff] %vm4174, %v4093
        %4231 = vst.msk [vmem:[%s259 + $0x1c0] sm:$0xff] %vm4174, %v4095
        %4232 = vst.msk [vmem:[%s259 + $0x1c8] sm:$0xff] %vm4174, %v4097
        %4233 = vst.msk [vmem:[%s259 + $0x1d0] sm:$0xff] %vm4174, %v4099
        %4234 = vst.msk [vmem:[%s259 + $0x1d8] sm:$0xff] %vm4174, %v4101
        %4235 = vst.msk [vmem:[%s259 + $0x1e0] sm:$0xff] %vm4174, %v4103
        %4236 = vst.msk [vmem:[%s259 + $0x1e8] sm:$0xff] %vm4174, %v4105
        %4237 = vst.msk [vmem:[%s259 + $0x1f0] sm:$0xff] %vm4174, %v4107
        %4238 = vst.msk [vmem:[%s259 + $0x1f8] sm:$0xff] %vm4174, %v4109
        %s4239 = sand.u32 %s120, 1
        %s4240 = scalar_lea.sflag [#allocation4], %s4239
        %s4241 = sand.u32 %s120, 1
        %s4242 = smul.addr %s4241, 512
        %s4243 = scalar_lea.vmem [#allocation5], %s4242
        %s4244 = smul.u32 64, %s23
        %p4245 = scmp.lt.s32.totalorder %s4244, 127
        %s4246 = scalar_select %p4245, %s4244, 127
        %s4247 = smul.addr %s4246, 8
        %s4248 = scalar_lea.vmem %s5, %s4247
        // Predicated region
        $region41: #{tpu_custom_call.1} parent=35 // pred_check
          %p4249 = pneg %p130
        $region42: #{tpu_custom_call.1} parent=35 // pred_check_branch
          %4251 = sbr.rel (%p4249) target = $region44
        $region43: #{tpu_custom_call.1} parent=35 // pred_region
          %s4252 = smul.u32 64, %s23
          %4254 = vsyncadd %s4240, 0
          %s4255 = smul.addr %s4252, 8
          %s4256 = scalar_lea.hbm %s4, %s4255
          %s4257 = sshll.u32 %s4243, 4
          %s4258 = int_to_ptr.vmem [resolvable:$true] %s4257
          %s4259 = sshll.u32 %s4256, 4
          %s4260 = int_to_ptr.hbm [resolvable:$true] %s4259
          %4265 = dma.vmem_to_hbm [thread:$0]  %s4258, 8192, %s4260, %s4240, 128, 128, 8
        $region44: #{tpu_custom_call.1} parent=35 // pred_fallthru
          _
        // Predicated region
        $region45: #{tpu_custom_call.1} parent=35 // pred_check
          %p4266 = pneg %p156
        $region46: #{tpu_custom_call.1} parent=35 // pred_check_branch
          %4268 = sbr.rel (%p4266) target = $region48
        $region47: #{tpu_custom_call.1} parent=35 // pred_region
          %s4269 = smul.u32 64, %s23
        $region48: #{tpu_custom_call.1} parent=35 // pred_fallthru
          _
      $region36: #{tpu_custom_call.1} parent=5 // pred_fallthru
        _
      %p4270 = scmp.le.s32.totalorder 2, %s18
      // Predicated region
      $region49: #{tpu_custom_call.1} parent=5 // pred_check
        %p4271 = pneg %p4270
      $region50: #{tpu_custom_call.1} parent=5 // pred_check_branch
        %4273 = sbr.rel (%p4271) target = $region52
      $region51: #{tpu_custom_call.1} parent=5 // pred_region
        %s4274 = ssub.s32 %s18, 2
        // Predicated region
        $region53: #{tpu_custom_call.1} parent=51 // pred_check
          %p4275 = pneg %p136
        $region54: #{tpu_custom_call.1} parent=51 // pred_check_branch
          %4277 = sbr.rel (%p4275) target = $region56
        $region55: #{tpu_custom_call.1} parent=51 // pred_region
          %s4278 = sand.u32 %s121, 1
          %s4279 = scalar_lea.sflag [#allocation4], %s4278
          %s4280 = sand.u32 %s121, 1
          %s4281 = smul.addr %s4280, 512
          %s4282 = scalar_lea.vmem [#allocation5], %s4281
          %4284 = dma.done %s4279, 8192
        $region56: #{tpu_custom_call.1} parent=51 // pred_fallthru
          _
        // Predicated region
        $region57: #{tpu_custom_call.1} parent=51 // pred_check
          %p4285 = pneg %p162
        $region58: #{tpu_custom_call.1} parent=51 // pred_check_branch
          %4287 = sbr.rel (%p4285) target = $region60
        $region59: #{tpu_custom_call.1} parent=51 // pred_region
          %s4288 = smul.u32 64, %s24
          %p4289 = scmp.lt.s32.totalorder %s4288, 127
          %s4290 = scalar_select %p4289, %s4288, 127
          %s4291 = smul.addr %s4290, 8
          %s4292 = scalar_lea.vmem %s5, %s4291
        $region60: #{tpu_custom_call.1} parent=51 // pred_fallthru
          _
      $region52: #{tpu_custom_call.1} parent=5 // pred_fallthru
        _
    $region6: #{tpu_custom_call.1} parent=1 // loop_footer
      %s22 = sadd.s32 1, %s18
    $region7: #{tpu_custom_call.1} parent=1 // loop_footer_branch
      %17 = sbr.rel target = $region3
    $region8: #{tpu_custom_call.1} parent=1 // loop_exit
      _
    %4293 = vsyncpa [#allocation3], 1
    %s4294 = scalar_lea.sflag [#allocation3], 1
    %4295 = vsyncpa %s4294, 1
    %4296 = vsyncpa [#allocation4], 1
    %s4297 = scalar_lea.sflag [#allocation4], 1
    %4298 = vsyncpa %s4297, 1

</llo_original>
